<compile_context>
chip_gen: v7x
topology: tpu7x:2x2x1
jax: 0.10.0
libtpu: 0.0.40
codegen_flags: <defaults>
</compile_context>

<pallas_src>
import jax
import jax.numpy as jnp
from jax import lax
from jax.experimental import pallas as pl
from jax.experimental.pallas import tpu as pltpu

# ----------------------------- model dims (small, synthetic) -----------------
D_MODEL = 32          # config.d_model
N_HEADS = 4           # config.decoder_attention_heads
HEAD_DIM = D_MODEL // N_HEADS
FFN_DIM = 64          # config.decoder_ffn_dim
LN_EPS = 1e-5         # nn.LayerNorm default
SCALE = HEAD_DIM ** -0.5

# lane offsets inside the packed weight slab (D, 8*D + FFN)
OFF_QKV = 0                      # [Wq | Wk | Wv] self        width 3D
OFF_SELF_O = 3 * D_MODEL         # Wo self                    width D
OFF_CROSS_Q = 4 * D_MODEL        # Wq cross                   width D
OFF_CROSS_KV = 5 * D_MODEL       # [Wk | Wv] cross            width 2D
OFF_CROSS_O = 7 * D_MODEL        # Wo cross                   width D
OFF_FC1 = 8 * D_MODEL            # W fc1                      width FFN
W_MAIN_WIDTH = 8 * D_MODEL + FFN_DIM

# rows inside the packed bias / LayerNorm slab (N_VEC_ROWS, VEC_WIDTH)
ROW_B_SELF_QKV = 0   # width 3D
ROW_B_SELF_O = 1     # width D
ROW_G1 = 2
ROW_B1 = 3
ROW_B_CROSS_Q = 4
ROW_B_CROSS_KV = 5   # width 2D
ROW_B_CROSS_O = 6
ROW_G2 = 7
ROW_B2 = 8
ROW_B_FC1 = 9        # width FFN
ROW_B_FC2 = 10
ROW_G3 = 11
ROW_B3 = 12
N_VEC_ROWS = 13
VEC_WIDTH = max(3 * D_MODEL, 2 * D_MODEL, FFN_DIM)   # 96


def _gelu_new(x):
    # ACT2FN["gelu_new"]: 0.5*x*(1+tanh(sqrt(2/pi)*(x+0.044715*x^3)))
    return 0.5 * x * (1.0 + jnp.tanh(0.7978845608028654 * (x + 0.044715 * x * x * x)))


# ----------------------------- fused decoder-layer kernel --------------------
def _layer_kernel(hid_ref, mask_ref, enc_ref, emask_ref,
                  wmain_ref, wfc2_ref, vec_ref,
                  out_ref, ckv_ref):
    f32 = jnp.float32
    D, F, hd = D_MODEL, FFN_DIM, HEAD_DIM

    x = hid_ref[0].astype(f32)               # (T, D)
    enc = enc_ref[0].astype(f32)             # (S, D)
    m_self = mask_ref[0, 0].astype(f32)      # (T, T)
    m_cross = emask_ref[0, 0].astype(f32)    # (T, S)

    W = wmain_ref[...].astype(f32)           # (D, 8D+F)  lane-packed weight slab
    w_fc2 = wfc2_ref[...].astype(f32)        # (F, D)

    def vec(row, width):
        # (1, width) broadcast row out of the packed bias/LN slab (static slices)
        return vec_ref[row:row + 1, 0:width].astype(f32)

    def layernorm(h, grow, brow):
        mu = jnp.mean(h, axis=-1, keepdims=True)
        var = jnp.mean(jnp.square(h - mu), axis=-1, keepdims=True)
        return (h - mu) * lax.rsqrt(var + LN_EPS) * vec(grow, D) + vec(brow, D)

    def mha(q, k, v, mask):
        # q: (T, D) already scaled; k, v: (S, D); mask: (T, S).  All heads handled
        # in-VMEM via static lane slices; per-head tensors never hit HBM.
        ctx = []
        for h in range(N_HEADS):
            lo, hi = h * hd, (h + 1) * hd
            qh, kh, vh = q[:, lo:hi], k[:, lo:hi], v[:, lo:hi]
            s = lax.dot_general(qh, kh, (((1,), (1,)), ((), ())),
                                preferred_element_type=f32) + mask
            s = s - jnp.max(s, axis=-1, keepdims=True)
            p = jnp.exp(s)
            p = p * pl.reciprocal(jnp.sum(p, axis=-1, keepdims=True), approx=True)
            ctx.append(jnp.dot(p, vh, preferred_element_type=f32))
        return jnp.concatenate(ctx, axis=-1)   # (T, D) lane-packed

    # ---------------- self attention ----------------
    qkv = jnp.dot(x, W[:, OFF_QKV:OFF_QKV + 3 * D],
                  preferred_element_type=f32) + vec(ROW_B_SELF_QKV, 3 * D)
    q_s = qkv[:, 0:D] * SCALE
    k_s = qkv[:, D:2 * D]
    v_s = qkv[:, 2 * D:3 * D]
    ctx_s = mha(q_s, k_s, v_s, m_self)
    attn_s = jnp.dot(ctx_s, W[:, OFF_SELF_O:OFF_SELF_O + D],
                     preferred_element_type=f32) + vec(ROW_B_SELF_O, D)
    h1 = layernorm(x + attn_s, ROW_G1, ROW_B1)

    # ---------------- cross attention ----------------
    q_c = (jnp.dot(h1, W[:, OFF_CROSS_Q:OFF_CROSS_Q + D],
                   preferred_element_type=f32) + vec(ROW_B_CROSS_Q, D)) * SCALE
    kv_c = jnp.dot(enc, W[:, OFF_CROSS_KV:OFF_CROSS_KV + 2 * D],
                   preferred_element_type=f32) + vec(ROW_B_CROSS_KV, 2 * D)
    k_c = kv_c[:, 0:D]
    v_c = kv_c[:, D:2 * D]
    ctx_c = mha(q_c, k_c, v_c, m_cross)
    attn_c = jnp.dot(ctx_c, W[:, OFF_CROSS_O:OFF_CROSS_O + D],
                     preferred_element_type=f32) + vec(ROW_B_CROSS_O, D)
    h2 = layernorm(h1 + attn_c, ROW_G2, ROW_B2)

    # ---------------- feed forward ----------------
    # dropout (attention / activation / residual) is identity at inference
    f = _gelu_new(jnp.dot(h2, W[:, OFF_FC1:OFF_FC1 + F],
                          preferred_element_type=f32) + vec(ROW_B_FC1, F))
    f = jnp.dot(f, w_fc2, preferred_element_type=f32) + vec(ROW_B_FC2, D)
    h3 = layernorm(h2 + f, ROW_G3, ROW_B3)

    # ---------------- lane-packed stores ----------------
    # (T, 3D) = [hidden_out | self K | self V];  (S, 2D) = [cross K | cross V]
    out_ref[0] = jnp.concatenate([h3, k_s, v_s], axis=-1).astype(out_ref.dtype)
    ckv_ref[0] = kv_c.astype(ckv_ref.dtype)


# ----------------------------- param packing (one-time, off hot path) --------
def prepare_params(p):
    """Transpose nn.Linear weights and pack them into two slabs + one bias/LN slab."""
    D = D_MODEL
    w_main = jnp.concatenate(
        [p["self_q_w"].T, p["self_k_w"].T, p["self_v_w"].T,
         p["self_o_w"].T,
         p["cross_q_w"].T,
         p["cross_k_w"].T, p["cross_v_w"].T,
         p["cross_o_w"].T,
         p["fc1_w"].T], axis=1).astype(jnp.float32)          # (D, 8D+FFN)
    assert w_main.shape == (D, W_MAIN_WIDTH)

    vecs = jnp.zeros((N_VEC_ROWS, VEC_WIDTH), jnp.float32)
    rows = [
        (ROW_B_SELF_QKV, jnp.concatenate([p["self_q_b"], p["self_k_b"], p["self_v_b"]])),
        (ROW_B_SELF_O, p["self_o_b"]),
        (ROW_G1, p["self_ln_g"]), (ROW_B1, p["self_ln_b"]),
        (ROW_B_CROSS_Q, p["cross_q_b"]),
        (ROW_B_CROSS_KV, jnp.concatenate([p["cross_k_b"], p["cross_v_b"]])),
        (ROW_B_CROSS_O, p["cross_o_b"]),
        (ROW_G2, p["cross_ln_g"]), (ROW_B2, p["cross_ln_b"]),
        (ROW_B_FC1, p["fc1_b"]),
        (ROW_B_FC2, p["fc2_b"]),
        (ROW_G3, p["final_ln_g"]), (ROW_B3, p["final_ln_b"]),
    ]
    for r, v in rows:
        vecs = vecs.at[r, 0:v.shape[0]].set(v.astype(jnp.float32))

    return {"w_main": w_main,
            "w_fc2": p["fc2_w"].T.astype(jnp.float32),        # (FFN, D)
            "vecs": vecs}


# ----------------------------- full decoder layer -----------------------------
def mass_decoder_layer(hidden, attn_mask, enc_hidden, enc_mask, prep):
    """One fused pallas_call per layer. Returns (hidden_out, present_key_value)."""
    B, T, D = hidden.shape
    S = enc_hidden.shape[1]
    dt = hidden.dtype
    w_main, w_fc2, vecs = prep["w_main"], prep["w_fc2"], prep["vecs"]

    in_specs = [
        pl.BlockSpec((1, T, D), lambda b: (b, 0, 0)),        # hidden
        pl.BlockSpec((1, 1, T, T), lambda b: (b, 0, 0, 0)),  # self-attn mask (B,1,T,T)
        pl.BlockSpec((1, S, D), lambda b: (b, 0, 0)),        # encoder hidden
        pl.BlockSpec((1, 1, T, S), lambda b: (b, 0, 0, 0)),  # cross-attn mask (B,1,T,S)
        pl.BlockSpec(w_main.shape, lambda b: (0, 0)),        # packed matmul weights
        pl.BlockSpec(w_fc2.shape, lambda b: (0, 0)),         # fc2 weight
        pl.BlockSpec(vecs.shape, lambda b: (0, 0)),          # packed biases / LN params
    ]
    out_shape = (
        jax.ShapeDtypeStruct((B, T, 3 * D), dt),   # [hidden | self K | self V]
        jax.ShapeDtypeStruct((B, S, 2 * D), dt),   # [cross K | cross V]
    )
    out_specs = (
        pl.BlockSpec((1, T, 3 * D), lambda b: (b, 0, 0)),
        pl.BlockSpec((1, S, 2 * D), lambda b: (b, 0, 0)),
    )

    main, ckv = pl.pallas_call(
        _layer_kernel,
        out_shape=out_shape,
        grid=(B,),
        in_specs=in_specs,
        out_specs=out_specs,
        compiler_params=pltpu.CompilerParams(dimension_semantics=("parallel",)),
    )(hidden, attn_mask, enc_hidden, enc_mask, w_main, w_fc2, vecs)

    out = main[:, :, 0:D]
    # KV-cache head split done outside the kernel (tiny, keeps kernel stores lane-dense).
    self_k = main[:, :, D:2 * D].reshape(B, T, N_HEADS, HEAD_DIM).transpose(0, 2, 1, 3)
    self_v = main[:, :, 2 * D:3 * D].reshape(B, T, N_HEADS, HEAD_DIM).transpose(0, 2, 1, 3)
    cross_k = ckv[:, :, 0:D].reshape(B, S, N_HEADS, HEAD_DIM).transpose(0, 2, 1, 3)[:, None]
    cross_v = ckv[:, :, D:2 * D].reshape(B, S, N_HEADS, HEAD_DIM).transpose(0, 2, 1, 3)[:, None]

    # TODO(synk): past_key_value (KV-cache concat) decoding path not implemented; this is the
    #             past_key_value=None / num_beams=1 branch of MassAttention.
    return out, (self_k, self_v, cross_k, cross_v)


# ----------------------------- pure-JAX reference -----------------------------
def reference_forward(hidden, attn_mask, enc_hidden, enc_mask, p):
    def lin(x, w, b):
        return x @ w.T + b

    def ln(x, g, b):
        mu = x.mean(-1, keepdims=True)
        var = jnp.square(x - mu).mean(-1, keepdims=True)
        return (x - mu) / jnp.sqrt(var + LN_EPS) * g + b

    def attn(h, kv, mask, pre):
        B, T, D = h.shape
        S = kv.shape[1]
        q = lin(h, p[pre + "_q_w"], p[pre + "_q_b"]) * SCALE
        k = lin(kv, p[pre + "_k_w"], p[pre + "_k_b"])
        v = lin(kv, p[pre + "_v_w"], p[pre + "_v_b"])
        q = q.reshape(B, T, N_HEADS, HEAD_DIM).transpose(0, 2, 1, 3)
        k = k.reshape(B, S, N_HEADS, HEAD_DIM).transpose(0, 2, 1, 3)
        v = v.reshape(B, S, N_HEADS, HEAD_DIM).transpose(0, 2, 1, 3)
        s = jnp.einsum("bhtd,bhsd->bhts", q, k) + mask
        w = jax.nn.softmax(s, axis=-1)
        o = jnp.einsum("bhts,bhsd->bhtd", w, v).transpose(0, 2, 1, 3).reshape(B, T, D)
        return lin(o, p[pre + "_o_w"], p[pre + "_o_b"])

    h = ln(hidden + attn(hidden, hidden, attn_mask, "self"), p["self_ln_g"], p["self_ln_b"])
    h = ln(h + attn(h, enc_hidden, enc_mask, "cross"), p["cross_ln_g"], p["cross_ln_b"])
    f = lin(_gelu_new(lin(h, p["fc1_w"], p["fc1_b"])), p["fc2_w"], p["fc2_b"])
    return ln(h + f, p["final_ln_g"], p["final_ln_b"])


# ----------------------------- parameter init ---------------------------------
def init_params(key):
    keys = iter(jax.random.split(key, 24))
    w = lambda k, shape: 0.02 * jax.random.normal(k, shape, jnp.float32)
    p = {}
    for pre in ("self", "cross"):
        for name in ("q", "k", "v", "o"):
            p[f"{pre}_{name}_w"] = w(next(keys), (D_MODEL, D_MODEL))
            p[f"{pre}_{name}_b"] = w(next(keys), (D_MODEL,))
        p[f"{pre}_ln_g"] = jnp.ones((D_MODEL,), jnp.float32)
        p[f"{pre}_ln_b"] = jnp.zeros((D_MODEL,), jnp.float32)
    p["fc1_w"] = w(next(keys), (FFN_DIM, D_MODEL))
    p["fc1_b"] = w(next(keys), (FFN_DIM,))
    p["fc2_w"] = w(next(keys), (D_MODEL, FFN_DIM))
    p["fc2_b"] = w(next(keys), (D_MODEL,))
    p["final_ln_g"] = jnp.ones((D_MODEL,), jnp.float32)
    p["final_ln_b"] = jnp.zeros((D_MODEL,), jnp.float32)
    return p


# ----------------------------- main --------------------------------------------
if __name__ == "__main__":
    key = jax.random.PRNGKey(0)
    k_h, k_e, k_p = jax.random.split(key, 3)

    B, T, S_ENC = 2, 8, 8
    hidden = jax.random.normal(k_h, (B, T, D_MODEL), jnp.float32)
    enc_hidden = jax.random.normal(k_e, (B, S_ENC, D_MODEL), jnp.float32)
    params = init_params(k_p)
    prep = prepare_params(params)   # one-time weight packing, off the hot path

    # causal self-attention mask (B, 1, T, T): 0 on allowed, -1e9 on masked
    causal = jnp.where(jnp.arange(T)[:, None] >= jnp.arange(T)[None, :], 0.0, -1e9)
    attn_mask = jnp.broadcast_to(causal, (B, 1, T, T)).astype(jnp.float32)
    # encoder attention mask (B, 1, T, S_enc): mask last 2 encoder positions of batch 1
    enc_mask = jnp.zeros((B, 1, T, S_ENC), jnp.float32)
    enc_mask = enc_mask.at[1, :, :, -2:].set(-1e9)

    layer_fn = jax.jit(mass_decoder_layer)
    out, present_kv = layer_fn(hidden, attn_mask, enc_hidden, enc_mask, prep)
    out = jax.block_until_ready(out)
    present_kv = jax.block_until_ready(present_kv)

    ref = reference_forward(hidden, attn_mask, enc_hidden, enc_mask, params)
    assert out.shape == (B, T, D_MODEL)
    assert present_kv[0].shape == (B, N_HEADS, T, HEAD_DIM)           # self k
    assert present_kv[2].shape == (B, 1, N_HEADS, S_ENC, HEAD_DIM)    # cross k (beam dim)
    assert jnp.allclose(out, ref, atol=1e-2, rtol=1e-2), "mismatch vs reference"

    # sanity-check the packed KV-cache stores against plain-JAX projections
    ref_self_k = (hidden @ params["self_k_w"].T + params["self_k_b"]) \
        .reshape(B, T, N_HEADS, HEAD_DIM).transpose(0, 2, 1, 3)
    ref_cross_v = (enc_hidden @ params["cross_v_w"].T + params["cross_v_b"]) \
        .reshape(B, S_ENC, N_HEADS, HEAD_DIM).transpose(0, 2, 1, 3)[:, None]
    assert jnp.allclose(present_kv[0], ref_self_k, atol=1e-3, rtol=1e-3), "self-K cache mismatch"
    assert jnp.allclose(present_kv[3], ref_cross_v, atol=1e-3, rtol=1e-3), "cross-V cache mismatch"

    print("KERNEL_OK")
</pallas_src>

<mosaic_0001>
module attributes {stable_mosaic.version = 11 : i64} {
  func.func @_layer_kernel(%arg0: i32, %arg1: memref<1x8x32xf32, #tpu.memory_space<vmem>>, %arg2: memref<1x1x8x8xf32, #tpu.memory_space<vmem>>, %arg3: memref<1x8x32xf32, #tpu.memory_space<vmem>>, %arg4: memref<1x1x8x8xf32, #tpu.memory_space<vmem>>, %arg5: memref<32x320xf32, #tpu.memory_space<vmem>>, %arg6: memref<64x32xf32, #tpu.memory_space<vmem>>, %arg7: memref<13x96xf32, #tpu.memory_space<vmem>>, %arg8: memref<1x8x96xf32, #tpu.memory_space<vmem>>, %arg9: memref<1x8x64xf32, #tpu.memory_space<vmem>>) attributes {dimension_semantics = [#tpu.dimension_semantics<parallel>], iteration_bounds = array<i64: 2>, scalar_prefetch = 0 : i64, scratch_operands = 0 : i64, tpu.core_type = #tpu.core_type<tc>, window_params = [{transform_indices = @transform_0, window_bounds = array<i64: 1, 8, 32>}, {transform_indices = @transform_1, window_bounds = array<i64: 1, 1, 8, 8>}, {transform_indices = @transform_2, window_bounds = array<i64: 1, 8, 32>}, {transform_indices = @transform_3, window_bounds = array<i64: 1, 1, 8, 8>}, {pipeline_mode = #tpu.pipeline_mode<synchronous>, transform_indices = @transform_4, window_bounds = array<i64: 32, 320>}, {pipeline_mode = #tpu.pipeline_mode<synchronous>, transform_indices = @transform_5, window_bounds = array<i64: 64, 32>}, {pipeline_mode = #tpu.pipeline_mode<synchronous>, transform_indices = @transform_6, window_bounds = array<i64: 13, 96>}, {transform_indices = @transform_7, window_bounds = array<i64: 1, 8, 96>}, {transform_indices = @transform_8, window_bounds = array<i64: 1, 8, 64>}]} {
    %c0 = arith.constant 0 : index
    %c0_0 = arith.constant 0 : index
    %c0_1 = arith.constant 0 : index
    %0 = vector.load %arg1[%c0, %c0_0, %c0_1] : memref<1x8x32xf32, #tpu.memory_space<vmem>>, vector<1x8x32xf32>
    %1 = vector.shape_cast %0 : vector<1x8x32xf32> to vector<8x32xf32>
    %c0_2 = arith.constant 0 : index
    %c0_3 = arith.constant 0 : index
    %c0_4 = arith.constant 0 : index
    %2 = vector.load %arg3[%c0_2, %c0_3, %c0_4] : memref<1x8x32xf32, #tpu.memory_space<vmem>>, vector<1x8x32xf32>
    %3 = vector.shape_cast %2 : vector<1x8x32xf32> to vector<8x32xf32>
    %c0_5 = arith.constant 0 : index
    %c0_6 = arith.constant 0 : index
    %c0_7 = arith.constant 0 : index
    %c0_8 = arith.constant 0 : index
    %4 = vector.load %arg2[%c0_5, %c0_6, %c0_7, %c0_8] : memref<1x1x8x8xf32, #tpu.memory_space<vmem>>, vector<1x1x8x8xf32>
    %5 = vector.shape_cast %4 : vector<1x1x8x8xf32> to vector<8x8xf32>
    %c0_9 = arith.constant 0 : index
    %c0_10 = arith.constant 0 : index
    %c0_11 = arith.constant 0 : index
    %c0_12 = arith.constant 0 : index
    %6 = vector.load %arg4[%c0_9, %c0_10, %c0_11, %c0_12] : memref<1x1x8x8xf32, #tpu.memory_space<vmem>>, vector<1x1x8x8xf32>
    %7 = vector.shape_cast %6 : vector<1x1x8x8xf32> to vector<8x8xf32>
    %c0_13 = arith.constant 0 : index
    %c0_14 = arith.constant 0 : index
    %8 = vector.load %arg5[%c0_13, %c0_14] : memref<32x320xf32, #tpu.memory_space<vmem>>, vector<32x320xf32>
    %c0_15 = arith.constant 0 : index
    %c0_16 = arith.constant 0 : index
    %9 = vector.load %arg6[%c0_15, %c0_16] : memref<64x32xf32, #tpu.memory_space<vmem>>, vector<64x32xf32>
    %10 = vector.extract_strided_slice %8 {offsets = [0, 0], sizes = [32, 96], strides = [1, 1]} : vector<32x320xf32> to vector<32x96xf32>
    %cst = arith.constant dense<0.000000e+00> : vector<8x96xf32>
    %11 = tpu.matmul %1, %10, %cst {dimension_numbers = #tpu.dot_dimension_numbers<[1], [0], [0], [1], [0, 0, 1, 1], [], []>} : vector<8x32xf32>, vector<32x96xf32>, vector<8x96xf32> -> vector<8x96xf32>
    %c0_17 = arith.constant 0 : index
    %c0_18 = arith.constant 0 : index
    %12 = vector.load %arg7[%c0_17, %c0_18] : memref<13x96xf32, #tpu.memory_space<vmem>>, vector<1x96xf32>
    %13 = vector.broadcast %12 : vector<1x96xf32> to vector<8x96xf32>
    %14 = arith.addf %11, %13 : vector<8x96xf32>
    %15 = vector.extract_strided_slice %14 {offsets = [0, 0], sizes = [8, 32], strides = [1, 1]} : vector<8x96xf32> to vector<8x32xf32>
    %cst_19 = arith.constant 0.353553385 : f32
    %16 = vector.broadcast %cst_19 : f32 to vector<8x32xf32>
    %17 = arith.mulf %15, %16 : vector<8x32xf32>
    %18 = vector.extract_strided_slice %14 {offsets = [0, 32], sizes = [8, 32], strides = [1, 1]} : vector<8x96xf32> to vector<8x32xf32>
    %19 = vector.extract_strided_slice %14 {offsets = [0, 64], sizes = [8, 32], strides = [1, 1]} : vector<8x96xf32> to vector<8x32xf32>
    %20 = vector.extract_strided_slice %17 {offsets = [0, 0], sizes = [8, 8], strides = [1, 1]} : vector<8x32xf32> to vector<8x8xf32>
    %21 = vector.extract_strided_slice %18 {offsets = [0, 0], sizes = [8, 8], strides = [1, 1]} : vector<8x32xf32> to vector<8x8xf32>
    %22 = vector.extract_strided_slice %19 {offsets = [0, 0], sizes = [8, 8], strides = [1, 1]} : vector<8x32xf32> to vector<8x8xf32>
    %cst_20 = arith.constant dense<0.000000e+00> : vector<8x8xf32>
    %23 = tpu.matmul %20, %21, %cst_20 {dimension_numbers = #tpu.dot_dimension_numbers<[1], [1], [0], [0], [0, 0, 1, 0], [], []>} : vector<8x8xf32>, vector<8x8xf32>, vector<8x8xf32> -> vector<8x8xf32>
    %24 = arith.addf %23, %5 : vector<8x8xf32>
    %cst_21 = arith.constant dense<0xFF800000> : vector<8xf32>
    %25 = vector.multi_reduction <maximumf>, %24, %cst_21 [1] : vector<8x8xf32> to vector<8xf32>
    %26 = vector.shape_cast %25 : vector<8xf32> to vector<8x1xf32>
    %27 = vector.broadcast %26 : vector<8x1xf32> to vector<8x8xf32>
    %28 = arith.subf %24, %27 : vector<8x8xf32>
    %29 = math.exp %28 : vector<8x8xf32>
    %cst_22 = arith.constant dense<0.000000e+00> : vector<8xf32>
    %30 = vector.multi_reduction <add>, %29, %cst_22 [1] : vector<8x8xf32> to vector<8xf32>
    %31 = vector.shape_cast %30 : vector<8xf32> to vector<8x1xf32>
    %32 = tpu.reciprocal %31 {approx = true} : vector<8x1xf32> -> vector<8x1xf32>
    %33 = vector.broadcast %32 : vector<8x1xf32> to vector<8x8xf32>
    %34 = arith.mulf %29, %33 : vector<8x8xf32>
    %cst_23 = arith.constant dense<0.000000e+00> : vector<8x8xf32>
    %35 = tpu.matmul %34, %22, %cst_23 {dimension_numbers = #tpu.dot_dimension_numbers<[1], [0], [0], [1], [0, 0, 1, 1], [], []>} : vector<8x8xf32>, vector<8x8xf32>, vector<8x8xf32> -> vector<8x8xf32>
    %36 = vector.extract_strided_slice %17 {offsets = [0, 8], sizes = [8, 8], strides = [1, 1]} : vector<8x32xf32> to vector<8x8xf32>
    %37 = vector.extract_strided_slice %18 {offsets = [0, 8], sizes = [8, 8], strides = [1, 1]} : vector<8x32xf32> to vector<8x8xf32>
    %38 = vector.extract_strided_slice %19 {offsets = [0, 8], sizes = [8, 8], strides = [1, 1]} : vector<8x32xf32> to vector<8x8xf32>
    %cst_24 = arith.constant dense<0.000000e+00> : vector<8x8xf32>
    %39 = tpu.matmul %36, %37, %cst_24 {dimension_numbers = #tpu.dot_dimension_numbers<[1], [1], [0], [0], [0, 0, 1, 0], [], []>} : vector<8x8xf32>, vector<8x8xf32>, vector<8x8xf32> -> vector<8x8xf32>
    %40 = arith.addf %39, %5 : vector<8x8xf32>
    %cst_25 = arith.constant dense<0xFF800000> : vector<8xf32>
    %41 = vector.multi_reduction <maximumf>, %40, %cst_25 [1] : vector<8x8xf32> to vector<8xf32>
    %42 = vector.shape_cast %41 : vector<8xf32> to vector<8x1xf32>
    %43 = vector.broadcast %42 : vector<8x1xf32> to vector<8x8xf32>
    %44 = arith.subf %40, %43 : vector<8x8xf32>
    %45 = math.exp %44 : vector<8x8xf32>
    %cst_26 = arith.constant dense<0.000000e+00> : vector<8xf32>
    %46 = vector.multi_reduction <add>, %45, %cst_26 [1] : vector<8x8xf32> to vector<8xf32>
    %47 = vector.shape_cast %46 : vector<8xf32> to vector<8x1xf32>
    %48 = tpu.reciprocal %47 {approx = true} : vector<8x1xf32> -> vector<8x1xf32>
    %49 = vector.broadcast %48 : vector<8x1xf32> to vector<8x8xf32>
    %50 = arith.mulf %45, %49 : vector<8x8xf32>
    %cst_27 = arith.constant dense<0.000000e+00> : vector<8x8xf32>
    %51 = tpu.matmul %50, %38, %cst_27 {dimension_numbers = #tpu.dot_dimension_numbers<[1], [0], [0], [1], [0, 0, 1, 1], [], []>} : vector<8x8xf32>, vector<8x8xf32>, vector<8x8xf32> -> vector<8x8xf32>
    %52 = vector.extract_strided_slice %17 {offsets = [0, 16], sizes = [8, 8], strides = [1, 1]} : vector<8x32xf32> to vector<8x8xf32>
    %53 = vector.extract_strided_slice %18 {offsets = [0, 16], sizes = [8, 8], strides = [1, 1]} : vector<8x32xf32> to vector<8x8xf32>
    %54 = vector.extract_strided_slice %19 {offsets = [0, 16], sizes = [8, 8], strides = [1, 1]} : vector<8x32xf32> to vector<8x8xf32>
    %cst_28 = arith.constant dense<0.000000e+00> : vector<8x8xf32>
    %55 = tpu.matmul %52, %53, %cst_28 {dimension_numbers = #tpu.dot_dimension_numbers<[1], [1], [0], [0], [0, 0, 1, 0], [], []>} : vector<8x8xf32>, vector<8x8xf32>, vector<8x8xf32> -> vector<8x8xf32>
    %56 = arith.addf %55, %5 : vector<8x8xf32>
    %cst_29 = arith.constant dense<0xFF800000> : vector<8xf32>
    %57 = vector.multi_reduction <maximumf>, %56, %cst_29 [1] : vector<8x8xf32> to vector<8xf32>
    %58 = vector.shape_cast %57 : vector<8xf32> to vector<8x1xf32>
    %59 = vector.broadcast %58 : vector<8x1xf32> to vector<8x8xf32>
    %60 = arith.subf %56, %59 : vector<8x8xf32>
    %61 = math.exp %60 : vector<8x8xf32>
    %cst_30 = arith.constant dense<0.000000e+00> : vector<8xf32>
    %62 = vector.multi_reduction <add>, %61, %cst_30 [1] : vector<8x8xf32> to vector<8xf32>
    %63 = vector.shape_cast %62 : vector<8xf32> to vector<8x1xf32>
    %64 = tpu.reciprocal %63 {approx = true} : vector<8x1xf32> -> vector<8x1xf32>
    %65 = vector.broadcast %64 : vector<8x1xf32> to vector<8x8xf32>
    %66 = arith.mulf %61, %65 : vector<8x8xf32>
    %cst_31 = arith.constant dense<0.000000e+00> : vector<8x8xf32>
    %67 = tpu.matmul %66, %54, %cst_31 {dimension_numbers = #tpu.dot_dimension_numbers<[1], [0], [0], [1], [0, 0, 1, 1], [], []>} : vector<8x8xf32>, vector<8x8xf32>, vector<8x8xf32> -> vector<8x8xf32>
    %68 = vector.extract_strided_slice %17 {offsets = [0, 24], sizes = [8, 8], strides = [1, 1]} : vector<8x32xf32> to vector<8x8xf32>
    %69 = vector.extract_strided_slice %18 {offsets = [0, 24], sizes = [8, 8], strides = [1, 1]} : vector<8x32xf32> to vector<8x8xf32>
    %70 = vector.extract_strided_slice %19 {offsets = [0, 24], sizes = [8, 8], strides = [1, 1]} : vector<8x32xf32> to vector<8x8xf32>
    %cst_32 = arith.constant dense<0.000000e+00> : vector<8x8xf32>
    %71 = tpu.matmul %68, %69, %cst_32 {dimension_numbers = #tpu.dot_dimension_numbers<[1], [1], [0], [0], [0, 0, 1, 0], [], []>} : vector<8x8xf32>, vector<8x8xf32>, vector<8x8xf32> -> vector<8x8xf32>
    %72 = arith.addf %71, %5 : vector<8x8xf32>
    %cst_33 = arith.constant dense<0xFF800000> : vector<8xf32>
    %73 = vector.multi_reduction <maximumf>, %72, %cst_33 [1] : vector<8x8xf32> to vector<8xf32>
    %74 = vector.shape_cast %73 : vector<8xf32> to vector<8x1xf32>
    %75 = vector.broadcast %74 : vector<8x1xf32> to vector<8x8xf32>
    %76 = arith.subf %72, %75 : vector<8x8xf32>
    %77 = math.exp %76 : vector<8x8xf32>
    %cst_34 = arith.constant dense<0.000000e+00> : vector<8xf32>
    %78 = vector.multi_reduction <add>, %77, %cst_34 [1] : vector<8x8xf32> to vector<8xf32>
    %79 = vector.shape_cast %78 : vector<8xf32> to vector<8x1xf32>
    %80 = tpu.reciprocal %79 {approx = true} : vector<8x1xf32> -> vector<8x1xf32>
    %81 = vector.broadcast %80 : vector<8x1xf32> to vector<8x8xf32>
    %82 = arith.mulf %77, %81 : vector<8x8xf32>
    %cst_35 = arith.constant dense<0.000000e+00> : vector<8x8xf32>
    %83 = tpu.matmul %82, %70, %cst_35 {dimension_numbers = #tpu.dot_dimension_numbers<[1], [0], [0], [1], [0, 0, 1, 1], [], []>} : vector<8x8xf32>, vector<8x8xf32>, vector<8x8xf32> -> vector<8x8xf32>
    %84 = tpu.concatenate %35, %51, %67, %83 in 1 : vector<8x8xf32>, vector<8x8xf32>, vector<8x8xf32>, vector<8x8xf32> -> vector<8x32xf32>
    %85 = vector.extract_strided_slice %8 {offsets = [0, 96], sizes = [32, 32], strides = [1, 1]} : vector<32x320xf32> to vector<32x32xf32>
    %cst_36 = arith.constant dense<0.000000e+00> : vector<8x32xf32>
    %86 = tpu.matmul %84, %85, %cst_36 {dimension_numbers = #tpu.dot_dimension_numbers<[1], [0], [0], [1], [0, 0, 1, 1], [], []>} : vector<8x32xf32>, vector<32x32xf32>, vector<8x32xf32> -> vector<8x32xf32>
    %c1 = arith.constant 1 : index
    %c0_37 = arith.constant 0 : index
    %87 = vector.load %arg7[%c1, %c0_37] : memref<13x96xf32, #tpu.memory_space<vmem>>, vector<1x32xf32>
    %88 = vector.broadcast %87 : vector<1x32xf32> to vector<8x32xf32>
    %89 = arith.addf %86, %88 : vector<8x32xf32>
    %90 = arith.addf %1, %89 : vector<8x32xf32>
    %cst_38 = arith.constant dense<0.000000e+00> : vector<8xf32>
    %91 = vector.multi_reduction <add>, %90, %cst_38 [1] : vector<8x32xf32> to vector<8xf32>
    %92 = vector.shape_cast %91 : vector<8xf32> to vector<8x1xf32>
    %cst_39 = arith.constant 3.200000e+01 : f32
    %93 = vector.broadcast %cst_39 : f32 to vector<8x1xf32>
    %94 = arith.divf %92, %93 : vector<8x1xf32>
    %95 = vector.broadcast %94 : vector<8x1xf32> to vector<8x32xf32>
    %96 = arith.subf %90, %95 : vector<8x32xf32>
    %97 = arith.mulf %96, %96 : vector<8x32xf32>
    %cst_40 = arith.constant dense<0.000000e+00> : vector<8xf32>
    %98 = vector.multi_reduction <add>, %97, %cst_40 [1] : vector<8x32xf32> to vector<8xf32>
    %99 = vector.shape_cast %98 : vector<8xf32> to vector<8x1xf32>
    %cst_41 = arith.constant 3.200000e+01 : f32
    %100 = vector.broadcast %cst_41 : f32 to vector<8x1xf32>
    %101 = arith.divf %99, %100 : vector<8x1xf32>
    %102 = vector.broadcast %94 : vector<8x1xf32> to vector<8x32xf32>
    %103 = arith.subf %90, %102 : vector<8x32xf32>
    %cst_42 = arith.constant 9.99999974E-6 : f32
    %104 = vector.broadcast %cst_42 : f32 to vector<8x1xf32>
    %105 = arith.addf %101, %104 : vector<8x1xf32>
    %106 = math.rsqrt %105 : vector<8x1xf32>
    %107 = vector.broadcast %106 : vector<8x1xf32> to vector<8x32xf32>
    %108 = arith.mulf %103, %107 : vector<8x32xf32>
    %c2 = arith.constant 2 : index
    %c0_43 = arith.constant 0 : index
    %109 = vector.load %arg7[%c2, %c0_43] : memref<13x96xf32, #tpu.memory_space<vmem>>, vector<1x32xf32>
    %110 = vector.broadcast %109 : vector<1x32xf32> to vector<8x32xf32>
    %111 = arith.mulf %108, %110 : vector<8x32xf32>
    %c3 = arith.constant 3 : index
    %c0_44 = arith.constant 0 : index
    %112 = vector.load %arg7[%c3, %c0_44] : memref<13x96xf32, #tpu.memory_space<vmem>>, vector<1x32xf32>
    %113 = vector.broadcast %112 : vector<1x32xf32> to vector<8x32xf32>
    %114 = arith.addf %111, %113 : vector<8x32xf32>
    %115 = vector.extract_strided_slice %8 {offsets = [0, 128], sizes = [32, 32], strides = [1, 1]} : vector<32x320xf32> to vector<32x32xf32>
    %cst_45 = arith.constant dense<0.000000e+00> : vector<8x32xf32>
    %116 = tpu.matmul %114, %115, %cst_45 {dimension_numbers = #tpu.dot_dimension_numbers<[1], [0], [0], [1], [0, 0, 1, 1], [], []>} : vector<8x32xf32>, vector<32x32xf32>, vector<8x32xf32> -> vector<8x32xf32>
    %c4 = arith.constant 4 : index
    %c0_46 = arith.constant 0 : index
    %117 = vector.load %arg7[%c4, %c0_46] : memref<13x96xf32, #tpu.memory_space<vmem>>, vector<1x32xf32>
    %118 = vector.broadcast %117 : vector<1x32xf32> to vector<8x32xf32>
    %119 = arith.addf %116, %118 : vector<8x32xf32>
    %cst_47 = arith.constant 0.353553385 : f32
    %120 = vector.broadcast %cst_47 : f32 to vector<8x32xf32>
    %121 = arith.mulf %119, %120 : vector<8x32xf32>
    %122 = vector.extract_strided_slice %8 {offsets = [0, 160], sizes = [32, 64], strides = [1, 1]} : vector<32x320xf32> to vector<32x64xf32>
    %cst_48 = arith.constant dense<0.000000e+00> : vector<8x64xf32>
    %123 = tpu.matmul %3, %122, %cst_48 {dimension_numbers = #tpu.dot_dimension_numbers<[1], [0], [0], [1], [0, 0, 1, 1], [], []>} : vector<8x32xf32>, vector<32x64xf32>, vector<8x64xf32> -> vector<8x64xf32>
    %c5 = arith.constant 5 : index
    %c0_49 = arith.constant 0 : index
    %124 = vector.load %arg7[%c5, %c0_49] : memref<13x96xf32, #tpu.memory_space<vmem>>, vector<1x64xf32>
    %125 = vector.broadcast %124 : vector<1x64xf32> to vector<8x64xf32>
    %126 = arith.addf %123, %125 : vector<8x64xf32>
    %127 = vector.extract_strided_slice %126 {offsets = [0, 0], sizes = [8, 32], strides = [1, 1]} : vector<8x64xf32> to vector<8x32xf32>
    %128 = vector.extract_strided_slice %126 {offsets = [0, 32], sizes = [8, 32], strides = [1, 1]} : vector<8x64xf32> to vector<8x32xf32>
    %129 = vector.extract_strided_slice %121 {offsets = [0, 0], sizes = [8, 8], strides = [1, 1]} : vector<8x32xf32> to vector<8x8xf32>
    %130 = vector.extract_strided_slice %127 {offsets = [0, 0], sizes = [8, 8], strides = [1, 1]} : vector<8x32xf32> to vector<8x8xf32>
    %131 = vector.extract_strided_slice %128 {offsets = [0, 0], sizes = [8, 8], strides = [1, 1]} : vector<8x32xf32> to vector<8x8xf32>
    %cst_50 = arith.constant dense<0.000000e+00> : vector<8x8xf32>
    %132 = tpu.matmul %129, %130, %cst_50 {dimension_numbers = #tpu.dot_dimension_numbers<[1], [1], [0], [0], [0, 0, 1, 0], [], []>} : vector<8x8xf32>, vector<8x8xf32>, vector<8x8xf32> -> vector<8x8xf32>
    %133 = arith.addf %132, %7 : vector<8x8xf32>
    %cst_51 = arith.constant dense<0xFF800000> : vector<8xf32>
    %134 = vector.multi_reduction <maximumf>, %133, %cst_51 [1] : vector<8x8xf32> to vector<8xf32>
    %135 = vector.shape_cast %134 : vector<8xf32> to vector<8x1xf32>
    %136 = vector.broadcast %135 : vector<8x1xf32> to vector<8x8xf32>
    %137 = arith.subf %133, %136 : vector<8x8xf32>
    %138 = math.exp %137 : vector<8x8xf32>
    %cst_52 = arith.constant dense<0.000000e+00> : vector<8xf32>
    %139 = vector.multi_reduction <add>, %138, %cst_52 [1] : vector<8x8xf32> to vector<8xf32>
    %140 = vector.shape_cast %139 : vector<8xf32> to vector<8x1xf32>
    %141 = tpu.reciprocal %140 {approx = true} : vector<8x1xf32> -> vector<8x1xf32>
    %142 = vector.broadcast %141 : vector<8x1xf32> to vector<8x8xf32>
    %143 = arith.mulf %138, %142 : vector<8x8xf32>
    %cst_53 = arith.constant dense<0.000000e+00> : vector<8x8xf32>
    %144 = tpu.matmul %143, %131, %cst_53 {dimension_numbers = #tpu.dot_dimension_numbers<[1], [0], [0], [1], [0, 0, 1, 1], [], []>} : vector<8x8xf32>, vector<8x8xf32>, vector<8x8xf32> -> vector<8x8xf32>
    %145 = vector.extract_strided_slice %121 {offsets = [0, 8], sizes = [8, 8], strides = [1, 1]} : vector<8x32xf32> to vector<8x8xf32>
    %146 = vector.extract_strided_slice %127 {offsets = [0, 8], sizes = [8, 8], strides = [1, 1]} : vector<8x32xf32> to vector<8x8xf32>
    %147 = vector.extract_strided_slice %128 {offsets = [0, 8], sizes = [8, 8], strides = [1, 1]} : vector<8x32xf32> to vector<8x8xf32>
    %cst_54 = arith.constant dense<0.000000e+00> : vector<8x8xf32>
    %148 = tpu.matmul %145, %146, %cst_54 {dimension_numbers = #tpu.dot_dimension_numbers<[1], [1], [0], [0], [0, 0, 1, 0], [], []>} : vector<8x8xf32>, vector<8x8xf32>, vector<8x8xf32> -> vector<8x8xf32>
    %149 = arith.addf %148, %7 : vector<8x8xf32>
    %cst_55 = arith.constant dense<0xFF800000> : vector<8xf32>
    %150 = vector.multi_reduction <maximumf>, %149, %cst_55 [1] : vector<8x8xf32> to vector<8xf32>
    %151 = vector.shape_cast %150 : vector<8xf32> to vector<8x1xf32>
    %152 = vector.broadcast %151 : vector<8x1xf32> to vector<8x8xf32>
    %153 = arith.subf %149, %152 : vector<8x8xf32>
    %154 = math.exp %153 : vector<8x8xf32>
    %cst_56 = arith.constant dense<0.000000e+00> : vector<8xf32>
    %155 = vector.multi_reduction <add>, %154, %cst_56 [1] : vector<8x8xf32> to vector<8xf32>
    %156 = vector.shape_cast %155 : vector<8xf32> to vector<8x1xf32>
    %157 = tpu.reciprocal %156 {approx = true} : vector<8x1xf32> -> vector<8x1xf32>
    %158 = vector.broadcast %157 : vector<8x1xf32> to vector<8x8xf32>
    %159 = arith.mulf %154, %158 : vector<8x8xf32>
    %cst_57 = arith.constant dense<0.000000e+00> : vector<8x8xf32>
    %160 = tpu.matmul %159, %147, %cst_57 {dimension_numbers = #tpu.dot_dimension_numbers<[1], [0], [0], [1], [0, 0, 1, 1], [], []>} : vector<8x8xf32>, vector<8x8xf32>, vector<8x8xf32> -> vector<8x8xf32>
    %161 = vector.extract_strided_slice %121 {offsets = [0, 16], sizes = [8, 8], strides = [1, 1]} : vector<8x32xf32> to vector<8x8xf32>
    %162 = vector.extract_strided_slice %127 {offsets = [0, 16], sizes = [8, 8], strides = [1, 1]} : vector<8x32xf32> to vector<8x8xf32>
    %163 = vector.extract_strided_slice %128 {offsets = [0, 16], sizes = [8, 8], strides = [1, 1]} : vector<8x32xf32> to vector<8x8xf32>
    %cst_58 = arith.constant dense<0.000000e+00> : vector<8x8xf32>
    %164 = tpu.matmul %161, %162, %cst_58 {dimension_numbers = #tpu.dot_dimension_numbers<[1], [1], [0], [0], [0, 0, 1, 0], [], []>} : vector<8x8xf32>, vector<8x8xf32>, vector<8x8xf32> -> vector<8x8xf32>
    %165 = arith.addf %164, %7 : vector<8x8xf32>
    %cst_59 = arith.constant dense<0xFF800000> : vector<8xf32>
    %166 = vector.multi_reduction <maximumf>, %165, %cst_59 [1] : vector<8x8xf32> to vector<8xf32>
    %167 = vector.shape_cast %166 : vector<8xf32> to vector<8x1xf32>
    %168 = vector.broadcast %167 : vector<8x1xf32> to vector<8x8xf32>
    %169 = arith.subf %165, %168 : vector<8x8xf32>
    %170 = math.exp %169 : vector<8x8xf32>
    %cst_60 = arith.constant dense<0.000000e+00> : vector<8xf32>
    %171 = vector.multi_reduction <add>, %170, %cst_60 [1] : vector<8x8xf32> to vector<8xf32>
    %172 = vector.shape_cast %171 : vector<8xf32> to vector<8x1xf32>
    %173 = tpu.reciprocal %172 {approx = true} : vector<8x1xf32> -> vector<8x1xf32>
    %174 = vector.broadcast %173 : vector<8x1xf32> to vector<8x8xf32>
    %175 = arith.mulf %170, %174 : vector<8x8xf32>
    %cst_61 = arith.constant dense<0.000000e+00> : vector<8x8xf32>
    %176 = tpu.matmul %175, %163, %cst_61 {dimension_numbers = #tpu.dot_dimension_numbers<[1], [0], [0], [1], [0, 0, 1, 1], [], []>} : vector<8x8xf32>, vector<8x8xf32>, vector<8x8xf32> -> vector<8x8xf32>
    %177 = vector.extract_strided_slice %121 {offsets = [0, 24], sizes = [8, 8], strides = [1, 1]} : vector<8x32xf32> to vector<8x8xf32>
    %178 = vector.extract_strided_slice %127 {offsets = [0, 24], sizes = [8, 8], strides = [1, 1]} : vector<8x32xf32> to vector<8x8xf32>
    %179 = vector.extract_strided_slice %128 {offsets = [0, 24], sizes = [8, 8], strides = [1, 1]} : vector<8x32xf32> to vector<8x8xf32>
    %cst_62 = arith.constant dense<0.000000e+00> : vector<8x8xf32>
    %180 = tpu.matmul %177, %178, %cst_62 {dimension_numbers = #tpu.dot_dimension_numbers<[1], [1], [0], [0], [0, 0, 1, 0], [], []>} : vector<8x8xf32>, vector<8x8xf32>, vector<8x8xf32> -> vector<8x8xf32>
    %181 = arith.addf %180, %7 : vector<8x8xf32>
    %cst_63 = arith.constant dense<0xFF800000> : vector<8xf32>
    %182 = vector.multi_reduction <maximumf>, %181, %cst_63 [1] : vector<8x8xf32> to vector<8xf32>
    %183 = vector.shape_cast %182 : vector<8xf32> to vector<8x1xf32>
    %184 = vector.broadcast %183 : vector<8x1xf32> to vector<8x8xf32>
    %185 = arith.subf %181, %184 : vector<8x8xf32>
    %186 = math.exp %185 : vector<8x8xf32>
    %cst_64 = arith.constant dense<0.000000e+00> : vector<8xf32>
    %187 = vector.multi_reduction <add>, %186, %cst_64 [1] : vector<8x8xf32> to vector<8xf32>
    %188 = vector.shape_cast %187 : vector<8xf32> to vector<8x1xf32>
    %189 = tpu.reciprocal %188 {approx = true} : vector<8x1xf32> -> vector<8x1xf32>
    %190 = vector.broadcast %189 : vector<8x1xf32> to vector<8x8xf32>
    %191 = arith.mulf %186, %190 : vector<8x8xf32>
    %cst_65 = arith.constant dense<0.000000e+00> : vector<8x8xf32>
    %192 = tpu.matmul %191, %179, %cst_65 {dimension_numbers = #tpu.dot_dimension_numbers<[1], [0], [0], [1], [0, 0, 1, 1], [], []>} : vector<8x8xf32>, vector<8x8xf32>, vector<8x8xf32> -> vector<8x8xf32>
    %193 = tpu.concatenate %144, %160, %176, %192 in 1 : vector<8x8xf32>, vector<8x8xf32>, vector<8x8xf32>, vector<8x8xf32> -> vector<8x32xf32>
    %194 = vector.extract_strided_slice %8 {offsets = [0, 224], sizes = [32, 32], strides = [1, 1]} : vector<32x320xf32> to vector<32x32xf32>
    %cst_66 = arith.constant dense<0.000000e+00> : vector<8x32xf32>
    %195 = tpu.matmul %193, %194, %cst_66 {dimension_numbers = #tpu.dot_dimension_numbers<[1], [0], [0], [1], [0, 0, 1, 1], [], []>} : vector<8x32xf32>, vector<32x32xf32>, vector<8x32xf32> -> vector<8x32xf32>
    %c6 = arith.constant 6 : index
    %c0_67 = arith.constant 0 : index
    %196 = vector.load %arg7[%c6, %c0_67] : memref<13x96xf32, #tpu.memory_space<vmem>>, vector<1x32xf32>
    %197 = vector.broadcast %196 : vector<1x32xf32> to vector<8x32xf32>
    %198 = arith.addf %195, %197 : vector<8x32xf32>
    %199 = arith.addf %114, %198 : vector<8x32xf32>
    %cst_68 = arith.constant dense<0.000000e+00> : vector<8xf32>
    %200 = vector.multi_reduction <add>, %199, %cst_68 [1] : vector<8x32xf32> to vector<8xf32>
    %201 = vector.shape_cast %200 : vector<8xf32> to vector<8x1xf32>
    %cst_69 = arith.constant 3.200000e+01 : f32
    %202 = vector.broadcast %cst_69 : f32 to vector<8x1xf32>
    %203 = arith.divf %201, %202 : vector<8x1xf32>
    %204 = vector.broadcast %203 : vector<8x1xf32> to vector<8x32xf32>
    %205 = arith.subf %199, %204 : vector<8x32xf32>
    %206 = arith.mulf %205, %205 : vector<8x32xf32>
    %cst_70 = arith.constant dense<0.000000e+00> : vector<8xf32>
    %207 = vector.multi_reduction <add>, %206, %cst_70 [1] : vector<8x32xf32> to vector<8xf32>
    %208 = vector.shape_cast %207 : vector<8xf32> to vector<8x1xf32>
    %cst_71 = arith.constant 3.200000e+01 : f32
    %209 = vector.broadcast %cst_71 : f32 to vector<8x1xf32>
    %210 = arith.divf %208, %209 : vector<8x1xf32>
    %211 = vector.broadcast %203 : vector<8x1xf32> to vector<8x32xf32>
    %212 = arith.subf %199, %211 : vector<8x32xf32>
    %cst_72 = arith.constant 9.99999974E-6 : f32
    %213 = vector.broadcast %cst_72 : f32 to vector<8x1xf32>
    %214 = arith.addf %210, %213 : vector<8x1xf32>
    %215 = math.rsqrt %214 : vector<8x1xf32>
    %216 = vector.broadcast %215 : vector<8x1xf32> to vector<8x32xf32>
    %217 = arith.mulf %212, %216 : vector<8x32xf32>
    %c7 = arith.constant 7 : index
    %c0_73 = arith.constant 0 : index
    %218 = vector.load %arg7[%c7, %c0_73] : memref<13x96xf32, #tpu.memory_space<vmem>>, vector<1x32xf32>
    %219 = vector.broadcast %218 : vector<1x32xf32> to vector<8x32xf32>
    %220 = arith.mulf %217, %219 : vector<8x32xf32>
    %c8 = arith.constant 8 : index
    %c0_74 = arith.constant 0 : index
    %221 = vector.load %arg7[%c8, %c0_74] : memref<13x96xf32, #tpu.memory_space<vmem>>, vector<1x32xf32>
    %222 = vector.broadcast %221 : vector<1x32xf32> to vector<8x32xf32>
    %223 = arith.addf %220, %222 : vector<8x32xf32>
    %224 = vector.extract_strided_slice %8 {offsets = [0, 256], sizes = [32, 64], strides = [1, 1]} : vector<32x320xf32> to vector<32x64xf32>
    %cst_75 = arith.constant dense<0.000000e+00> : vector<8x64xf32>
    %225 = tpu.matmul %223, %224, %cst_75 {dimension_numbers = #tpu.dot_dimension_numbers<[1], [0], [0], [1], [0, 0, 1, 1], [], []>} : vector<8x32xf32>, vector<32x64xf32>, vector<8x64xf32> -> vector<8x64xf32>
    %c9 = arith.constant 9 : index
    %c0_76 = arith.constant 0 : index
    %226 = vector.load %arg7[%c9, %c0_76] : memref<13x96xf32, #tpu.memory_space<vmem>>, vector<1x64xf32>
    %227 = vector.broadcast %226 : vector<1x64xf32> to vector<8x64xf32>
    %228 = arith.addf %225, %227 : vector<8x64xf32>
    %cst_77 = arith.constant 5.000000e-01 : f32
    %229 = vector.broadcast %cst_77 : f32 to vector<8x64xf32>
    %230 = arith.mulf %229, %228 : vector<8x64xf32>
    %cst_78 = arith.constant 4.471500e-02 : f32
    %231 = vector.broadcast %cst_78 : f32 to vector<8x64xf32>
    %232 = arith.mulf %231, %228 : vector<8x64xf32>
    %233 = arith.mulf %232, %228 : vector<8x64xf32>
    %234 = arith.mulf %233, %228 : vector<8x64xf32>
    %235 = arith.addf %228, %234 : vector<8x64xf32>
    %cst_79 = arith.constant 0.797884583 : f32
    %236 = vector.broadcast %cst_79 : f32 to vector<8x64xf32>
    %237 = arith.mulf %236, %235 : vector<8x64xf32>
    %238 = math.tanh %237 : vector<8x64xf32>
    %cst_80 = arith.constant 1.000000e+00 : f32
    %239 = vector.broadcast %cst_80 : f32 to vector<8x64xf32>
    %240 = arith.addf %239, %238 : vector<8x64xf32>
    %241 = arith.mulf %230, %240 : vector<8x64xf32>
    %cst_81 = arith.constant dense<0.000000e+00> : vector<8x32xf32>
    %242 = tpu.matmul %241, %9, %cst_81 {dimension_numbers = #tpu.dot_dimension_numbers<[1], [0], [0], [1], [0, 0, 1, 1], [], []>} : vector<8x64xf32>, vector<64x32xf32>, vector<8x32xf32> -> vector<8x32xf32>
    %c10 = arith.constant 10 : index
    %c0_82 = arith.constant 0 : index
    %243 = vector.load %arg7[%c10, %c0_82] : memref<13x96xf32, #tpu.memory_space<vmem>>, vector<1x32xf32>
    %244 = vector.broadcast %243 : vector<1x32xf32> to vector<8x32xf32>
    %245 = arith.addf %242, %244 : vector<8x32xf32>
    %246 = arith.addf %223, %245 : vector<8x32xf32>
    %cst_83 = arith.constant dense<0.000000e+00> : vector<8xf32>
    %247 = vector.multi_reduction <add>, %246, %cst_83 [1] : vector<8x32xf32> to vector<8xf32>
    %248 = vector.shape_cast %247 : vector<8xf32> to vector<8x1xf32>
    %cst_84 = arith.constant 3.200000e+01 : f32
    %249 = vector.broadcast %cst_84 : f32 to vector<8x1xf32>
    %250 = arith.divf %248, %249 : vector<8x1xf32>
    %251 = vector.broadcast %250 : vector<8x1xf32> to vector<8x32xf32>
    %252 = arith.subf %246, %251 : vector<8x32xf32>
    %253 = arith.mulf %252, %252 : vector<8x32xf32>
    %cst_85 = arith.constant dense<0.000000e+00> : vector<8xf32>
    %254 = vector.multi_reduction <add>, %253, %cst_85 [1] : vector<8x32xf32> to vector<8xf32>
    %255 = vector.shape_cast %254 : vector<8xf32> to vector<8x1xf32>
    %cst_86 = arith.constant 3.200000e+01 : f32
    %256 = vector.broadcast %cst_86 : f32 to vector<8x1xf32>
    %257 = arith.divf %255, %256 : vector<8x1xf32>
    %258 = vector.broadcast %250 : vector<8x1xf32> to vector<8x32xf32>
    %259 = arith.subf %246, %258 : vector<8x32xf32>
    %cst_87 = arith.constant 9.99999974E-6 : f32
    %260 = vector.broadcast %cst_87 : f32 to vector<8x1xf32>
    %261 = arith.addf %257, %260 : vector<8x1xf32>
    %262 = math.rsqrt %261 : vector<8x1xf32>
    %263 = vector.broadcast %262 : vector<8x1xf32> to vector<8x32xf32>
    %264 = arith.mulf %259, %263 : vector<8x32xf32>
    %c11 = arith.constant 11 : index
    %c0_88 = arith.constant 0 : index
    %265 = vector.load %arg7[%c11, %c0_88] : memref<13x96xf32, #tpu.memory_space<vmem>>, vector<1x32xf32>
    %266 = vector.broadcast %265 : vector<1x32xf32> to vector<8x32xf32>
    %267 = arith.mulf %264, %266 : vector<8x32xf32>
    %c12 = arith.constant 12 : index
    %c0_89 = arith.constant 0 : index
    %268 = vector.load %arg7[%c12, %c0_89] : memref<13x96xf32, #tpu.memory_space<vmem>>, vector<1x32xf32>
    %269 = vector.broadcast %268 : vector<1x32xf32> to vector<8x32xf32>
    %270 = arith.addf %267, %269 : vector<8x32xf32>
    %271 = tpu.concatenate %270, %18, %19 in 1 : vector<8x32xf32>, vector<8x32xf32>, vector<8x32xf32> -> vector<8x96xf32>
    %c0_90 = arith.constant 0 : index
    %c0_91 = arith.constant 0 : index
    %c0_92 = arith.constant 0 : index
    %272 = vector.load %arg8[%c0_90, %c0_91, %c0_92] : memref<1x8x96xf32, #tpu.memory_space<vmem>>, vector<1x8x96xf32>
    %273 = vector.shape_cast %272 : vector<1x8x96xf32> to vector<8x96xf32>
    %274 = vector.shape_cast %271 : vector<8x96xf32> to vector<1x8x96xf32>
    tpu.vector_store %arg8[%c0_90, %c0_91, %c0_92], %274 {strides = array<i32>} : memref<1x8x96xf32, #tpu.memory_space<vmem>>, vector<1x8x96xf32>,
    %c0_93 = arith.constant 0 : index
    %c0_94 = arith.constant 0 : index
    %c0_95 = arith.constant 0 : index
    %275 = vector.load %arg9[%c0_93, %c0_94, %c0_95] : memref<1x8x64xf32, #tpu.memory_space<vmem>>, vector<1x8x64xf32>
    %276 = vector.shape_cast %275 : vector<1x8x64xf32> to vector<8x64xf32>
    %277 = vector.shape_cast %126 : vector<8x64xf32> to vector<1x8x64xf32>
    tpu.vector_store %arg9[%c0_93, %c0_94, %c0_95], %277 {strides = array<i32>} : memref<1x8x64xf32, #tpu.memory_space<vmem>>, vector<1x8x64xf32>,
    return
  }
  func.func @transform_0(%arg0: i32) -> (i32, i32, i32) {
    %c0_i32 = arith.constant 0 : i32
    %c0_i32_0 = arith.constant 0 : i32
    %c0_i32_1 = arith.constant 0 : i32
    return %arg0, %c0_i32, %c0_i32_0 : i32, i32, i32
  }
  func.func @transform_1(%arg0: i32) -> (i32, i32, i32, i32) {
    %c0_i32 = arith.constant 0 : i32
    %c0_i32_0 = arith.constant 0 : i32
    %c0_i32_1 = arith.constant 0 : i32
    %c0_i32_2 = arith.constant 0 : i32
    return %arg0, %c0_i32, %c0_i32_0, %c0_i32_1 : i32, i32, i32, i32
  }
  func.func @transform_2(%arg0: i32) -> (i32, i32, i32) {
    %c0_i32 = arith.constant 0 : i32
    %c0_i32_0 = arith.constant 0 : i32
    %c0_i32_1 = arith.constant 0 : i32
    return %arg0, %c0_i32, %c0_i32_0 : i32, i32, i32
  }
  func.func @transform_3(%arg0: i32) -> (i32, i32, i32, i32) {
    %c0_i32 = arith.constant 0 : i32
    %c0_i32_0 = arith.constant 0 : i32
    %c0_i32_1 = arith.constant 0 : i32
    %c0_i32_2 = arith.constant 0 : i32
    return %arg0, %c0_i32, %c0_i32_0, %c0_i32_1 : i32, i32, i32, i32
  }
  func.func @transform_4(%arg0: i32) -> (i32, i32) {
    %c0_i32 = arith.constant 0 : i32
    %c0_i32_0 = arith.constant 0 : i32
    %c0_i32_1 = arith.constant 0 : i32
    return %c0_i32, %c0_i32_0 : i32, i32
  }
  func.func @transform_5(%arg0: i32) -> (i32, i32) {
    %c0_i32 = arith.constant 0 : i32
    %c0_i32_0 = arith.constant 0 : i32
    %c0_i32_1 = arith.constant 0 : i32
    return %c0_i32, %c0_i32_0 : i32, i32
  }
  func.func @transform_6(%arg0: i32) -> (i32, i32) {
    %c0_i32 = arith.constant 0 : i32
    %c0_i32_0 = arith.constant 0 : i32
    %c0_i32_1 = arith.constant 0 : i32
    return %c0_i32, %c0_i32_0 : i32, i32
  }
  func.func @transform_7(%arg0: i32) -> (i32, i32, i32) {
    %c0_i32 = arith.constant 0 : i32
    %c0_i32_0 = arith.constant 0 : i32
    %c0_i32_1 = arith.constant 0 : i32
    return %arg0, %c0_i32, %c0_i32_0 : i32, i32, i32
  }
  func.func @transform_8(%arg0: i32) -> (i32, i32, i32) {
    %c0_i32 = arith.constant 0 : i32
    %c0_i32_0 = arith.constant 0 : i32
    %c0_i32_1 = arith.constant 0 : i32
    return %arg0, %c0_i32, %c0_i32_0 : i32, i32, i32
  }
}

</mosaic_0001>

<llo_original>
// kernel: mass_decoder_layer.1
$region0: #{mass_decoder_layer.1}
  #allocation0 [shape = 'u32[]', space=smem, size = 0x4, offset = 0x4, fixed_abs, tag = 'smem constant byte address 0x4 - core index']
  #allocation1 [shape = 'u32[144,128]{1,0:T(1,128)}', space=vmem, size = 0x12000, scoped, tag = 'internal scratch']
  %s0 = inlined_call_operand.vmem [shape: f32[2,8,32], index: 0, kind: input, shape index: {}]
  %s1 = inlined_call_operand.hbm [shape: f32[2,1,8,8], index: 1, kind: input, shape index: {}]
  %s2 = inlined_call_operand.hbm [shape: f32[2,8,32], index: 2, kind: input, shape index: {}]
  %s3 = inlined_call_operand.hbm [shape: f32[2,1,8,8], index: 3, kind: input, shape index: {}]
  %s4 = inlined_call_operand.vmem [shape: f32[32,320], index: 4, kind: input, shape index: {}]
  %s5 = inlined_call_operand.vmem [shape: f32[64,32], index: 5, kind: input, shape index: {}]
  %s6 = inlined_call_operand.hbm [shape: f32[13,96], index: 6, kind: input, shape index: {}]
  %s7 = inlined_call_operand.vmem [shape: f32[2,8,96], index: 7, kind: output, shape index: {0}]
  %s8 = inlined_call_operand.vmem [shape: f32[2,8,64], index: 8, kind: output, shape index: {1}]
  %9 = xla_tuple %s7, %s8
  %s10 = sld [smem:[#allocation0]]
  $region85: #{mass_decoder_layer.1} parent=0
    _
  %s12 = ssub.s32 1, %s10
  %s13 = scalar_select 0, %s12, %s10
  $region1: #{mass_decoder_layer.1} parent=0
    #allocation2 [shape = 'u8[8192]{0}', space=vmem, size = 0x2000, scoped, tag = 'input window, operand 1']
    #allocation3 [shape = 's32[2]{0}', space=sflag, size = 0x8, scoped, tag = 'scoped memory for mass_decoder_layer.1']
    #allocation4 [shape = 'u8[8192]{0}', space=vmem, size = 0x2000, scoped, tag = 'input window, operand 2']
    #allocation5 [shape = 's32[2]{0}', space=sflag, size = 0x8, scoped, tag = 'scoped memory for mass_decoder_layer.1']
    #allocation6 [shape = 'u8[8192]{0}', space=vmem, size = 0x2000, scoped, tag = 'input window, operand 3']
    #allocation7 [shape = 'u8[8192]{0}', space=vmem, size = 0x2000, scoped, tag = 'input window, operand 6, single buffered']
    #allocation8 [shape = 's32[1]{0}', space=sflag, size = 0x4, scoped, tag = 'scoped memory for mass_decoder_layer.1']
    %14 = vsyncpa [#allocation3], 0
    %s15 = scalar_lea.sflag [#allocation3], 1
    %16 = vsyncpa %s15, 0
    %17 = vsyncpa [#allocation5], 0
    %s18 = scalar_lea.sflag [#allocation5], 1
    %19 = vsyncpa %s18, 0
    %20 = vsyncpa [#allocation8], 0
    loop: start=0, step=1, limit=4
    $region2: #{mass_decoder_layer.1} parent=1 // loop_pre_header
      _
    $region3: #{mass_decoder_layer.1} parent=1 // loop_header
      %s22 = sphi 0, %s26
      %p23 = scmp.ge.s32.totalorder %s22, 4
      %s32 = sphi 0, %s34
      %s35 = sphi 0, %s32
      %s36 = sphi 0, %s35
      %s52 = sphi 0, %s36
      %s58 = sphi 0, %s60
      %s61 = sphi 0, %s58
      %s62 = sphi 0, %s61
      %s78 = sphi 0, %s62
      %s84 = sphi 0, %s86
      %s87 = sphi 0, %s84
      %s88 = sphi 0, %s87
      %s104 = sphi 0, %s88
      %s110 = sphi 0, %s112
      %s113 = sphi 0, %s110
      %s114 = sphi 0, %s113
      %s130 = sphi 0, %s114
      %s134 = sphi 0, %s134
      %s136 = sphi 0, %s134
      %s137 = sphi 0, %s136
      %s151 = sphi 0, %s137
      %s155 = sphi 0, %s155
      %s157 = sphi 0, %s155
      %s158 = sphi 0, %s157
      %s172 = sphi 0, %s158
      %s176 = sphi 0, %s176
      %s178 = sphi 0, %s176
      %s179 = sphi 0, %s178
      %s193 = sphi 0, %s179
      %s199 = sphi 0, %s201
      %s202 = sphi 0, %s199
      %s203 = sphi 0, %s202
      %s219 = sphi 0, %s203
      %s225 = sphi 0, %s227
      %s228 = sphi 0, %s225
      %s229 = sphi 0, %s228
      %s245 = sphi 0, %s229
    $region4: #{mass_decoder_layer.1} parent=1 // loop_header_branch
      %25 = sbr.rel (%p23) target = $region8
    $region5: #{mass_decoder_layer.1} parent=1 // loop_body
      %s27 = ssub.s32 %s22, 1
      %s28 = ssub.s32 %s22, 2
      %s29 = sadd.s32 %s22, 1
      %s30 = ssub.s32 %s22, %s29
      %p31 = scmp.eq.s32.totalorder %s30, 0
      %s33 = sadd.s32 %s32, 1
      %s34 = scalar_select %p31, %s32, %s33
      %p37 = pneg %p31
      %p38 = scmp.eq.s32.totalorder %s22, 1
      %p39 = por %p37, %p38
      %p40 = scmp.ne.s32.totalorder %s32, %s35
      %p41 = scmp.eq.s32.totalorder %s22, 0
      %p42 = por %p40, %p41
      %p43 = scmp.ne.s32.totalorder %s32, %s35
      %p44 = scmp.eq.s32.totalorder %s27, 1
      %p45 = por %p43, %p44
      %p46 = scmp.ne.s32.totalorder %s35, %s36
      %p47 = scmp.eq.s32.totalorder %s27, 0
      %p48 = por %p46, %p47
      %p49 = scmp.ne.s32.totalorder %s35, %s36
      %p50 = scmp.eq.s32.totalorder %s28, 1
      %p51 = por %p49, %p50
      %p53 = scmp.ne.s32.totalorder %s36, %s52
      %p54 = scmp.eq.s32.totalorder %s28, 0
      %p55 = por %p53, %p54
      %s56 = ssub.s32 %s22, %s29
      %p57 = scmp.eq.s32.totalorder %s56, 0
      %s59 = sadd.s32 %s58, 1
      %s60 = scalar_select %p57, %s58, %s59
      %p63 = pneg %p57
      %p64 = scmp.eq.s32.totalorder %s22, 1
      %p65 = por %p63, %p64
      %p66 = scmp.ne.s32.totalorder %s58, %s61
      %p67 = scmp.eq.s32.totalorder %s22, 0
      %p68 = por %p66, %p67
      %p69 = scmp.ne.s32.totalorder %s58, %s61
      %p70 = scmp.eq.s32.totalorder %s27, 1
      %p71 = por %p69, %p70
      %p72 = scmp.ne.s32.totalorder %s61, %s62
      %p73 = scmp.eq.s32.totalorder %s27, 0
      %p74 = por %p72, %p73
      %p75 = scmp.ne.s32.totalorder %s61, %s62
      %p76 = scmp.eq.s32.totalorder %s28, 1
      %p77 = por %p75, %p76
      %p79 = scmp.ne.s32.totalorder %s62, %s78
      %p80 = scmp.eq.s32.totalorder %s28, 0
      %p81 = por %p79, %p80
      %s82 = ssub.s32 %s22, %s29
      %p83 = scmp.eq.s32.totalorder %s82, 0
      %s85 = sadd.s32 %s84, 1
      %s86 = scalar_select %p83, %s84, %s85
      %p89 = pneg %p83
      %p90 = scmp.eq.s32.totalorder %s22, 1
      %p91 = por %p89, %p90
      %p92 = scmp.ne.s32.totalorder %s84, %s87
      %p93 = scmp.eq.s32.totalorder %s22, 0
      %p94 = por %p92, %p93
      %p95 = scmp.ne.s32.totalorder %s84, %s87
      %p96 = scmp.eq.s32.totalorder %s27, 1
      %p97 = por %p95, %p96
      %p98 = scmp.ne.s32.totalorder %s87, %s88
      %p99 = scmp.eq.s32.totalorder %s27, 0
      %p100 = por %p98, %p99
      %p101 = scmp.ne.s32.totalorder %s87, %s88
      %p102 = scmp.eq.s32.totalorder %s28, 1
      %p103 = por %p101, %p102
      %p105 = scmp.ne.s32.totalorder %s88, %s104
      %p106 = scmp.eq.s32.totalorder %s28, 0
      %p107 = por %p105, %p106
      %s108 = ssub.s32 %s22, %s29
      %p109 = scmp.eq.s32.totalorder %s108, 0
      %s111 = sadd.s32 %s110, 1
      %s112 = scalar_select %p109, %s110, %s111
      %p115 = pneg %p109
      %p116 = scmp.eq.s32.totalorder %s22, 1
      %p117 = por %p115, %p116
      %p118 = scmp.ne.s32.totalorder %s110, %s113
      %p119 = scmp.eq.s32.totalorder %s22, 0
      %p120 = por %p118, %p119
      %p121 = scmp.ne.s32.totalorder %s110, %s113
      %p122 = scmp.eq.s32.totalorder %s27, 1
      %p123 = por %p121, %p122
      %p124 = scmp.ne.s32.totalorder %s113, %s114
      %p125 = scmp.eq.s32.totalorder %s27, 0
      %p126 = por %p124, %p125
      %p127 = scmp.ne.s32.totalorder %s113, %s114
      %p128 = scmp.eq.s32.totalorder %s28, 1
      %p129 = por %p127, %p128
      %p131 = scmp.ne.s32.totalorder %s114, %s130
      %p132 = scmp.eq.s32.totalorder %s28, 0
      %p133 = por %p131, %p132
      %s135 = sadd.s32 %s134, 1
      %p138 = scmp.eq.s32.totalorder %s22, 1
      %p139 = scmp.ne.s32.totalorder %s134, %s136
      %p140 = scmp.eq.s32.totalorder %s22, 0
      %p141 = por %p139, %p140
      %p142 = scmp.ne.s32.totalorder %s134, %s136
      %p143 = scmp.eq.s32.totalorder %s27, 1
      %p144 = por %p142, %p143
      %p145 = scmp.ne.s32.totalorder %s136, %s137
      %p146 = scmp.eq.s32.totalorder %s27, 0
      %p147 = por %p145, %p146
      %p148 = scmp.ne.s32.totalorder %s136, %s137
      %p149 = scmp.eq.s32.totalorder %s28, 1
      %p150 = por %p148, %p149
      %p152 = scmp.ne.s32.totalorder %s137, %s151
      %p153 = scmp.eq.s32.totalorder %s28, 0
      %p154 = por %p152, %p153
      %s156 = sadd.s32 %s155, 1
      %p159 = scmp.eq.s32.totalorder %s22, 1
      %p160 = scmp.ne.s32.totalorder %s155, %s157
      %p161 = scmp.eq.s32.totalorder %s22, 0
      %p162 = por %p160, %p161
      %p163 = scmp.ne.s32.totalorder %s155, %s157
      %p164 = scmp.eq.s32.totalorder %s27, 1
      %p165 = por %p163, %p164
      %p166 = scmp.ne.s32.totalorder %s157, %s158
      %p167 = scmp.eq.s32.totalorder %s27, 0
      %p168 = por %p166, %p167
      %p169 = scmp.ne.s32.totalorder %s157, %s158
      %p170 = scmp.eq.s32.totalorder %s28, 1
      %p171 = por %p169, %p170
      %p173 = scmp.ne.s32.totalorder %s158, %s172
      %p174 = scmp.eq.s32.totalorder %s28, 0
      %p175 = por %p173, %p174
      %s177 = sadd.s32 %s176, 1
      %p180 = scmp.eq.s32.totalorder %s22, 1
      %p181 = scmp.ne.s32.totalorder %s176, %s178
      %p182 = scmp.eq.s32.totalorder %s22, 0
      %p183 = por %p181, %p182
      %p184 = scmp.ne.s32.totalorder %s176, %s178
      %p185 = scmp.eq.s32.totalorder %s27, 1
      %p186 = por %p184, %p185
      %p187 = scmp.ne.s32.totalorder %s178, %s179
      %p188 = scmp.eq.s32.totalorder %s27, 0
      %p189 = por %p187, %p188
      %p190 = scmp.ne.s32.totalorder %s178, %s179
      %p191 = scmp.eq.s32.totalorder %s28, 1
      %p192 = por %p190, %p191
      %p194 = scmp.ne.s32.totalorder %s179, %s193
      %p195 = scmp.eq.s32.totalorder %s28, 0
      %p196 = por %p194, %p195
      %s197 = ssub.s32 %s22, %s29
      %p198 = scmp.eq.s32.totalorder %s197, 0
      %s200 = sadd.s32 %s199, 1
      %s201 = scalar_select %p198, %s199, %s200
      %p204 = pneg %p198
      %p205 = scmp.eq.s32.totalorder %s22, 1
      %p206 = por %p204, %p205
      %p207 = scmp.ne.s32.totalorder %s199, %s202
      %p208 = scmp.eq.s32.totalorder %s22, 0
      %p209 = por %p207, %p208
      %p210 = scmp.ne.s32.totalorder %s199, %s202
      %p211 = scmp.eq.s32.totalorder %s27, 1
      %p212 = por %p210, %p211
      %p213 = scmp.ne.s32.totalorder %s202, %s203
      %p214 = scmp.eq.s32.totalorder %s27, 0
      %p215 = por %p213, %p214
      %p216 = scmp.ne.s32.totalorder %s202, %s203
      %p217 = scmp.eq.s32.totalorder %s28, 1
      %p218 = por %p216, %p217
      %p220 = scmp.ne.s32.totalorder %s203, %s219
      %p221 = scmp.eq.s32.totalorder %s28, 0
      %p222 = por %p220, %p221
      %s223 = ssub.s32 %s22, %s29
      %p224 = scmp.eq.s32.totalorder %s223, 0
      %s226 = sadd.s32 %s225, 1
      %s227 = scalar_select %p224, %s225, %s226
      %p230 = pneg %p224
      %p231 = scmp.eq.s32.totalorder %s22, 1
      %p232 = por %p230, %p231
      %p233 = scmp.ne.s32.totalorder %s225, %s228
      %p234 = scmp.eq.s32.totalorder %s22, 0
      %p235 = por %p233, %p234
      %p236 = scmp.ne.s32.totalorder %s225, %s228
      %p237 = scmp.eq.s32.totalorder %s27, 1
      %p238 = por %p236, %p237
      %p239 = scmp.ne.s32.totalorder %s228, %s229
      %p240 = scmp.eq.s32.totalorder %s27, 0
      %p241 = por %p239, %p240
      %p242 = scmp.ne.s32.totalorder %s228, %s229
      %p243 = scmp.eq.s32.totalorder %s28, 1
      %p244 = por %p242, %p243
      %p246 = scmp.ne.s32.totalorder %s229, %s245
      %p247 = scmp.eq.s32.totalorder %s28, 0
      %p248 = por %p246, %p247
      %p249 = scmp.le.s32.totalorder 1, %s22
      %p250 = scmp.lt.s32.totalorder %s22, 3
      %p251 = pnand %p249, %p250
      %p252 = pneg %p251
      // Predicated region
      $region9: #{mass_decoder_layer.1} parent=5 // pred_check
        _
      $region10: #{mass_decoder_layer.1} parent=5 // pred_check_branch
        %254 = sbr.rel (%p251) target = $region12
      $region11: #{mass_decoder_layer.1} parent=5 // pred_region
        %s255 = ssub.s32 %s22, 1
        // Predicated region
        $region13: #{mass_decoder_layer.1} parent=11 // pred_check
          %p256 = pneg %p147
        $region14: #{mass_decoder_layer.1} parent=11 // pred_check_branch
          %258 = sbr.rel (%p256) target = $region16
        $region15: #{mass_decoder_layer.1} parent=11 // pred_region
          _
        $region16: #{mass_decoder_layer.1} parent=11 // pred_fallthru
          _
        // Predicated region
        $region17: #{mass_decoder_layer.1} parent=11 // pred_check
          %p259 = pneg %p168
        $region18: #{mass_decoder_layer.1} parent=11 // pred_check_branch
          %261 = sbr.rel (%p259) target = $region20
        $region19: #{mass_decoder_layer.1} parent=11 // pred_region
          _
        $region20: #{mass_decoder_layer.1} parent=11 // pred_fallthru
          _
        // Predicated region
        $region21: #{mass_decoder_layer.1} parent=11 // pred_check
          %p262 = pneg %p189
        $region22: #{mass_decoder_layer.1} parent=11 // pred_check_branch
          %264 = sbr.rel (%p262) target = $region24
        $region23: #{mass_decoder_layer.1} parent=11 // pred_region
          %s266 = ssub.s32 256, 256
          %267 = vsyncadd [#allocation8], %s266
          %s268 = sshll.u32 [#allocation7], 4
          %s269 = int_to_ptr.vmem [resolvable:$true] %s268
          %274 = dma.hbm_to_vmem [thread:$0]  %s6, 256, %s269, [#allocation8], 128, 128, 8
        $region24: #{mass_decoder_layer.1} parent=11 // pred_fallthru
          _
      $region12: #{mass_decoder_layer.1} parent=5 // pred_fallthru
        _
      %p275 = scmp.lt.s32.totalorder %s22, 2
      // Predicated region
      $region25: #{mass_decoder_layer.1} parent=5 // pred_check
        %p276 = pneg %p275
      $region26: #{mass_decoder_layer.1} parent=5 // pred_check_branch
        %278 = sbr.rel (%p276) target = $region28
      $region27: #{mass_decoder_layer.1} parent=5 // pred_region
        // Predicated region
        $region29: #{mass_decoder_layer.1} parent=27 // pred_check
          %p279 = pneg %p42
        $region30: #{mass_decoder_layer.1} parent=27 // pred_check_branch
          %281 = sbr.rel (%p279) target = $region32
        $region31: #{mass_decoder_layer.1} parent=27 // pred_region
          %p282 = scmp.lt.s32.totalorder %s22, 1
          %s283 = scalar_select %p282, %s22, 1
          %s284 = smul.addr %s283, 8
          %s285 = scalar_lea.vmem %s0, %s284
        $region32: #{mass_decoder_layer.1} parent=27 // pred_fallthru
          _
        // Predicated region
        $region33: #{mass_decoder_layer.1} parent=27 // pred_check
          %p286 = pneg %p68
        $region34: #{mass_decoder_layer.1} parent=27 // pred_check_branch
          %288 = sbr.rel (%p286) target = $region36
        $region35: #{mass_decoder_layer.1} parent=27 // pred_region
          %s289 = sand.u32 %s58, 1
          %s290 = scalar_lea.sflag [#allocation3], %s289
          %s291 = sand.u32 %s58, 1
          %s292 = smul.addr %s291, 8
          %s293 = scalar_lea.vmem [#allocation2], %s292
          %s295 = ssub.s32 128, 128
          %296 = vsyncadd %s290, %s295
          %s297 = smul.addr %s22, 128
          %s298 = scalar_lea.hbm %s1, %s297
          %s300 = sshll.u32 %s293, 4
          %s301 = int_to_ptr.vmem [resolvable:$true] %s300
          %303 = dma.hbm_to_vmem [thread:$0]  %s298, 128, %s301, %s290
        $region36: #{mass_decoder_layer.1} parent=27 // pred_fallthru
          _
        // Predicated region
        $region37: #{mass_decoder_layer.1} parent=27 // pred_check
          %p304 = pneg %p94
        $region38: #{mass_decoder_layer.1} parent=27 // pred_check_branch
          %306 = sbr.rel (%p304) target = $region40
        $region39: #{mass_decoder_layer.1} parent=27 // pred_region
          %s307 = sand.u32 %s22, 1
          %s308 = scalar_lea.sflag [#allocation5], %s307
          %s309 = sand.u32 %s84, 1
          %s310 = smul.addr %s309, 8
          %s311 = scalar_lea.vmem [#allocation4], %s310
          %s313 = ssub.s32 128, 128
          %314 = vsyncadd %s308, %s313
          %s315 = smul.addr %s22, 128
          %s316 = scalar_lea.hbm %s2, %s315
          %s318 = sshll.u32 %s311, 4
          %s319 = int_to_ptr.vmem [resolvable:$true] %s318
          %321 = dma.hbm_to_vmem [thread:$0]  %s316, 128, %s319, %s308
        $region40: #{mass_decoder_layer.1} parent=27 // pred_fallthru
          _
        // Predicated region
        $region41: #{mass_decoder_layer.1} parent=27 // pred_check
          %p322 = pneg %p120
        $region42: #{mass_decoder_layer.1} parent=27 // pred_check_branch
          %324 = sbr.rel (%p322) target = $region44
        $region43: #{mass_decoder_layer.1} parent=27 // pred_region
          %s325 = sand.u32 %s22, 1
          %s326 = scalar_lea.sflag [#allocation5], %s325
          %s327 = sand.u32 %s110, 1
          %s328 = smul.addr %s327, 8
          %s329 = scalar_lea.vmem [#allocation6], %s328
          %s331 = ssub.s32 128, 128
          %332 = vsyncadd %s326, %s331
          %s333 = smul.addr %s22, 128
          %s334 = scalar_lea.hbm %s3, %s333
          %s336 = sshll.u32 %s329, 4
          %s337 = int_to_ptr.vmem [resolvable:$true] %s336
          %339 = dma.hbm_to_vmem [thread:$0]  %s334, 128, %s337, %s326
        $region44: #{mass_decoder_layer.1} parent=27 // pred_fallthru
          _
      $region28: #{mass_decoder_layer.1} parent=5 // pred_fallthru
        _
      %p340 = scmp.le.s32.totalorder 1, %s22
      %p341 = scmp.lt.s32.totalorder %s22, 3
      %p342 = pnand %p340, %p341
      %p343 = pneg %p342
      // Predicated region
      $region45: #{mass_decoder_layer.1} parent=5 // pred_check
        _
      $region46: #{mass_decoder_layer.1} parent=5 // pred_check_branch
        %345 = sbr.rel (%p342) target = $region48
      $region47: #{mass_decoder_layer.1} parent=5 // pred_region
        %s346 = ssub.s32 %s22, 1
        %s347 = sand.u32 %s61, 1
        %s348 = scalar_lea.sflag [#allocation3], %s347
        %s349 = sand.u32 %s61, 1
        %s350 = smul.addr %s349, 8
        %s351 = scalar_lea.vmem [#allocation2], %s350
        // Predicated region
        $region49: #{mass_decoder_layer.1} parent=47 // pred_check
          %p352 = pneg %p74
        $region50: #{mass_decoder_layer.1} parent=47 // pred_check_branch
          %354 = sbr.rel (%p352) target = $region52
        $region51: #{mass_decoder_layer.1} parent=47 // pred_region
          %355 = dma.done %s348, 128
        $region52: #{mass_decoder_layer.1} parent=47 // pred_fallthru
          _
        %s356 = sand.u32 %s27, 1
        %s357 = scalar_lea.sflag [#allocation5], %s356
        %s358 = sand.u32 %s87, 1
        %s359 = smul.addr %s358, 8
        %s360 = scalar_lea.vmem [#allocation4], %s359
        // Predicated region
        $region53: #{mass_decoder_layer.1} parent=47 // pred_check
          %p361 = pneg %p100
        $region54: #{mass_decoder_layer.1} parent=47 // pred_check_branch
          %363 = sbr.rel (%p361) target = $region56
        $region55: #{mass_decoder_layer.1} parent=47 // pred_region
          %364 = dma.done %s357, 128
        $region56: #{mass_decoder_layer.1} parent=47 // pred_fallthru
          _
        %s365 = sand.u32 %s27, 1
        %s366 = scalar_lea.sflag [#allocation5], %s365
        %s367 = sand.u32 %s113, 1
        %s368 = smul.addr %s367, 8
        %s369 = scalar_lea.vmem [#allocation6], %s368
        // Predicated region
        $region57: #{mass_decoder_layer.1} parent=47 // pred_check
          %p370 = pneg %p126
        $region58: #{mass_decoder_layer.1} parent=47 // pred_check_branch
          %372 = sbr.rel (%p370) target = $region60
        $region59: #{mass_decoder_layer.1} parent=47 // pred_region
          %373 = dma.done %s366, 128
        $region60: #{mass_decoder_layer.1} parent=47 // pred_fallthru
          _
        // Predicated region
        $region61: #{mass_decoder_layer.1} parent=47 // pred_check
          %p374 = pneg %p189
        $region62: #{mass_decoder_layer.1} parent=47 // pred_check_branch
          %376 = sbr.rel (%p374) target = $region64
        $region63: #{mass_decoder_layer.1} parent=47 // pred_region
          %377 = dma.done [#allocation8], 256
        $region64: #{mass_decoder_layer.1} parent=47 // pred_fallthru
          _
        %p378 = scmp.lt.s32.totalorder %s27, 1
        %s379 = scalar_select %p378, %s27, 1
        %s380 = smul.addr %s379, 8
        %s381 = scalar_lea.vmem %s0, %s380
        %p382 = pneg %p48
        %p383 = pneg %p45
        %s384 = sand.u32 %s61, 1
        %s385 = scalar_lea.sflag [#allocation3], %s384
        %s386 = sand.u32 %s61, 1
        %s387 = smul.addr %s386, 8
        %s388 = scalar_lea.vmem [#allocation2], %s387
        %p389 = pneg %p74
        %p390 = pneg %p71
        %s391 = sand.u32 %s27, 1
        %s392 = scalar_lea.sflag [#allocation5], %s391
        %s393 = sand.u32 %s87, 1
        %s394 = smul.addr %s393, 8
        %s395 = scalar_lea.vmem [#allocation4], %s394
        %p396 = pneg %p100
        %p397 = pneg %p97
        %s398 = sand.u32 %s27, 1
        %s399 = scalar_lea.sflag [#allocation5], %s398
        %s400 = sand.u32 %s113, 1
        %s401 = smul.addr %s400, 8
        %s402 = scalar_lea.vmem [#allocation6], %s401
        %p403 = pneg %p126
        %p404 = pneg %p123
        %p405 = pneg %p147
        %p406 = pneg %p144
        %p407 = pneg %p168
        %p408 = pneg %p165
        %p409 = pneg %p189
        %p410 = pneg %p186
        %p411 = pneg %p215
        %p412 = pneg %p212
        %p413 = scmp.lt.s32.totalorder %s27, 1
        %s414 = scalar_select %p413, %s27, 1
        %s415 = smul.addr %s414, 8
        %s416 = scalar_lea.vmem %s7, %s415
        %p417 = pneg %p241
        %p418 = pneg %p238
        %p419 = scmp.lt.s32.totalorder %s27, 1
        %s420 = scalar_select %p419, %s27, 1
        %s421 = smul.addr %s420, 8
        %s422 = scalar_lea.vmem %s8, %s421
        %p423 = scmp.lt.s32.totalorder %s27, 1
        %s424 = scalar_select %p423, %s27, 1
        %s425 = smul.addr %s424, 8
        %s426 = scalar_lea.vmem %s0, %s425
        %p427 = scmp.lt.s32.totalorder %s27, 1
        %s428 = scalar_select %p427, %s27, 1
        %s429 = smul.addr %s428, 8
        %s430 = scalar_lea.vmem %s7, %s429
        %p431 = scmp.lt.s32.totalorder %s27, 1
        %s432 = scalar_select %p431, %s27, 1
        %s433 = smul.addr %s432, 8
        %s434 = scalar_lea.vmem %s8, %s433
        %v435 = vld [vmem:[%s426] sm:$0xff]
        %v436 = vld [vmem:[%s360] sm:$0xff]
        %v437 = vld [vmem:[%s351] sm:$0xff]
        %v438 = vld [vmem:[%s369] sm:$0xff]
        %v439 = vld [vmem:[%s4] sm:$0xff]
        %v440 = vld [vmem:[%s4 + $0x8] sm:$0xff]
        %v441 = vld [vmem:[%s4 + $0x10] sm:$0xff]
        %v442 = vld [vmem:[%s4 + $0x18] sm:$0xff]
        %v443 = vld [vmem:[%s4 + $0x20] sm:$0xff]
        %v444 = vld [vmem:[%s4 + $0x28] sm:$0xff]
        %v445 = vld [vmem:[%s4 + $0x30] sm:$0xff]
        %v446 = vld [vmem:[%s4 + $0x38] sm:$0xff]
        %v447 = vld [vmem:[%s4 + $0x40] sm:$0xff]
        %v448 = vld [vmem:[%s4 + $0x48] sm:$0xff]
        %v449 = vld [vmem:[%s4 + $0x50] sm:$0xff]
        %v450 = vld [vmem:[%s4 + $0x58] sm:$0xff]
        %v451 = vld [vmem:[%s5] sm:$0xff]
        %v452 = vld [vmem:[%s5 + $0x8] sm:$0xff]
        %v453 = vld [vmem:[%s5 + $0x10] sm:$0xff]
        %v454 = vld [vmem:[%s5 + $0x18] sm:$0xff]
        %v455 = vld [vmem:[%s5 + $0x20] sm:$0xff]
        %v456 = vld [vmem:[%s5 + $0x28] sm:$0xff]
        %v457 = vld [vmem:[%s5 + $0x30] sm:$0xff]
        %v458 = vld [vmem:[%s5 + $0x38] sm:$0xff]
        %v459 = vld [vmem:[#allocation7] sm:$0x1]
        %v460 = vlaneseq
        %v461 = vshrl.u32 %v460, 7
        %v462 = vsub.s32 0, %v461
        %v463 = vrot.slane %v459, %v462
        %vm464 = vcmask 261120
        %v466 = vsel %vm464, %v435, 0
        %468 = vmatprep.subr.mxu0 0.0
        %469 = vmatpush1.msra.mxu0 %v439
        %470 = vmatprep.subr.mxu0 0.0
        %471 = vmatpush1.msra.mxu0 %v442
        %472 = vmatprep.subr.mxu0 0.0
        %473 = vmatpush1.msra.mxu0 %v445
        %474 = vmatprep.subr.mxu0 0.0
        %475 = vmatpush1.msra.mxu0 %v448
        %476 = vmatprep.subr.mxu0 0.0
        %477 = vmatpush1.msra.mxu0 0.0
        %478 = vmatprep.subr.mxu0 0.0
        %479 = vmatpush1.msra.mxu0 0.0
        %480 = vmatprep.subr.mxu0 0.0
        %481 = vmatpush1.msra.mxu0 0.0
        %482 = vmatprep.subr.mxu0 0.0
        %483 = vmatpush1.msra.mxu0 0.0
        %484 = vmatprep.subr.mxu0 0.0
        %485 = vmatpush1.msra.mxu0 0.0
        %486 = vmatprep.subr.mxu0 0.0
        %487 = vmatpush1.msra.mxu0 0.0
        %488 = vmatprep.subr.mxu0 0.0
        %489 = vmatpush1.msra.mxu0 0.0
        %490 = vmatprep.subr.mxu0 0.0
        %491 = vmatpush1.msra.mxu0 0.0
        %492 = vmatprep.subr.mxu0 0.0
        %493 = vmatpush1.msra.mxu0 0.0
        %494 = vmatprep.subr.mxu0 0.0
        %495 = vmatpush1.msra.mxu0 0.0
        %496 = vmatprep.subr.mxu0 0.0
        %497 = vmatpush1.msra.mxu0 0.0
        %498 = vmatprep.subr.mxu0 0.0
        %499 = vmatpush1.msra.mxu0 0.0
        %500 = vmatprep.subr.mxu0 0.0
        %501 = vmatpush1.msra.mxu0 0.0
        %502 = vmatprep.subr.mxu0 0.0
        %503 = vmatpush1.msra.mxu0 0.0
        %504 = vmatprep.subr.mxu0 0.0
        %505 = vmatpush1.msra.mxu0 0.0
        %506 = vmatprep.subr.mxu0 0.0
        %507 = vmatpush1.msra.mxu0 0.0
        %508 = vmatprep.subr.mxu0 0.0
        %509 = vmatpush1.msra.mxu0 0.0
        %510 = vmatprep.subr.mxu0 0.0
        %511 = vmatpush1.msra.mxu0 0.0
        %512 = vmatprep.subr.mxu0 0.0
        %513 = vmatpush1.msra.mxu0 0.0
        %514 = vmatprep.subr.mxu0 0.0
        %515 = vmatpush1.msra.mxu0 0.0
        %516 = vmatprep.subr.mxu0 0.0
        %517 = vmatpush1.msra.mxu0 0.0
        %518 = vmatprep.subr.mxu0 0.0
        %519 = vmatpush1.msra.mxu0 0.0
        %520 = vmatprep.subr.mxu0 0.0
        %521 = vmatpush1.msra.mxu0 0.0
        %522 = vmatprep.subr.mxu0 0.0
        %523 = vmatpush1.msra.mxu0 0.0
        %524 = vmatprep.subr.mxu0 0.0
        %525 = vmatpush1.msra.mxu0 0.0
        %526 = vmatprep.subr.mxu0 0.0
        %527 = vmatpush1.msra.mxu0 0.0
        %528 = vmatprep.subr.mxu0 0.0
        %529 = vmatpush1.msra.mxu0 0.0
        %530 = vmatprep.subr.mxu0 0.0
        %531 = vmatpush1.msra.mxu0 0.0
        %532 = vmatprep.mubr.f32.mxu0 0.0
        %533 = vmatmul.mubr.f32.gmra.mrb[0].mxu0 %v466
        %v534 = vpop.f32.mrb[0].mxu0
        %v535 = vadd.f32 %v463, %v534
        %v536 = vpop.f32.mrb[0].mxu0
        %537 = vdwg.mxu0
        %v538 = vmul.f32 %v535, 0.35355338
        %540 = vrot.lane.b32.xlu0 %v535, 96
        %v541 = vpop.permute.xlu0 %540
        %vm542 = vcmask 64512
        %v544 = vsel %vm542, %v538, 0
        %v546 = vsel %vm542, %v541, 0
        %548 = vmatprep.subr.mxu0 0.0
        %549 = vmatpush1.xpose.msra.mxu0 %v546
        %550 = vmatprep.subr.mxu0 0.0
        %551 = vmatpush1.xpose.msra.mxu0 0.0
        %552 = vmatprep.subr.mxu0 0.0
        %553 = vmatpush1.xpose.msra.mxu0 0.0
        %554 = vmatprep.subr.mxu0 0.0
        %555 = vmatpush1.xpose.msra.mxu0 0.0
        %556 = vmatprep.subr.mxu0 0.0
        %557 = vmatpush1.xpose.msra.mxu0 0.0
        %558 = vmatprep.subr.mxu0 0.0
        %559 = vmatpush1.xpose.msra.mxu0 0.0
        %560 = vmatprep.subr.mxu0 0.0
        %561 = vmatpush1.xpose.msra.mxu0 0.0
        %562 = vmatprep.subr.mxu0 0.0
        %563 = vmatpush1.xpose.msra.mxu0 0.0
        %564 = vmatprep.subr.mxu0 0.0
        %565 = vmatpush1.xpose.msra.mxu0 0.0
        %566 = vmatprep.subr.mxu0 0.0
        %567 = vmatpush1.xpose.msra.mxu0 0.0
        %568 = vmatprep.subr.mxu0 0.0
        %569 = vmatpush1.xpose.msra.mxu0 0.0
        %570 = vmatprep.subr.mxu0 0.0
        %571 = vmatpush1.xpose.msra.mxu0 0.0
        %572 = vmatprep.subr.mxu0 0.0
        %573 = vmatpush1.xpose.msra.mxu0 0.0
        %574 = vmatprep.subr.mxu0 0.0
        %575 = vmatpush1.xpose.msra.mxu0 0.0
        %576 = vmatprep.subr.mxu0 0.0
        %577 = vmatpush1.xpose.msra.mxu0 0.0
        %578 = vmatprep.subr.mxu0 0.0
        %579 = vmatpush1.xpose.msra.mxu0 0.0
        %580 = vmatprep.subr.mxu0 0.0
        %581 = vmatpush1.xpose.msra.mxu0 0.0
        %582 = vmatprep.subr.mxu0 0.0
        %583 = vmatpush1.xpose.msra.mxu0 0.0
        %584 = vmatprep.subr.mxu0 0.0
        %585 = vmatpush1.xpose.msra.mxu0 0.0
        %586 = vmatprep.subr.mxu0 0.0
        %587 = vmatpush1.xpose.msra.mxu0 0.0
        %588 = vmatprep.subr.mxu0 0.0
        %589 = vmatpush1.xpose.msra.mxu0 0.0
        %590 = vmatprep.subr.mxu0 0.0
        %591 = vmatpush1.xpose.msra.mxu0 0.0
        %592 = vmatprep.subr.mxu0 0.0
        %593 = vmatpush1.xpose.msra.mxu0 0.0
        %594 = vmatprep.subr.mxu0 0.0
        %595 = vmatpush1.xpose.msra.mxu0 0.0
        %596 = vmatprep.subr.mxu0 0.0
        %597 = vmatpush1.xpose.msra.mxu0 0.0
        %598 = vmatprep.subr.mxu0 0.0
        %599 = vmatpush1.xpose.msra.mxu0 0.0
        %600 = vmatprep.subr.mxu0 0.0
        %601 = vmatpush1.xpose.msra.mxu0 0.0
        %602 = vmatprep.subr.mxu0 0.0
        %603 = vmatpush1.xpose.msra.mxu0 0.0
        %604 = vmatprep.subr.mxu0 0.0
        %605 = vmatpush1.xpose.msra.mxu0 0.0
        %606 = vmatprep.subr.mxu0 0.0
        %607 = vmatpush1.xpose.msra.mxu0 0.0
        %608 = vmatprep.subr.mxu0 0.0
        %609 = vmatpush1.xpose.msra.mxu0 0.0
        %610 = vmatprep.subr.mxu0 0.0
        %611 = vmatpush1.xpose.msra.mxu0 0.0
        %612 = vmatprep.mubr.f32.mxu0 0.0
        %613 = vmatmul.mubr.f32.gmra.mrb[0].mxu0 %v544
        %v614 = vpop.f32.mrb[0].mxu0
        %v615 = vadd.f32 %v437, %v614
        %v616 = vpop.f32.mrb[0].mxu0
        %617 = vdwg.mxu0
        %v618 = vsel %vm542, %v615, -inf
        %619 = vmax.xlane.f32.xlu0 %v618
        %v620 = vpop.xlane.xlu0 %619
        %v621 = vsub.f32 %v615, %v620
        %v622 = vmul.f32 %v621, 1.442695
        %v623 = vpow.pop %v622
        %v624 = vsel %vm542, %v623, 0.0
        %625 = vadd.xlane.f32.xlu0 %v624
        %v626 = vpop.xlane.xlu0 %625
        %v627 = vrcp.pop %v626
        %v628 = vmul.f32 %v623, %v627
        %629 = vrot.lane.b32.xlu0 %v535, 64
        %v630 = vpop.permute.xlu0 %629
        %v633 = vsel %vm542, %v628, 0
        %635 = vmatprep.subr.mxu0 0.0
        %636 = vmatpush1.msra.mxu0 %v630
        %637 = vmatprep.subr.mxu0 0.0
        %638 = vmatpush1.msra.mxu0 0.0
        %639 = vmatprep.subr.mxu0 0.0
        %640 = vmatpush1.msra.mxu0 0.0
        %641 = vmatprep.subr.mxu0 0.0
        %642 = vmatpush1.msra.mxu0 0.0
        %643 = vmatprep.subr.mxu0 0.0
        %644 = vmatpush1.msra.mxu0 0.0
        %645 = vmatprep.subr.mxu0 0.0
        %646 = vmatpush1.msra.mxu0 0.0
        %647 = vmatprep.subr.mxu0 0.0
        %648 = vmatpush1.msra.mxu0 0.0
        %649 = vmatprep.subr.mxu0 0.0
        %650 = vmatpush1.msra.mxu0 0.0
        %651 = vmatprep.subr.mxu0 0.0
        %652 = vmatpush1.msra.mxu0 0.0
        %653 = vmatprep.subr.mxu0 0.0
        %654 = vmatpush1.msra.mxu0 0.0
        %655 = vmatprep.subr.mxu0 0.0
        %656 = vmatpush1.msra.mxu0 0.0
        %657 = vmatprep.subr.mxu0 0.0
        %658 = vmatpush1.msra.mxu0 0.0
        %659 = vmatprep.subr.mxu0 0.0
        %660 = vmatpush1.msra.mxu0 0.0
        %661 = vmatprep.subr.mxu0 0.0
        %662 = vmatpush1.msra.mxu0 0.0
        %663 = vmatprep.subr.mxu0 0.0
        %664 = vmatpush1.msra.mxu0 0.0
        %665 = vmatprep.subr.mxu0 0.0
        %666 = vmatpush1.msra.mxu0 0.0
        %667 = vmatprep.subr.mxu0 0.0
        %668 = vmatpush1.msra.mxu0 0.0
        %669 = vmatprep.subr.mxu0 0.0
        %670 = vmatpush1.msra.mxu0 0.0
        %671 = vmatprep.subr.mxu0 0.0
        %672 = vmatpush1.msra.mxu0 0.0
        %673 = vmatprep.subr.mxu0 0.0
        %674 = vmatpush1.msra.mxu0 0.0
        %675 = vmatprep.subr.mxu0 0.0
        %676 = vmatpush1.msra.mxu0 0.0
        %677 = vmatprep.subr.mxu0 0.0
        %678 = vmatpush1.msra.mxu0 0.0
        %679 = vmatprep.subr.mxu0 0.0
        %680 = vmatpush1.msra.mxu0 0.0
        %681 = vmatprep.subr.mxu0 0.0
        %682 = vmatpush1.msra.mxu0 0.0
        %683 = vmatprep.subr.mxu0 0.0
        %684 = vmatpush1.msra.mxu0 0.0
        %685 = vmatprep.subr.mxu0 0.0
        %686 = vmatpush1.msra.mxu0 0.0
        %687 = vmatprep.subr.mxu0 0.0
        %688 = vmatpush1.msra.mxu0 0.0
        %689 = vmatprep.subr.mxu0 0.0
        %690 = vmatpush1.msra.mxu0 0.0
        %691 = vmatprep.subr.mxu0 0.0
        %692 = vmatpush1.msra.mxu0 0.0
        %693 = vmatprep.subr.mxu0 0.0
        %694 = vmatpush1.msra.mxu0 0.0
        %695 = vmatprep.subr.mxu0 0.0
        %696 = vmatpush1.msra.mxu0 0.0
        %697 = vmatprep.subr.mxu0 0.0
        %698 = vmatpush1.msra.mxu0 0.0
        %699 = vmatprep.mubr.f32.mxu0 0.0
        %700 = vmatmul.mubr.f32.gmra.mrb[0].mxu0 %v633
        %v701 = vpop.f32.mrb[0].mxu0
        %v702 = vadd.f32 0.0, %v701
        %v703 = vpop.f32.mrb[0].mxu0
        %704 = vdwg.mxu0
        %705 = vrot.lane.b32.xlu0 %v538, 120
        %v706 = vpop.permute.xlu0 %705
        %707 = vrot.lane.b32.xlu0 %v535, 88
        %v708 = vpop.permute.xlu0 %707
        %v709 = vsel %vm542, %v706, 0
        %v711 = vsel %vm542, %v708, 0
        %713 = vmatprep.subr.mxu0 0.0
        %714 = vmatpush1.xpose.msra.mxu0 %v711
        %715 = vmatprep.subr.mxu0 0.0
        %716 = vmatpush1.xpose.msra.mxu0 0.0
        %717 = vmatprep.subr.mxu0 0.0
        %718 = vmatpush1.xpose.msra.mxu0 0.0
        %719 = vmatprep.subr.mxu0 0.0
        %720 = vmatpush1.xpose.msra.mxu0 0.0
        %721 = vmatprep.subr.mxu0 0.0
        %722 = vmatpush1.xpose.msra.mxu0 0.0
        %723 = vmatprep.subr.mxu0 0.0
        %724 = vmatpush1.xpose.msra.mxu0 0.0
        %725 = vmatprep.subr.mxu0 0.0
        %726 = vmatpush1.xpose.msra.mxu0 0.0
        %727 = vmatprep.subr.mxu0 0.0
        %728 = vmatpush1.xpose.msra.mxu0 0.0
        %729 = vmatprep.subr.mxu0 0.0
        %730 = vmatpush1.xpose.msra.mxu0 0.0
        %731 = vmatprep.subr.mxu0 0.0
        %732 = vmatpush1.xpose.msra.mxu0 0.0
        %733 = vmatprep.subr.mxu0 0.0
        %734 = vmatpush1.xpose.msra.mxu0 0.0
        %735 = vmatprep.subr.mxu0 0.0
        %736 = vmatpush1.xpose.msra.mxu0 0.0
        %737 = vmatprep.subr.mxu0 0.0
        %738 = vmatpush1.xpose.msra.mxu0 0.0
        %739 = vmatprep.subr.mxu0 0.0
        %740 = vmatpush1.xpose.msra.mxu0 0.0
        %741 = vmatprep.subr.mxu0 0.0
        %742 = vmatpush1.xpose.msra.mxu0 0.0
        %743 = vmatprep.subr.mxu0 0.0
        %744 = vmatpush1.xpose.msra.mxu0 0.0
        %745 = vmatprep.subr.mxu0 0.0
        %746 = vmatpush1.xpose.msra.mxu0 0.0
        %747 = vmatprep.subr.mxu0 0.0
        %748 = vmatpush1.xpose.msra.mxu0 0.0
        %749 = vmatprep.subr.mxu0 0.0
        %750 = vmatpush1.xpose.msra.mxu0 0.0
        %751 = vmatprep.subr.mxu0 0.0
        %752 = vmatpush1.xpose.msra.mxu0 0.0
        %753 = vmatprep.subr.mxu0 0.0
        %754 = vmatpush1.xpose.msra.mxu0 0.0
        %755 = vmatprep.subr.mxu0 0.0
        %756 = vmatpush1.xpose.msra.mxu0 0.0
        %757 = vmatprep.subr.mxu0 0.0
        %758 = vmatpush1.xpose.msra.mxu0 0.0
        %759 = vmatprep.subr.mxu0 0.0
        %760 = vmatpush1.xpose.msra.mxu0 0.0
        %761 = vmatprep.subr.mxu0 0.0
        %762 = vmatpush1.xpose.msra.mxu0 0.0
        %763 = vmatprep.subr.mxu0 0.0
        %764 = vmatpush1.xpose.msra.mxu0 0.0
        %765 = vmatprep.subr.mxu0 0.0
        %766 = vmatpush1.xpose.msra.mxu0 0.0
        %767 = vmatprep.subr.mxu0 0.0
        %768 = vmatpush1.xpose.msra.mxu0 0.0
        %769 = vmatprep.subr.mxu0 0.0
        %770 = vmatpush1.xpose.msra.mxu0 0.0
        %771 = vmatprep.subr.mxu0 0.0
        %772 = vmatpush1.xpose.msra.mxu0 0.0
        %773 = vmatprep.subr.mxu0 0.0
        %774 = vmatpush1.xpose.msra.mxu0 0.0
        %775 = vmatprep.subr.mxu0 0.0
        %776 = vmatpush1.xpose.msra.mxu0 0.0
        %777 = vmatprep.mubr.f32.mxu0 0.0
        %778 = vmatmul.mubr.f32.gmra.mrb[0].mxu0 %v709
        %v779 = vpop.f32.mrb[0].mxu0
        %v780 = vadd.f32 %v437, %v779
        %v781 = vpop.f32.mrb[0].mxu0
        %782 = vdwg.mxu0
        %v783 = vsel %vm542, %v780, -inf
        %784 = vmax.xlane.f32.xlu0 %v783
        %v785 = vpop.xlane.xlu0 %784
        %v786 = vsub.f32 %v780, %v785
        %v787 = vmul.f32 %v786, 1.442695
        %v788 = vpow.pop %v787
        %v789 = vsel %vm542, %v788, 0.0
        %790 = vadd.xlane.f32.xlu0 %v789
        %v791 = vpop.xlane.xlu0 %790
        %v792 = vrcp.pop %v791
        %v793 = vmul.f32 %v788, %v792
        %794 = vrot.lane.b32.xlu0 %v535, 56
        %v795 = vpop.permute.xlu0 %794
        %v798 = vsel %vm542, %v793, 0
        %800 = vmatprep.subr.mxu0 0.0
        %801 = vmatpush1.msra.mxu0 %v795
        %802 = vmatprep.subr.mxu0 0.0
        %803 = vmatpush1.msra.mxu0 0.0
        %804 = vmatprep.subr.mxu0 0.0
        %805 = vmatpush1.msra.mxu0 0.0
        %806 = vmatprep.subr.mxu0 0.0
        %807 = vmatpush1.msra.mxu0 0.0
        %808 = vmatprep.subr.mxu0 0.0
        %809 = vmatpush1.msra.mxu0 0.0
        %810 = vmatprep.subr.mxu0 0.0
        %811 = vmatpush1.msra.mxu0 0.0
        %812 = vmatprep.subr.mxu0 0.0
        %813 = vmatpush1.msra.mxu0 0.0
        %814 = vmatprep.subr.mxu0 0.0
        %815 = vmatpush1.msra.mxu0 0.0
        %816 = vmatprep.subr.mxu0 0.0
        %817 = vmatpush1.msra.mxu0 0.0
        %818 = vmatprep.subr.mxu0 0.0
        %819 = vmatpush1.msra.mxu0 0.0
        %820 = vmatprep.subr.mxu0 0.0
        %821 = vmatpush1.msra.mxu0 0.0
        %822 = vmatprep.subr.mxu0 0.0
        %823 = vmatpush1.msra.mxu0 0.0
        %824 = vmatprep.subr.mxu0 0.0
        %825 = vmatpush1.msra.mxu0 0.0
        %826 = vmatprep.subr.mxu0 0.0
        %827 = vmatpush1.msra.mxu0 0.0
        %828 = vmatprep.subr.mxu0 0.0
        %829 = vmatpush1.msra.mxu0 0.0
        %830 = vmatprep.subr.mxu0 0.0
        %831 = vmatpush1.msra.mxu0 0.0
        %832 = vmatprep.subr.mxu0 0.0
        %833 = vmatpush1.msra.mxu0 0.0
        %834 = vmatprep.subr.mxu0 0.0
        %835 = vmatpush1.msra.mxu0 0.0
        %836 = vmatprep.subr.mxu0 0.0
        %837 = vmatpush1.msra.mxu0 0.0
        %838 = vmatprep.subr.mxu0 0.0
        %839 = vmatpush1.msra.mxu0 0.0
        %840 = vmatprep.subr.mxu0 0.0
        %841 = vmatpush1.msra.mxu0 0.0
        %842 = vmatprep.subr.mxu0 0.0
        %843 = vmatpush1.msra.mxu0 0.0
        %844 = vmatprep.subr.mxu0 0.0
        %845 = vmatpush1.msra.mxu0 0.0
        %846 = vmatprep.subr.mxu0 0.0
        %847 = vmatpush1.msra.mxu0 0.0
        %848 = vmatprep.subr.mxu0 0.0
        %849 = vmatpush1.msra.mxu0 0.0
        %850 = vmatprep.subr.mxu0 0.0
        %851 = vmatpush1.msra.mxu0 0.0
        %852 = vmatprep.subr.mxu0 0.0
        %853 = vmatpush1.msra.mxu0 0.0
        %854 = vmatprep.subr.mxu0 0.0
        %855 = vmatpush1.msra.mxu0 0.0
        %856 = vmatprep.subr.mxu0 0.0
        %857 = vmatpush1.msra.mxu0 0.0
        %858 = vmatprep.subr.mxu0 0.0
        %859 = vmatpush1.msra.mxu0 0.0
        %860 = vmatprep.subr.mxu0 0.0
        %861 = vmatpush1.msra.mxu0 0.0
        %862 = vmatprep.subr.mxu0 0.0
        %863 = vmatpush1.msra.mxu0 0.0
        %864 = vmatprep.mubr.f32.mxu0 0.0
        %865 = vmatmul.mubr.f32.gmra.mrb[0].mxu0 %v798
        %v866 = vpop.f32.mrb[0].mxu0
        %v867 = vadd.f32 0.0, %v866
        %v868 = vpop.f32.mrb[0].mxu0
        %869 = vdwg.mxu0
        %870 = vrot.lane.b32.xlu0 %v538, 112
        %v871 = vpop.permute.xlu0 %870
        %872 = vrot.lane.b32.xlu0 %v535, 80
        %v873 = vpop.permute.xlu0 %872
        %v874 = vsel %vm542, %v871, 0
        %v876 = vsel %vm542, %v873, 0
        %878 = vmatprep.subr.mxu0 0.0
        %879 = vmatpush1.xpose.msra.mxu0 %v876
        %880 = vmatprep.subr.mxu0 0.0
        %881 = vmatpush1.xpose.msra.mxu0 0.0
        %882 = vmatprep.subr.mxu0 0.0
        %883 = vmatpush1.xpose.msra.mxu0 0.0
        %884 = vmatprep.subr.mxu0 0.0
        %885 = vmatpush1.xpose.msra.mxu0 0.0
        %886 = vmatprep.subr.mxu0 0.0
        %887 = vmatpush1.xpose.msra.mxu0 0.0
        %888 = vmatprep.subr.mxu0 0.0
        %889 = vmatpush1.xpose.msra.mxu0 0.0
        %890 = vmatprep.subr.mxu0 0.0
        %891 = vmatpush1.xpose.msra.mxu0 0.0
        %892 = vmatprep.subr.mxu0 0.0
        %893 = vmatpush1.xpose.msra.mxu0 0.0
        %894 = vmatprep.subr.mxu0 0.0
        %895 = vmatpush1.xpose.msra.mxu0 0.0
        %896 = vmatprep.subr.mxu0 0.0
        %897 = vmatpush1.xpose.msra.mxu0 0.0
        %898 = vmatprep.subr.mxu0 0.0
        %899 = vmatpush1.xpose.msra.mxu0 0.0
        %900 = vmatprep.subr.mxu0 0.0
        %901 = vmatpush1.xpose.msra.mxu0 0.0
        %902 = vmatprep.subr.mxu0 0.0
        %903 = vmatpush1.xpose.msra.mxu0 0.0
        %904 = vmatprep.subr.mxu0 0.0
        %905 = vmatpush1.xpose.msra.mxu0 0.0
        %906 = vmatprep.subr.mxu0 0.0
        %907 = vmatpush1.xpose.msra.mxu0 0.0
        %908 = vmatprep.subr.mxu0 0.0
        %909 = vmatpush1.xpose.msra.mxu0 0.0
        %910 = vmatprep.subr.mxu0 0.0
        %911 = vmatpush1.xpose.msra.mxu0 0.0
        %912 = vmatprep.subr.mxu0 0.0
        %913 = vmatpush1.xpose.msra.mxu0 0.0
        %914 = vmatprep.subr.mxu0 0.0
        %915 = vmatpush1.xpose.msra.mxu0 0.0
        %916 = vmatprep.subr.mxu0 0.0
        %917 = vmatpush1.xpose.msra.mxu0 0.0
        %918 = vmatprep.subr.mxu0 0.0
        %919 = vmatpush1.xpose.msra.mxu0 0.0
        %920 = vmatprep.subr.mxu0 0.0
        %921 = vmatpush1.xpose.msra.mxu0 0.0
        %922 = vmatprep.subr.mxu0 0.0
        %923 = vmatpush1.xpose.msra.mxu0 0.0
        %924 = vmatprep.subr.mxu0 0.0
        %925 = vmatpush1.xpose.msra.mxu0 0.0
        %926 = vmatprep.subr.mxu0 0.0
        %927 = vmatpush1.xpose.msra.mxu0 0.0
        %928 = vmatprep.subr.mxu0 0.0
        %929 = vmatpush1.xpose.msra.mxu0 0.0
        %930 = vmatprep.subr.mxu0 0.0
        %931 = vmatpush1.xpose.msra.mxu0 0.0
        %932 = vmatprep.subr.mxu0 0.0
        %933 = vmatpush1.xpose.msra.mxu0 0.0
        %934 = vmatprep.subr.mxu0 0.0
        %935 = vmatpush1.xpose.msra.mxu0 0.0
        %936 = vmatprep.subr.mxu0 0.0
        %937 = vmatpush1.xpose.msra.mxu0 0.0
        %938 = vmatprep.subr.mxu0 0.0
        %939 = vmatpush1.xpose.msra.mxu0 0.0
        %940 = vmatprep.subr.mxu0 0.0
        %941 = vmatpush1.xpose.msra.mxu0 0.0
        %942 = vmatprep.mubr.f32.mxu0 0.0
        %943 = vmatmul.mubr.f32.gmra.mrb[0].mxu0 %v874
        %v944 = vpop.f32.mrb[0].mxu0
        %v945 = vadd.f32 %v437, %v944
        %v946 = vpop.f32.mrb[0].mxu0
        %947 = vdwg.mxu0
        %v948 = vsel %vm542, %v945, -inf
        %949 = vmax.xlane.f32.xlu0 %v948
        %v950 = vpop.xlane.xlu0 %949
        %v951 = vsub.f32 %v945, %v950
        %v952 = vmul.f32 %v951, 1.442695
        %v953 = vpow.pop %v952
        %v954 = vsel %vm542, %v953, 0.0
        %955 = vadd.xlane.f32.xlu0 %v954
        %v956 = vpop.xlane.xlu0 %955
        %v957 = vrcp.pop %v956
        %v958 = vmul.f32 %v953, %v957
        %959 = vrot.lane.b32.xlu0 %v535, 48
        %v960 = vpop.permute.xlu0 %959
        %v963 = vsel %vm542, %v958, 0
        %965 = vmatprep.subr.mxu0 0.0
        %966 = vmatpush1.msra.mxu0 %v960
        %967 = vmatprep.subr.mxu0 0.0
        %968 = vmatpush1.msra.mxu0 0.0
        %969 = vmatprep.subr.mxu0 0.0
        %970 = vmatpush1.msra.mxu0 0.0
        %971 = vmatprep.subr.mxu0 0.0
        %972 = vmatpush1.msra.mxu0 0.0
        %973 = vmatprep.subr.mxu0 0.0
        %974 = vmatpush1.msra.mxu0 0.0
        %975 = vmatprep.subr.mxu0 0.0
        %976 = vmatpush1.msra.mxu0 0.0
        %977 = vmatprep.subr.mxu0 0.0
        %978 = vmatpush1.msra.mxu0 0.0
        %979 = vmatprep.subr.mxu0 0.0
        %980 = vmatpush1.msra.mxu0 0.0
        %981 = vmatprep.subr.mxu0 0.0
        %982 = vmatpush1.msra.mxu0 0.0
        %983 = vmatprep.subr.mxu0 0.0
        %984 = vmatpush1.msra.mxu0 0.0
        %985 = vmatprep.subr.mxu0 0.0
        %986 = vmatpush1.msra.mxu0 0.0
        %987 = vmatprep.subr.mxu0 0.0
        %988 = vmatpush1.msra.mxu0 0.0
        %989 = vmatprep.subr.mxu0 0.0
        %990 = vmatpush1.msra.mxu0 0.0
        %991 = vmatprep.subr.mxu0 0.0
        %992 = vmatpush1.msra.mxu0 0.0
        %993 = vmatprep.subr.mxu0 0.0
        %994 = vmatpush1.msra.mxu0 0.0
        %995 = vmatprep.subr.mxu0 0.0
        %996 = vmatpush1.msra.mxu0 0.0
        %997 = vmatprep.subr.mxu0 0.0
        %998 = vmatpush1.msra.mxu0 0.0
        %999 = vmatprep.subr.mxu0 0.0
        %1000 = vmatpush1.msra.mxu0 0.0
        %1001 = vmatprep.subr.mxu0 0.0
        %1002 = vmatpush1.msra.mxu0 0.0
        %1003 = vmatprep.subr.mxu0 0.0
        %1004 = vmatpush1.msra.mxu0 0.0
        %1005 = vmatprep.subr.mxu0 0.0
        %1006 = vmatpush1.msra.mxu0 0.0
        %1007 = vmatprep.subr.mxu0 0.0
        %1008 = vmatpush1.msra.mxu0 0.0
        %1009 = vmatprep.subr.mxu0 0.0
        %1010 = vmatpush1.msra.mxu0 0.0
        %1011 = vmatprep.subr.mxu0 0.0
        %1012 = vmatpush1.msra.mxu0 0.0
        %1013 = vmatprep.subr.mxu0 0.0
        %1014 = vmatpush1.msra.mxu0 0.0
        %1015 = vmatprep.subr.mxu0 0.0
        %1016 = vmatpush1.msra.mxu0 0.0
        %1017 = vmatprep.subr.mxu0 0.0
        %1018 = vmatpush1.msra.mxu0 0.0
        %1019 = vmatprep.subr.mxu0 0.0
        %1020 = vmatpush1.msra.mxu0 0.0
        %1021 = vmatprep.subr.mxu0 0.0
        %1022 = vmatpush1.msra.mxu0 0.0
        %1023 = vmatprep.subr.mxu0 0.0
        %1024 = vmatpush1.msra.mxu0 0.0
        %1025 = vmatprep.subr.mxu0 0.0
        %1026 = vmatpush1.msra.mxu0 0.0
        %1027 = vmatprep.subr.mxu0 0.0
        %1028 = vmatpush1.msra.mxu0 0.0
        %1029 = vmatprep.mubr.f32.mxu0 0.0
        %1030 = vmatmul.mubr.f32.gmra.mrb[0].mxu0 %v963
        %v1031 = vpop.f32.mrb[0].mxu0
        %v1032 = vadd.f32 0.0, %v1031
        %v1033 = vpop.f32.mrb[0].mxu0
        %1034 = vdwg.mxu0
        %1035 = vrot.lane.b32.xlu0 %v538, 104
        %v1036 = vpop.permute.xlu0 %1035
        %1037 = vrot.lane.b32.xlu0 %v535, 72
        %v1038 = vpop.permute.xlu0 %1037
        %v1039 = vsel %vm542, %v1036, 0
        %v1041 = vsel %vm542, %v1038, 0
        %1043 = vmatprep.subr.mxu0 0.0
        %1044 = vmatpush1.xpose.msra.mxu0 %v1041
        %1045 = vmatprep.subr.mxu0 0.0
        %1046 = vmatpush1.xpose.msra.mxu0 0.0
        %1047 = vmatprep.subr.mxu0 0.0
        %1048 = vmatpush1.xpose.msra.mxu0 0.0
        %1049 = vmatprep.subr.mxu0 0.0
        %1050 = vmatpush1.xpose.msra.mxu0 0.0
        %1051 = vmatprep.subr.mxu0 0.0
        %1052 = vmatpush1.xpose.msra.mxu0 0.0
        %1053 = vmatprep.subr.mxu0 0.0
        %1054 = vmatpush1.xpose.msra.mxu0 0.0
        %1055 = vmatprep.subr.mxu0 0.0
        %1056 = vmatpush1.xpose.msra.mxu0 0.0
        %1057 = vmatprep.subr.mxu0 0.0
        %1058 = vmatpush1.xpose.msra.mxu0 0.0
        %1059 = vmatprep.subr.mxu0 0.0
        %1060 = vmatpush1.xpose.msra.mxu0 0.0
        %1061 = vmatprep.subr.mxu0 0.0
        %1062 = vmatpush1.xpose.msra.mxu0 0.0
        %1063 = vmatprep.subr.mxu0 0.0
        %1064 = vmatpush1.xpose.msra.mxu0 0.0
        %1065 = vmatprep.subr.mxu0 0.0
        %1066 = vmatpush1.xpose.msra.mxu0 0.0
        %1067 = vmatprep.subr.mxu0 0.0
        %1068 = vmatpush1.xpose.msra.mxu0 0.0
        %1069 = vmatprep.subr.mxu0 0.0
        %1070 = vmatpush1.xpose.msra.mxu0 0.0
        %1071 = vmatprep.subr.mxu0 0.0
        %1072 = vmatpush1.xpose.msra.mxu0 0.0
        %1073 = vmatprep.subr.mxu0 0.0
        %1074 = vmatpush1.xpose.msra.mxu0 0.0
        %1075 = vmatprep.subr.mxu0 0.0
        %1076 = vmatpush1.xpose.msra.mxu0 0.0
        %1077 = vmatprep.subr.mxu0 0.0
        %1078 = vmatpush1.xpose.msra.mxu0 0.0
        %1079 = vmatprep.subr.mxu0 0.0
        %1080 = vmatpush1.xpose.msra.mxu0 0.0
        %1081 = vmatprep.subr.mxu0 0.0
        %1082 = vmatpush1.xpose.msra.mxu0 0.0
        %1083 = vmatprep.subr.mxu0 0.0
        %1084 = vmatpush1.xpose.msra.mxu0 0.0
        %1085 = vmatprep.subr.mxu0 0.0
        %1086 = vmatpush1.xpose.msra.mxu0 0.0
        %1087 = vmatprep.subr.mxu0 0.0
        %1088 = vmatpush1.xpose.msra.mxu0 0.0
        %1089 = vmatprep.subr.mxu0 0.0
        %1090 = vmatpush1.xpose.msra.mxu0 0.0
        %1091 = vmatprep.subr.mxu0 0.0
        %1092 = vmatpush1.xpose.msra.mxu0 0.0
        %1093 = vmatprep.subr.mxu0 0.0
        %1094 = vmatpush1.xpose.msra.mxu0 0.0
        %1095 = vmatprep.subr.mxu0 0.0
        %1096 = vmatpush1.xpose.msra.mxu0 0.0
        %1097 = vmatprep.subr.mxu0 0.0
        %1098 = vmatpush1.xpose.msra.mxu0 0.0
        %1099 = vmatprep.subr.mxu0 0.0
        %1100 = vmatpush1.xpose.msra.mxu0 0.0
        %1101 = vmatprep.subr.mxu0 0.0
        %1102 = vmatpush1.xpose.msra.mxu0 0.0
        %1103 = vmatprep.subr.mxu0 0.0
        %1104 = vmatpush1.xpose.msra.mxu0 0.0
        %1105 = vmatprep.subr.mxu0 0.0
        %1106 = vmatpush1.xpose.msra.mxu0 0.0
        %1107 = vmatprep.mubr.f32.mxu0 0.0
        %1108 = vmatmul.mubr.f32.gmra.mrb[0].mxu0 %v1039
        %v1109 = vpop.f32.mrb[0].mxu0
        %v1110 = vadd.f32 %v437, %v1109
        %v1111 = vpop.f32.mrb[0].mxu0
        %1112 = vdwg.mxu0
        %v1113 = vsel %vm542, %v1110, -inf
        %1114 = vmax.xlane.f32.xlu0 %v1113
        %v1115 = vpop.xlane.xlu0 %1114
        %v1116 = vsub.f32 %v1110, %v1115
        %v1117 = vmul.f32 %v1116, 1.442695
        %v1118 = vpow.pop %v1117
        %v1119 = vsel %vm542, %v1118, 0.0
        %1120 = vadd.xlane.f32.xlu0 %v1119
        %v1121 = vpop.xlane.xlu0 %1120
        %v1122 = vrcp.pop %v1121
        %v1123 = vmul.f32 %v1118, %v1122
        %1124 = vrot.lane.b32.xlu0 %v535, 40
        %v1125 = vpop.permute.xlu0 %1124
        %v1128 = vsel %vm542, %v1123, 0
        %1130 = vmatprep.subr.mxu0 0.0
        %1131 = vmatpush1.msra.mxu0 %v1125
        %1132 = vmatprep.subr.mxu0 0.0
        %1133 = vmatpush1.msra.mxu0 0.0
        %1134 = vmatprep.subr.mxu0 0.0
        %1135 = vmatpush1.msra.mxu0 0.0
        %1136 = vmatprep.subr.mxu0 0.0
        %1137 = vmatpush1.msra.mxu0 0.0
        %1138 = vmatprep.subr.mxu0 0.0
        %1139 = vmatpush1.msra.mxu0 0.0
        %1140 = vmatprep.subr.mxu0 0.0
        %1141 = vmatpush1.msra.mxu0 0.0
        %1142 = vmatprep.subr.mxu0 0.0
        %1143 = vmatpush1.msra.mxu0 0.0
        %1144 = vmatprep.subr.mxu0 0.0
        %1145 = vmatpush1.msra.mxu0 0.0
        %1146 = vmatprep.subr.mxu0 0.0
        %1147 = vmatpush1.msra.mxu0 0.0
        %1148 = vmatprep.subr.mxu0 0.0
        %1149 = vmatpush1.msra.mxu0 0.0
        %1150 = vmatprep.subr.mxu0 0.0
        %1151 = vmatpush1.msra.mxu0 0.0
        %1152 = vmatprep.subr.mxu0 0.0
        %1153 = vmatpush1.msra.mxu0 0.0
        %1154 = vmatprep.subr.mxu0 0.0
        %1155 = vmatpush1.msra.mxu0 0.0
        %1156 = vmatprep.subr.mxu0 0.0
        %1157 = vmatpush1.msra.mxu0 0.0
        %1158 = vmatprep.subr.mxu0 0.0
        %1159 = vmatpush1.msra.mxu0 0.0
        %1160 = vmatprep.subr.mxu0 0.0
        %1161 = vmatpush1.msra.mxu0 0.0
        %1162 = vmatprep.subr.mxu0 0.0
        %1163 = vmatpush1.msra.mxu0 0.0
        %1164 = vmatprep.subr.mxu0 0.0
        %1165 = vmatpush1.msra.mxu0 0.0
        %1166 = vmatprep.subr.mxu0 0.0
        %1167 = vmatpush1.msra.mxu0 0.0
        %1168 = vmatprep.subr.mxu0 0.0
        %1169 = vmatpush1.msra.mxu0 0.0
        %1170 = vmatprep.subr.mxu0 0.0
        %1171 = vmatpush1.msra.mxu0 0.0
        %1172 = vmatprep.subr.mxu0 0.0
        %1173 = vmatpush1.msra.mxu0 0.0
        %1174 = vmatprep.subr.mxu0 0.0
        %1175 = vmatpush1.msra.mxu0 0.0
        %1176 = vmatprep.subr.mxu0 0.0
        %1177 = vmatpush1.msra.mxu0 0.0
        %1178 = vmatprep.subr.mxu0 0.0
        %1179 = vmatpush1.msra.mxu0 0.0
        %1180 = vmatprep.subr.mxu0 0.0
        %1181 = vmatpush1.msra.mxu0 0.0
        %1182 = vmatprep.subr.mxu0 0.0
        %1183 = vmatpush1.msra.mxu0 0.0
        %1184 = vmatprep.subr.mxu0 0.0
        %1185 = vmatpush1.msra.mxu0 0.0
        %1186 = vmatprep.subr.mxu0 0.0
        %1187 = vmatpush1.msra.mxu0 0.0
        %1188 = vmatprep.subr.mxu0 0.0
        %1189 = vmatpush1.msra.mxu0 0.0
        %1190 = vmatprep.subr.mxu0 0.0
        %1191 = vmatpush1.msra.mxu0 0.0
        %1192 = vmatprep.subr.mxu0 0.0
        %1193 = vmatpush1.msra.mxu0 0.0
        %1194 = vmatprep.mubr.f32.mxu0 0.0
        %1195 = vmatmul.mubr.f32.gmra.mrb[0].mxu0 %v1128
        %v1196 = vpop.f32.mrb[0].mxu0
        %v1197 = vadd.f32 0.0, %v1196
        %v1198 = vpop.f32.mrb[0].mxu0
        %1199 = vdwg.mxu0
        %1201 = vrot.lane.b32.xlu0 %v867, 8
        %v1202 = vpop.permute.xlu0 %1201
        %1205 = vrot.lane.b32.xlu0 %v1032, 16
        %v1206 = vpop.permute.xlu0 %1205
        %1209 = vrot.lane.b32.xlu0 %v1197, 24
        %v1210 = vpop.permute.xlu0 %1209
        %v1212 = vsel %vm542, %v702, %v1202
        %vm1213 = vcmask 130048
        %v1214 = vsel %vm1213, %v1212, %v1206
        %vm1215 = vcmask 195584
        %v1216 = vsel %vm1215, %v1214, %v1210
        %v1217 = vld [vmem:[#allocation7 + $0x1] sm:$0x1]
        %v1218 = vlaneseq
        %v1219 = vshrl.u32 %v1218, 7
        %v1220 = vsub.s32 0, %v1219
        %v1221 = vrot.slane %v1217, %v1220
        %1226 = vrot.lane.b32.xlu0 %v439, 32
        %v1227 = vpop.permute.xlu0 %1226
        %1228 = vrot.lane.b32.xlu0 %v442, 32
        %v1229 = vpop.permute.xlu0 %1228
        %1230 = vrot.lane.b32.xlu0 %v445, 32
        %v1231 = vpop.permute.xlu0 %1230
        %1232 = vrot.lane.b32.xlu0 %v448, 32
        %v1233 = vpop.permute.xlu0 %1232
        %v1239 = vsel %vm464, %v1216, 0
        %1241 = vmatprep.subr.mxu0 0.0
        %1242 = vmatpush1.msra.mxu0 %v1227
        %1243 = vmatprep.subr.mxu0 0.0
        %1244 = vmatpush1.msra.mxu0 %v1229
        %1245 = vmatprep.subr.mxu0 0.0
        %1246 = vmatpush1.msra.mxu0 %v1231
        %1247 = vmatprep.subr.mxu0 0.0
        %1248 = vmatpush1.msra.mxu0 %v1233
        %1249 = vmatprep.subr.mxu0 0.0
        %1250 = vmatpush1.msra.mxu0 0.0
        %1251 = vmatprep.subr.mxu0 0.0
        %1252 = vmatpush1.msra.mxu0 0.0
        %1253 = vmatprep.subr.mxu0 0.0
        %1254 = vmatpush1.msra.mxu0 0.0
        %1255 = vmatprep.subr.mxu0 0.0
        %1256 = vmatpush1.msra.mxu0 0.0
        %1257 = vmatprep.subr.mxu0 0.0
        %1258 = vmatpush1.msra.mxu0 0.0
        %1259 = vmatprep.subr.mxu0 0.0
        %1260 = vmatpush1.msra.mxu0 0.0
        %1261 = vmatprep.subr.mxu0 0.0
        %1262 = vmatpush1.msra.mxu0 0.0
        %1263 = vmatprep.subr.mxu0 0.0
        %1264 = vmatpush1.msra.mxu0 0.0
        %1265 = vmatprep.subr.mxu0 0.0
        %1266 = vmatpush1.msra.mxu0 0.0
        %1267 = vmatprep.subr.mxu0 0.0
        %1268 = vmatpush1.msra.mxu0 0.0
        %1269 = vmatprep.subr.mxu0 0.0
        %1270 = vmatpush1.msra.mxu0 0.0
        %1271 = vmatprep.subr.mxu0 0.0
        %1272 = vmatpush1.msra.mxu0 0.0
        %1273 = vmatprep.subr.mxu0 0.0
        %1274 = vmatpush1.msra.mxu0 0.0
        %1275 = vmatprep.subr.mxu0 0.0
        %1276 = vmatpush1.msra.mxu0 0.0
        %1277 = vmatprep.subr.mxu0 0.0
        %1278 = vmatpush1.msra.mxu0 0.0
        %1279 = vmatprep.subr.mxu0 0.0
        %1280 = vmatpush1.msra.mxu0 0.0
        %1281 = vmatprep.subr.mxu0 0.0
        %1282 = vmatpush1.msra.mxu0 0.0
        %1283 = vmatprep.subr.mxu0 0.0
        %1284 = vmatpush1.msra.mxu0 0.0
        %1285 = vmatprep.subr.mxu0 0.0
        %1286 = vmatpush1.msra.mxu0 0.0
        %1287 = vmatprep.subr.mxu0 0.0
        %1288 = vmatpush1.msra.mxu0 0.0
        %1289 = vmatprep.subr.mxu0 0.0
        %1290 = vmatpush1.msra.mxu0 0.0
        %1291 = vmatprep.subr.mxu0 0.0
        %1292 = vmatpush1.msra.mxu0 0.0
        %1293 = vmatprep.subr.mxu0 0.0
        %1294 = vmatpush1.msra.mxu0 0.0
        %1295 = vmatprep.subr.mxu0 0.0
        %1296 = vmatpush1.msra.mxu0 0.0
        %1297 = vmatprep.subr.mxu0 0.0
        %1298 = vmatpush1.msra.mxu0 0.0
        %1299 = vmatprep.subr.mxu0 0.0
        %1300 = vmatpush1.msra.mxu0 0.0
        %1301 = vmatprep.subr.mxu0 0.0
        %1302 = vmatpush1.msra.mxu0 0.0
        %1303 = vmatprep.subr.mxu0 0.0
        %1304 = vmatpush1.msra.mxu0 0.0
        %1305 = vmatprep.mubr.f32.mxu0 0.0
        %1306 = vmatmul.mubr.f32.gmra.mrb[0].mxu0 %v1239
        %v1307 = vpop.f32.mrb[0].mxu0
        %v1308 = vadd.f32 %v1221, %v1307
        %v1309 = vpop.f32.mrb[0].mxu0
        %1310 = vdwg.mxu0
        %v1311 = vadd.f32 %v435, %v1308
        %v1312 = vsel %vm464, %v1311, 0.0
        %1313 = vadd.xlane.f32.xlu0 %v1312
        %v1314 = vpop.xlane.xlu0 %1313
        %v1315 = vrcp.pop 32.0
        %v1316 = vmul.f32 %v1314, %v1315
        %v1317 = vsub.f32 %v1311, %v1316
        %v1318 = vmul.f32 %v1317, %v1317
        %v1319 = vsel %vm464, %v1318, 0.0
        %1320 = vadd.xlane.f32.xlu0 %v1319
        %v1321 = vpop.xlane.xlu0 %1320
        %v1322 = vmul.f32 %v1321, %v1315
        %v1323 = vadd.f32 %v1322, 1e-05
        %v1324 = vrsqrt.pop %v1323
        %v1325 = vmul.f32 %v1317, %v1324
        %v1326 = vld [vmem:[#allocation7 + $0x2] sm:$0x1]
        %v1327 = vlaneseq
        %v1328 = vshrl.u32 %v1327, 7
        %v1329 = vsub.s32 0, %v1328
        %v1330 = vrot.slane %v1326, %v1329
        %v1331 = vmul.f32 %v1325, %v1330
        %v1332 = vld [vmem:[#allocation7 + $0x3] sm:$0x1]
        %v1333 = vlaneseq
        %v1334 = vshrl.u32 %v1333, 7
        %v1335 = vsub.s32 0, %v1334
        %v1336 = vrot.slane %v1332, %v1335
        %v1337 = vadd.f32 %v1331, %v1336
        %v1338 = vld [vmem:[#allocation7 + $0x4] sm:$0x1]
        %v1339 = vlaneseq
        %v1340 = vshrl.u32 %v1339, 7
        %v1341 = vsub.s32 0, %v1340
        %v1342 = vrot.slane %v1338, %v1341
        %v1344 = vsel %vm464, %v1337, 0
        %1346 = vmatprep.subr.mxu0 0.0
        %1347 = vmatpush1.msra.mxu0 %v440
        %1348 = vmatprep.subr.mxu0 0.0
        %1349 = vmatpush1.msra.mxu0 %v443
        %1350 = vmatprep.subr.mxu0 0.0
        %1351 = vmatpush1.msra.mxu0 %v446
        %1352 = vmatprep.subr.mxu0 0.0
        %1353 = vmatpush1.msra.mxu0 %v449
        %1354 = vmatprep.subr.mxu0 0.0
        %1355 = vmatpush1.msra.mxu0 0.0
        %1356 = vmatprep.subr.mxu0 0.0
        %1357 = vmatpush1.msra.mxu0 0.0
        %1358 = vmatprep.subr.mxu0 0.0
        %1359 = vmatpush1.msra.mxu0 0.0
        %1360 = vmatprep.subr.mxu0 0.0
        %1361 = vmatpush1.msra.mxu0 0.0
        %1362 = vmatprep.subr.mxu0 0.0
        %1363 = vmatpush1.msra.mxu0 0.0
        %1364 = vmatprep.subr.mxu0 0.0
        %1365 = vmatpush1.msra.mxu0 0.0
        %1366 = vmatprep.subr.mxu0 0.0
        %1367 = vmatpush1.msra.mxu0 0.0
        %1368 = vmatprep.subr.mxu0 0.0
        %1369 = vmatpush1.msra.mxu0 0.0
        %1370 = vmatprep.subr.mxu0 0.0
        %1371 = vmatpush1.msra.mxu0 0.0
        %1372 = vmatprep.subr.mxu0 0.0
        %1373 = vmatpush1.msra.mxu0 0.0
        %1374 = vmatprep.subr.mxu0 0.0
        %1375 = vmatpush1.msra.mxu0 0.0
        %1376 = vmatprep.subr.mxu0 0.0
        %1377 = vmatpush1.msra.mxu0 0.0
        %1378 = vmatprep.subr.mxu0 0.0
        %1379 = vmatpush1.msra.mxu0 0.0
        %1380 = vmatprep.subr.mxu0 0.0
        %1381 = vmatpush1.msra.mxu0 0.0
        %1382 = vmatprep.subr.mxu0 0.0
        %1383 = vmatpush1.msra.mxu0 0.0
        %1384 = vmatprep.subr.mxu0 0.0
        %1385 = vmatpush1.msra.mxu0 0.0
        %1386 = vmatprep.subr.mxu0 0.0
        %1387 = vmatpush1.msra.mxu0 0.0
        %1388 = vmatprep.subr.mxu0 0.0
        %1389 = vmatpush1.msra.mxu0 0.0
        %1390 = vmatprep.subr.mxu0 0.0
        %1391 = vmatpush1.msra.mxu0 0.0
        %1392 = vmatprep.subr.mxu0 0.0
        %1393 = vmatpush1.msra.mxu0 0.0
        %1394 = vmatprep.subr.mxu0 0.0
        %1395 = vmatpush1.msra.mxu0 0.0
        %1396 = vmatprep.subr.mxu0 0.0
        %1397 = vmatpush1.msra.mxu0 0.0
        %1398 = vmatprep.subr.mxu0 0.0
        %1399 = vmatpush1.msra.mxu0 0.0
        %1400 = vmatprep.subr.mxu0 0.0
        %1401 = vmatpush1.msra.mxu0 0.0
        %1402 = vmatprep.subr.mxu0 0.0
        %1403 = vmatpush1.msra.mxu0 0.0
        %1404 = vmatprep.subr.mxu0 0.0
        %1405 = vmatpush1.msra.mxu0 0.0
        %1406 = vmatprep.subr.mxu0 0.0
        %1407 = vmatpush1.msra.mxu0 0.0
        %1408 = vmatprep.subr.mxu0 0.0
        %1409 = vmatpush1.msra.mxu0 0.0
        %1410 = vmatprep.mubr.f32.mxu0 0.0
        %1411 = vmatmul.mubr.f32.gmra.mrb[0].mxu0 %v1344
        %v1412 = vpop.f32.mrb[0].mxu0
        %v1413 = vadd.f32 %v1342, %v1412
        %v1414 = vpop.f32.mrb[0].mxu0
        %1415 = vdwg.mxu0
        %v1416 = vmul.f32 %v1413, 0.35355338
        %v1417 = vld [vmem:[#allocation7 + $0x5] sm:$0x1]
        %v1418 = vlaneseq
        %v1419 = vshrl.u32 %v1418, 7
        %v1420 = vsub.s32 0, %v1419
        %v1421 = vrot.slane %v1417, %v1420
        %1426 = vrot.lane.b32.xlu0 %v440, 96
        %v1427 = vpop.permute.xlu0 %1426
        %1428 = vrot.lane.b32.xlu0 %v443, 96
        %v1429 = vpop.permute.xlu0 %1428
        %1430 = vrot.lane.b32.xlu0 %v446, 96
        %v1431 = vpop.permute.xlu0 %1430
        %1432 = vrot.lane.b32.xlu0 %v449, 96
        %v1433 = vpop.permute.xlu0 %1432
        %v1439 = vsel %vm464, %v436, 0
        %1441 = vmatprep.subr.mxu0 0.0
        %1442 = vmatpush1.msra.mxu0 %v1427
        %1443 = vmatprep.subr.mxu0 0.0
        %1444 = vmatpush1.msra.mxu0 %v1429
        %1445 = vmatprep.subr.mxu0 0.0
        %1446 = vmatpush1.msra.mxu0 %v1431
        %1447 = vmatprep.subr.mxu0 0.0
        %1448 = vmatpush1.msra.mxu0 %v1433
        %1449 = vmatprep.subr.mxu0 0.0
        %1450 = vmatpush1.msra.mxu0 0.0
        %1451 = vmatprep.subr.mxu0 0.0
        %1452 = vmatpush1.msra.mxu0 0.0
        %1453 = vmatprep.subr.mxu0 0.0
        %1454 = vmatpush1.msra.mxu0 0.0
        %1455 = vmatprep.subr.mxu0 0.0
        %1456 = vmatpush1.msra.mxu0 0.0
        %1457 = vmatprep.subr.mxu0 0.0
        %1458 = vmatpush1.msra.mxu0 0.0
        %1459 = vmatprep.subr.mxu0 0.0
        %1460 = vmatpush1.msra.mxu0 0.0
        %1461 = vmatprep.subr.mxu0 0.0
        %1462 = vmatpush1.msra.mxu0 0.0
        %1463 = vmatprep.subr.mxu0 0.0
        %1464 = vmatpush1.msra.mxu0 0.0
        %1465 = vmatprep.subr.mxu0 0.0
        %1466 = vmatpush1.msra.mxu0 0.0
        %1467 = vmatprep.subr.mxu0 0.0
        %1468 = vmatpush1.msra.mxu0 0.0
        %1469 = vmatprep.subr.mxu0 0.0
        %1470 = vmatpush1.msra.mxu0 0.0
        %1471 = vmatprep.subr.mxu0 0.0
        %1472 = vmatpush1.msra.mxu0 0.0
        %1473 = vmatprep.subr.mxu0 0.0
        %1474 = vmatpush1.msra.mxu0 0.0
        %1475 = vmatprep.subr.mxu0 0.0
        %1476 = vmatpush1.msra.mxu0 0.0
        %1477 = vmatprep.subr.mxu0 0.0
        %1478 = vmatpush1.msra.mxu0 0.0
        %1479 = vmatprep.subr.mxu0 0.0
        %1480 = vmatpush1.msra.mxu0 0.0
        %1481 = vmatprep.subr.mxu0 0.0
        %1482 = vmatpush1.msra.mxu0 0.0
        %1483 = vmatprep.subr.mxu0 0.0
        %1484 = vmatpush1.msra.mxu0 0.0
        %1485 = vmatprep.subr.mxu0 0.0
        %1486 = vmatpush1.msra.mxu0 0.0
        %1487 = vmatprep.subr.mxu0 0.0
        %1488 = vmatpush1.msra.mxu0 0.0
        %1489 = vmatprep.subr.mxu0 0.0
        %1490 = vmatpush1.msra.mxu0 0.0
        %1491 = vmatprep.subr.mxu0 0.0
        %1492 = vmatpush1.msra.mxu0 0.0
        %1493 = vmatprep.subr.mxu0 0.0
        %1494 = vmatpush1.msra.mxu0 0.0
        %1495 = vmatprep.subr.mxu0 0.0
        %1496 = vmatpush1.msra.mxu0 0.0
        %1497 = vmatprep.subr.mxu0 0.0
        %1498 = vmatpush1.msra.mxu0 0.0
        %1499 = vmatprep.subr.mxu0 0.0
        %1500 = vmatpush1.msra.mxu0 0.0
        %1501 = vmatprep.subr.mxu0 0.0
        %1502 = vmatpush1.msra.mxu0 0.0
        %1503 = vmatprep.subr.mxu0 0.0
        %1504 = vmatpush1.msra.mxu0 0.0
        %1505 = vmatprep.mubr.f32.mxu0 0.0
        %1506 = vmatmul.mubr.f32.gmra.mrb[0].mxu0 %v1439
        %v1507 = vpop.f32.mrb[0].mxu0
        %v1508 = vadd.f32 %v1421, %v1507
        %v1509 = vpop.f32.mrb[0].mxu0
        %1510 = vdwg.mxu0
        %v1512 = vsel %vm542, %v1416, 0
        %v1515 = vsel %vm542, %v1508, 0
        %1517 = vmatprep.subr.mxu0 0.0
        %1518 = vmatpush1.xpose.msra.mxu0 %v1515
        %1519 = vmatprep.subr.mxu0 0.0
        %1520 = vmatpush1.xpose.msra.mxu0 0.0
        %1521 = vmatprep.subr.mxu0 0.0
        %1522 = vmatpush1.xpose.msra.mxu0 0.0
        %1523 = vmatprep.subr.mxu0 0.0
        %1524 = vmatpush1.xpose.msra.mxu0 0.0
        %1525 = vmatprep.subr.mxu0 0.0
        %1526 = vmatpush1.xpose.msra.mxu0 0.0
        %1527 = vmatprep.subr.mxu0 0.0
        %1528 = vmatpush1.xpose.msra.mxu0 0.0
        %1529 = vmatprep.subr.mxu0 0.0
        %1530 = vmatpush1.xpose.msra.mxu0 0.0
        %1531 = vmatprep.subr.mxu0 0.0
        %1532 = vmatpush1.xpose.msra.mxu0 0.0
        %1533 = vmatprep.subr.mxu0 0.0
        %1534 = vmatpush1.xpose.msra.mxu0 0.0
        %1535 = vmatprep.subr.mxu0 0.0
        %1536 = vmatpush1.xpose.msra.mxu0 0.0
        %1537 = vmatprep.subr.mxu0 0.0
        %1538 = vmatpush1.xpose.msra.mxu0 0.0
        %1539 = vmatprep.subr.mxu0 0.0
        %1540 = vmatpush1.xpose.msra.mxu0 0.0
        %1541 = vmatprep.subr.mxu0 0.0
        %1542 = vmatpush1.xpose.msra.mxu0 0.0
        %1543 = vmatprep.subr.mxu0 0.0
        %1544 = vmatpush1.xpose.msra.mxu0 0.0
        %1545 = vmatprep.subr.mxu0 0.0
        %1546 = vmatpush1.xpose.msra.mxu0 0.0
        %1547 = vmatprep.subr.mxu0 0.0
        %1548 = vmatpush1.xpose.msra.mxu0 0.0
        %1549 = vmatprep.subr.mxu0 0.0
        %1550 = vmatpush1.xpose.msra.mxu0 0.0
        %1551 = vmatprep.subr.mxu0 0.0
        %1552 = vmatpush1.xpose.msra.mxu0 0.0
        %1553 = vmatprep.subr.mxu0 0.0
        %1554 = vmatpush1.xpose.msra.mxu0 0.0
        %1555 = vmatprep.subr.mxu0 0.0
        %1556 = vmatpush1.xpose.msra.mxu0 0.0
        %1557 = vmatprep.subr.mxu0 0.0
        %1558 = vmatpush1.xpose.msra.mxu0 0.0
        %1559 = vmatprep.subr.mxu0 0.0
        %1560 = vmatpush1.xpose.msra.mxu0 0.0
        %1561 = vmatprep.subr.mxu0 0.0
        %1562 = vmatpush1.xpose.msra.mxu0 0.0
        %1563 = vmatprep.subr.mxu0 0.0
        %1564 = vmatpush1.xpose.msra.mxu0 0.0
        %1565 = vmatprep.subr.mxu0 0.0
        %1566 = vmatpush1.xpose.msra.mxu0 0.0
        %1567 = vmatprep.subr.mxu0 0.0
        %1568 = vmatpush1.xpose.msra.mxu0 0.0
        %1569 = vmatprep.subr.mxu0 0.0
        %1570 = vmatpush1.xpose.msra.mxu0 0.0
        %1571 = vmatprep.subr.mxu0 0.0
        %1572 = vmatpush1.xpose.msra.mxu0 0.0
        %1573 = vmatprep.subr.mxu0 0.0
        %1574 = vmatpush1.xpose.msra.mxu0 0.0
        %1575 = vmatprep.subr.mxu0 0.0
        %1576 = vmatpush1.xpose.msra.mxu0 0.0
        %1577 = vmatprep.subr.mxu0 0.0
        %1578 = vmatpush1.xpose.msra.mxu0 0.0
        %1579 = vmatprep.subr.mxu0 0.0
        %1580 = vmatpush1.xpose.msra.mxu0 0.0
        %1581 = vmatprep.mubr.f32.mxu0 0.0
        %1582 = vmatmul.mubr.f32.gmra.mrb[0].mxu0 %v1512
        %v1583 = vpop.f32.mrb[0].mxu0
        %v1584 = vadd.f32 %v438, %v1583
        %v1585 = vpop.f32.mrb[0].mxu0
        %1586 = vdwg.mxu0
        %v1587 = vsel %vm542, %v1584, -inf
        %1588 = vmax.xlane.f32.xlu0 %v1587
        %v1589 = vpop.xlane.xlu0 %1588
        %v1590 = vsub.f32 %v1584, %v1589
        %v1591 = vmul.f32 %v1590, 1.442695
        %v1592 = vpow.pop %v1591
        %v1593 = vsel %vm542, %v1592, 0.0
        %1594 = vadd.xlane.f32.xlu0 %v1593
        %v1595 = vpop.xlane.xlu0 %1594
        %v1596 = vrcp.pop %v1595
        %v1597 = vmul.f32 %v1592, %v1596
        %1598 = vrot.lane.b32.xlu0 %v1508, 96
        %v1599 = vpop.permute.xlu0 %1598
        %v1602 = vsel %vm542, %v1597, 0
        %1604 = vmatprep.subr.mxu0 0.0
        %1605 = vmatpush1.msra.mxu0 %v1599
        %1606 = vmatprep.subr.mxu0 0.0
        %1607 = vmatpush1.msra.mxu0 0.0
        %1608 = vmatprep.subr.mxu0 0.0
        %1609 = vmatpush1.msra.mxu0 0.0
        %1610 = vmatprep.subr.mxu0 0.0
        %1611 = vmatpush1.msra.mxu0 0.0
        %1612 = vmatprep.subr.mxu0 0.0
        %1613 = vmatpush1.msra.mxu0 0.0
        %1614 = vmatprep.subr.mxu0 0.0
        %1615 = vmatpush1.msra.mxu0 0.0
        %1616 = vmatprep.subr.mxu0 0.0
        %1617 = vmatpush1.msra.mxu0 0.0
        %1618 = vmatprep.subr.mxu0 0.0
        %1619 = vmatpush1.msra.mxu0 0.0
        %1620 = vmatprep.subr.mxu0 0.0
        %1621 = vmatpush1.msra.mxu0 0.0
        %1622 = vmatprep.subr.mxu0 0.0
        %1623 = vmatpush1.msra.mxu0 0.0
        %1624 = vmatprep.subr.mxu0 0.0
        %1625 = vmatpush1.msra.mxu0 0.0
        %1626 = vmatprep.subr.mxu0 0.0
        %1627 = vmatpush1.msra.mxu0 0.0
        %1628 = vmatprep.subr.mxu0 0.0
        %1629 = vmatpush1.msra.mxu0 0.0
        %1630 = vmatprep.subr.mxu0 0.0
        %1631 = vmatpush1.msra.mxu0 0.0
        %1632 = vmatprep.subr.mxu0 0.0
        %1633 = vmatpush1.msra.mxu0 0.0
        %1634 = vmatprep.subr.mxu0 0.0
        %1635 = vmatpush1.msra.mxu0 0.0
        %1636 = vmatprep.subr.mxu0 0.0
        %1637 = vmatpush1.msra.mxu0 0.0
        %1638 = vmatprep.subr.mxu0 0.0
        %1639 = vmatpush1.msra.mxu0 0.0
        %1640 = vmatprep.subr.mxu0 0.0
        %1641 = vmatpush1.msra.mxu0 0.0
        %1642 = vmatprep.subr.mxu0 0.0
        %1643 = vmatpush1.msra.mxu0 0.0
        %1644 = vmatprep.subr.mxu0 0.0
        %1645 = vmatpush1.msra.mxu0 0.0
        %1646 = vmatprep.subr.mxu0 0.0
        %1647 = vmatpush1.msra.mxu0 0.0
        %1648 = vmatprep.subr.mxu0 0.0
        %1649 = vmatpush1.msra.mxu0 0.0
        %1650 = vmatprep.subr.mxu0 0.0
        %1651 = vmatpush1.msra.mxu0 0.0
        %1652 = vmatprep.subr.mxu0 0.0
        %1653 = vmatpush1.msra.mxu0 0.0
        %1654 = vmatprep.subr.mxu0 0.0
        %1655 = vmatpush1.msra.mxu0 0.0
        %1656 = vmatprep.subr.mxu0 0.0
        %1657 = vmatpush1.msra.mxu0 0.0
        %1658 = vmatprep.subr.mxu0 0.0
        %1659 = vmatpush1.msra.mxu0 0.0
        %1660 = vmatprep.subr.mxu0 0.0
        %1661 = vmatpush1.msra.mxu0 0.0
        %1662 = vmatprep.subr.mxu0 0.0
        %1663 = vmatpush1.msra.mxu0 0.0
        %1664 = vmatprep.subr.mxu0 0.0
        %1665 = vmatpush1.msra.mxu0 0.0
        %1666 = vmatprep.subr.mxu0 0.0
        %1667 = vmatpush1.msra.mxu0 0.0
        %1668 = vmatprep.mubr.f32.mxu0 0.0
        %1669 = vmatmul.mubr.f32.gmra.mrb[0].mxu0 %v1602
        %v1670 = vpop.f32.mrb[0].mxu0
        %v1671 = vadd.f32 0.0, %v1670
        %v1672 = vpop.f32.mrb[0].mxu0
        %1673 = vdwg.mxu0
        %1674 = vrot.lane.b32.xlu0 %v1416, 120
        %v1675 = vpop.permute.xlu0 %1674
        %1676 = vrot.lane.b32.xlu0 %v1508, 120
        %v1677 = vpop.permute.xlu0 %1676
        %v1678 = vsel %vm542, %v1675, 0
        %v1680 = vsel %vm542, %v1677, 0
        %1682 = vmatprep.subr.mxu0 0.0
        %1683 = vmatpush1.xpose.msra.mxu0 %v1680
        %1684 = vmatprep.subr.mxu0 0.0
        %1685 = vmatpush1.xpose.msra.mxu0 0.0
        %1686 = vmatprep.subr.mxu0 0.0
        %1687 = vmatpush1.xpose.msra.mxu0 0.0
        %1688 = vmatprep.subr.mxu0 0.0
        %1689 = vmatpush1.xpose.msra.mxu0 0.0
        %1690 = vmatprep.subr.mxu0 0.0
        %1691 = vmatpush1.xpose.msra.mxu0 0.0
        %1692 = vmatprep.subr.mxu0 0.0
        %1693 = vmatpush1.xpose.msra.mxu0 0.0
        %1694 = vmatprep.subr.mxu0 0.0
        %1695 = vmatpush1.xpose.msra.mxu0 0.0
        %1696 = vmatprep.subr.mxu0 0.0
        %1697 = vmatpush1.xpose.msra.mxu0 0.0
        %1698 = vmatprep.subr.mxu0 0.0
        %1699 = vmatpush1.xpose.msra.mxu0 0.0
        %1700 = vmatprep.subr.mxu0 0.0
        %1701 = vmatpush1.xpose.msra.mxu0 0.0
        %1702 = vmatprep.subr.mxu0 0.0
        %1703 = vmatpush1.xpose.msra.mxu0 0.0
        %1704 = vmatprep.subr.mxu0 0.0
        %1705 = vmatpush1.xpose.msra.mxu0 0.0
        %1706 = vmatprep.subr.mxu0 0.0
        %1707 = vmatpush1.xpose.msra.mxu0 0.0
        %1708 = vmatprep.subr.mxu0 0.0
        %1709 = vmatpush1.xpose.msra.mxu0 0.0
        %1710 = vmatprep.subr.mxu0 0.0
        %1711 = vmatpush1.xpose.msra.mxu0 0.0
        %1712 = vmatprep.subr.mxu0 0.0
        %1713 = vmatpush1.xpose.msra.mxu0 0.0
        %1714 = vmatprep.subr.mxu0 0.0
        %1715 = vmatpush1.xpose.msra.mxu0 0.0
        %1716 = vmatprep.subr.mxu0 0.0
        %1717 = vmatpush1.xpose.msra.mxu0 0.0
        %1718 = vmatprep.subr.mxu0 0.0
        %1719 = vmatpush1.xpose.msra.mxu0 0.0
        %1720 = vmatprep.subr.mxu0 0.0
        %1721 = vmatpush1.xpose.msra.mxu0 0.0
        %1722 = vmatprep.subr.mxu0 0.0
        %1723 = vmatpush1.xpose.msra.mxu0 0.0
        %1724 = vmatprep.subr.mxu0 0.0
        %1725 = vmatpush1.xpose.msra.mxu0 0.0
        %1726 = vmatprep.subr.mxu0 0.0
        %1727 = vmatpush1.xpose.msra.mxu0 0.0
        %1728 = vmatprep.subr.mxu0 0.0
        %1729 = vmatpush1.xpose.msra.mxu0 0.0
        %1730 = vmatprep.subr.mxu0 0.0
        %1731 = vmatpush1.xpose.msra.mxu0 0.0
        %1732 = vmatprep.subr.mxu0 0.0
        %1733 = vmatpush1.xpose.msra.mxu0 0.0
        %1734 = vmatprep.subr.mxu0 0.0
        %1735 = vmatpush1.xpose.msra.mxu0 0.0
        %1736 = vmatprep.subr.mxu0 0.0
        %1737 = vmatpush1.xpose.msra.mxu0 0.0
        %1738 = vmatprep.subr.mxu0 0.0
        %1739 = vmatpush1.xpose.msra.mxu0 0.0
        %1740 = vmatprep.subr.mxu0 0.0
        %1741 = vmatpush1.xpose.msra.mxu0 0.0
        %1742 = vmatprep.subr.mxu0 0.0
        %1743 = vmatpush1.xpose.msra.mxu0 0.0
        %1744 = vmatprep.subr.mxu0 0.0
        %1745 = vmatpush1.xpose.msra.mxu0 0.0
        %1746 = vmatprep.mubr.f32.mxu0 0.0
        %1747 = vmatmul.mubr.f32.gmra.mrb[0].mxu0 %v1678
        %v1748 = vpop.f32.mrb[0].mxu0
        %v1749 = vadd.f32 %v438, %v1748
        %v1750 = vpop.f32.mrb[0].mxu0
        %1751 = vdwg.mxu0
        %v1752 = vsel %vm542, %v1749, -inf
        %1753 = vmax.xlane.f32.xlu0 %v1752
        %v1754 = vpop.xlane.xlu0 %1753
        %v1755 = vsub.f32 %v1749, %v1754
        %v1756 = vmul.f32 %v1755, 1.442695
        %v1757 = vpow.pop %v1756
        %v1758 = vsel %vm542, %v1757, 0.0
        %1759 = vadd.xlane.f32.xlu0 %v1758
        %v1760 = vpop.xlane.xlu0 %1759
        %v1761 = vrcp.pop %v1760
        %v1762 = vmul.f32 %v1757, %v1761
        %1763 = vrot.lane.b32.xlu0 %v1508, 88
        %v1764 = vpop.permute.xlu0 %1763
        %v1767 = vsel %vm542, %v1762, 0
        %1769 = vmatprep.subr.mxu0 0.0
        %1770 = vmatpush1.msra.mxu0 %v1764
        %1771 = vmatprep.subr.mxu0 0.0
        %1772 = vmatpush1.msra.mxu0 0.0
        %1773 = vmatprep.subr.mxu0 0.0
        %1774 = vmatpush1.msra.mxu0 0.0
        %1775 = vmatprep.subr.mxu0 0.0
        %1776 = vmatpush1.msra.mxu0 0.0
        %1777 = vmatprep.subr.mxu0 0.0
        %1778 = vmatpush1.msra.mxu0 0.0
        %1779 = vmatprep.subr.mxu0 0.0
        %1780 = vmatpush1.msra.mxu0 0.0
        %1781 = vmatprep.subr.mxu0 0.0
        %1782 = vmatpush1.msra.mxu0 0.0
        %1783 = vmatprep.subr.mxu0 0.0
        %1784 = vmatpush1.msra.mxu0 0.0
        %1785 = vmatprep.subr.mxu0 0.0
        %1786 = vmatpush1.msra.mxu0 0.0
        %1787 = vmatprep.subr.mxu0 0.0
        %1788 = vmatpush1.msra.mxu0 0.0
        %1789 = vmatprep.subr.mxu0 0.0
        %1790 = vmatpush1.msra.mxu0 0.0
        %1791 = vmatprep.subr.mxu0 0.0
        %1792 = vmatpush1.msra.mxu0 0.0
        %1793 = vmatprep.subr.mxu0 0.0
        %1794 = vmatpush1.msra.mxu0 0.0
        %1795 = vmatprep.subr.mxu0 0.0
        %1796 = vmatpush1.msra.mxu0 0.0
        %1797 = vmatprep.subr.mxu0 0.0
        %1798 = vmatpush1.msra.mxu0 0.0
        %1799 = vmatprep.subr.mxu0 0.0
        %1800 = vmatpush1.msra.mxu0 0.0
        %1801 = vmatprep.subr.mxu0 0.0
        %1802 = vmatpush1.msra.mxu0 0.0
        %1803 = vmatprep.subr.mxu0 0.0
        %1804 = vmatpush1.msra.mxu0 0.0
        %1805 = vmatprep.subr.mxu0 0.0
        %1806 = vmatpush1.msra.mxu0 0.0
        %1807 = vmatprep.subr.mxu0 0.0
        %1808 = vmatpush1.msra.mxu0 0.0
        %1809 = vmatprep.subr.mxu0 0.0
        %1810 = vmatpush1.msra.mxu0 0.0
        %1811 = vmatprep.subr.mxu0 0.0
        %1812 = vmatpush1.msra.mxu0 0.0
        %1813 = vmatprep.subr.mxu0 0.0
        %1814 = vmatpush1.msra.mxu0 0.0
        %1815 = vmatprep.subr.mxu0 0.0
        %1816 = vmatpush1.msra.mxu0 0.0
        %1817 = vmatprep.subr.mxu0 0.0
        %1818 = vmatpush1.msra.mxu0 0.0
        %1819 = vmatprep.subr.mxu0 0.0
        %1820 = vmatpush1.msra.mxu0 0.0
        %1821 = vmatprep.subr.mxu0 0.0
        %1822 = vmatpush1.msra.mxu0 0.0
        %1823 = vmatprep.subr.mxu0 0.0
        %1824 = vmatpush1.msra.mxu0 0.0
        %1825 = vmatprep.subr.mxu0 0.0
        %1826 = vmatpush1.msra.mxu0 0.0
        %1827 = vmatprep.subr.mxu0 0.0
        %1828 = vmatpush1.msra.mxu0 0.0
        %1829 = vmatprep.subr.mxu0 0.0
        %1830 = vmatpush1.msra.mxu0 0.0
        %1831 = vmatprep.subr.mxu0 0.0
        %1832 = vmatpush1.msra.mxu0 0.0
        %1833 = vmatprep.mubr.f32.mxu0 0.0
        %1834 = vmatmul.mubr.f32.gmra.mrb[0].mxu0 %v1767
        %v1835 = vpop.f32.mrb[0].mxu0
        %v1836 = vadd.f32 0.0, %v1835
        %v1837 = vpop.f32.mrb[0].mxu0
        %1838 = vdwg.mxu0
        %1839 = vrot.lane.b32.xlu0 %v1416, 112
        %v1840 = vpop.permute.xlu0 %1839
        %1841 = vrot.lane.b32.xlu0 %v1508, 112
        %v1842 = vpop.permute.xlu0 %1841
        %v1843 = vsel %vm542, %v1840, 0
        %v1845 = vsel %vm542, %v1842, 0
        %1847 = vmatprep.subr.mxu0 0.0
        %1848 = vmatpush1.xpose.msra.mxu0 %v1845
        %1849 = vmatprep.subr.mxu0 0.0
        %1850 = vmatpush1.xpose.msra.mxu0 0.0
        %1851 = vmatprep.subr.mxu0 0.0
        %1852 = vmatpush1.xpose.msra.mxu0 0.0
        %1853 = vmatprep.subr.mxu0 0.0
        %1854 = vmatpush1.xpose.msra.mxu0 0.0
        %1855 = vmatprep.subr.mxu0 0.0
        %1856 = vmatpush1.xpose.msra.mxu0 0.0
        %1857 = vmatprep.subr.mxu0 0.0
        %1858 = vmatpush1.xpose.msra.mxu0 0.0
        %1859 = vmatprep.subr.mxu0 0.0
        %1860 = vmatpush1.xpose.msra.mxu0 0.0
        %1861 = vmatprep.subr.mxu0 0.0
        %1862 = vmatpush1.xpose.msra.mxu0 0.0
        %1863 = vmatprep.subr.mxu0 0.0
        %1864 = vmatpush1.xpose.msra.mxu0 0.0
        %1865 = vmatprep.subr.mxu0 0.0
        %1866 = vmatpush1.xpose.msra.mxu0 0.0
        %1867 = vmatprep.subr.mxu0 0.0
        %1868 = vmatpush1.xpose.msra.mxu0 0.0
        %1869 = vmatprep.subr.mxu0 0.0
        %1870 = vmatpush1.xpose.msra.mxu0 0.0
        %1871 = vmatprep.subr.mxu0 0.0
        %1872 = vmatpush1.xpose.msra.mxu0 0.0
        %1873 = vmatprep.subr.mxu0 0.0
        %1874 = vmatpush1.xpose.msra.mxu0 0.0
        %1875 = vmatprep.subr.mxu0 0.0
        %1876 = vmatpush1.xpose.msra.mxu0 0.0
        %1877 = vmatprep.subr.mxu0 0.0
        %1878 = vmatpush1.xpose.msra.mxu0 0.0
        %1879 = vmatprep.subr.mxu0 0.0
        %1880 = vmatpush1.xpose.msra.mxu0 0.0
        %1881 = vmatprep.subr.mxu0 0.0
        %1882 = vmatpush1.xpose.msra.mxu0 0.0
        %1883 = vmatprep.subr.mxu0 0.0
        %1884 = vmatpush1.xpose.msra.mxu0 0.0
        %1885 = vmatprep.subr.mxu0 0.0
        %1886 = vmatpush1.xpose.msra.mxu0 0.0
        %1887 = vmatprep.subr.mxu0 0.0
        %1888 = vmatpush1.xpose.msra.mxu0 0.0
        %1889 = vmatprep.subr.mxu0 0.0
        %1890 = vmatpush1.xpose.msra.mxu0 0.0
        %1891 = vmatprep.subr.mxu0 0.0
        %1892 = vmatpush1.xpose.msra.mxu0 0.0
        %1893 = vmatprep.subr.mxu0 0.0
        %1894 = vmatpush1.xpose.msra.mxu0 0.0
        %1895 = vmatprep.subr.mxu0 0.0
        %1896 = vmatpush1.xpose.msra.mxu0 0.0
        %1897 = vmatprep.subr.mxu0 0.0
        %1898 = vmatpush1.xpose.msra.mxu0 0.0
        %1899 = vmatprep.subr.mxu0 0.0
        %1900 = vmatpush1.xpose.msra.mxu0 0.0
        %1901 = vmatprep.subr.mxu0 0.0
        %1902 = vmatpush1.xpose.msra.mxu0 0.0
        %1903 = vmatprep.subr.mxu0 0.0
        %1904 = vmatpush1.xpose.msra.mxu0 0.0
        %1905 = vmatprep.subr.mxu0 0.0
        %1906 = vmatpush1.xpose.msra.mxu0 0.0
        %1907 = vmatprep.subr.mxu0 0.0
        %1908 = vmatpush1.xpose.msra.mxu0 0.0
        %1909 = vmatprep.subr.mxu0 0.0
        %1910 = vmatpush1.xpose.msra.mxu0 0.0
        %1911 = vmatprep.mubr.f32.mxu0 0.0
        %1912 = vmatmul.mubr.f32.gmra.mrb[0].mxu0 %v1843
        %v1913 = vpop.f32.mrb[0].mxu0
        %v1914 = vadd.f32 %v438, %v1913
        %v1915 = vpop.f32.mrb[0].mxu0
        %1916 = vdwg.mxu0
        %v1917 = vsel %vm542, %v1914, -inf
        %1918 = vmax.xlane.f32.xlu0 %v1917
        %v1919 = vpop.xlane.xlu0 %1918
        %v1920 = vsub.f32 %v1914, %v1919
        %v1921 = vmul.f32 %v1920, 1.442695
        %v1922 = vpow.pop %v1921
        %v1923 = vsel %vm542, %v1922, 0.0
        %1924 = vadd.xlane.f32.xlu0 %v1923
        %v1925 = vpop.xlane.xlu0 %1924
        %v1926 = vrcp.pop %v1925
        %v1927 = vmul.f32 %v1922, %v1926
        %1928 = vrot.lane.b32.xlu0 %v1508, 80
        %v1929 = vpop.permute.xlu0 %1928
        %v1932 = vsel %vm542, %v1927, 0
        %1934 = vmatprep.subr.mxu0 0.0
        %1935 = vmatpush1.msra.mxu0 %v1929
        %1936 = vmatprep.subr.mxu0 0.0
        %1937 = vmatpush1.msra.mxu0 0.0
        %1938 = vmatprep.subr.mxu0 0.0
        %1939 = vmatpush1.msra.mxu0 0.0
        %1940 = vmatprep.subr.mxu0 0.0
        %1941 = vmatpush1.msra.mxu0 0.0
        %1942 = vmatprep.subr.mxu0 0.0
        %1943 = vmatpush1.msra.mxu0 0.0
        %1944 = vmatprep.subr.mxu0 0.0
        %1945 = vmatpush1.msra.mxu0 0.0
        %1946 = vmatprep.subr.mxu0 0.0
        %1947 = vmatpush1.msra.mxu0 0.0
        %1948 = vmatprep.subr.mxu0 0.0
        %1949 = vmatpush1.msra.mxu0 0.0
        %1950 = vmatprep.subr.mxu0 0.0
        %1951 = vmatpush1.msra.mxu0 0.0
        %1952 = vmatprep.subr.mxu0 0.0
        %1953 = vmatpush1.msra.mxu0 0.0
        %1954 = vmatprep.subr.mxu0 0.0
        %1955 = vmatpush1.msra.mxu0 0.0
        %1956 = vmatprep.subr.mxu0 0.0
        %1957 = vmatpush1.msra.mxu0 0.0
        %1958 = vmatprep.subr.mxu0 0.0
        %1959 = vmatpush1.msra.mxu0 0.0
        %1960 = vmatprep.subr.mxu0 0.0
        %1961 = vmatpush1.msra.mxu0 0.0
        %1962 = vmatprep.subr.mxu0 0.0
        %1963 = vmatpush1.msra.mxu0 0.0
        %1964 = vmatprep.subr.mxu0 0.0
        %1965 = vmatpush1.msra.mxu0 0.0
        %1966 = vmatprep.subr.mxu0 0.0
        %1967 = vmatpush1.msra.mxu0 0.0
        %1968 = vmatprep.subr.mxu0 0.0
        %1969 = vmatpush1.msra.mxu0 0.0
        %1970 = vmatprep.subr.mxu0 0.0
        %1971 = vmatpush1.msra.mxu0 0.0
        %1972 = vmatprep.subr.mxu0 0.0
        %1973 = vmatpush1.msra.mxu0 0.0
        %1974 = vmatprep.subr.mxu0 0.0
        %1975 = vmatpush1.msra.mxu0 0.0
        %1976 = vmatprep.subr.mxu0 0.0
        %1977 = vmatpush1.msra.mxu0 0.0
        %1978 = vmatprep.subr.mxu0 0.0
        %1979 = vmatpush1.msra.mxu0 0.0
        %1980 = vmatprep.subr.mxu0 0.0
        %1981 = vmatpush1.msra.mxu0 0.0
        %1982 = vmatprep.subr.mxu0 0.0
        %1983 = vmatpush1.msra.mxu0 0.0
        %1984 = vmatprep.subr.mxu0 0.0
        %1985 = vmatpush1.msra.mxu0 0.0
        %1986 = vmatprep.subr.mxu0 0.0
        %1987 = vmatpush1.msra.mxu0 0.0
        %1988 = vmatprep.subr.mxu0 0.0
        %1989 = vmatpush1.msra.mxu0 0.0
        %1990 = vmatprep.subr.mxu0 0.0
        %1991 = vmatpush1.msra.mxu0 0.0
        %1992 = vmatprep.subr.mxu0 0.0
        %1993 = vmatpush1.msra.mxu0 0.0
        %1994 = vmatprep.subr.mxu0 0.0
        %1995 = vmatpush1.msra.mxu0 0.0
        %1996 = vmatprep.subr.mxu0 0.0
        %1997 = vmatpush1.msra.mxu0 0.0
        %1998 = vmatprep.mubr.f32.mxu0 0.0
        %1999 = vmatmul.mubr.f32.gmra.mrb[0].mxu0 %v1932
        %v2000 = vpop.f32.mrb[0].mxu0
        %v2001 = vadd.f32 0.0, %v2000
        %v2002 = vpop.f32.mrb[0].mxu0
        %2003 = vdwg.mxu0
        %2004 = vrot.lane.b32.xlu0 %v1416, 104
        %v2005 = vpop.permute.xlu0 %2004
        %2006 = vrot.lane.b32.xlu0 %v1508, 104
        %v2007 = vpop.permute.xlu0 %2006
        %v2008 = vsel %vm542, %v2005, 0
        %v2010 = vsel %vm542, %v2007, 0
        %2012 = vmatprep.subr.mxu0 0.0
        %2013 = vmatpush1.xpose.msra.mxu0 %v2010
        %2014 = vmatprep.subr.mxu0 0.0
        %2015 = vmatpush1.xpose.msra.mxu0 0.0
        %2016 = vmatprep.subr.mxu0 0.0
        %2017 = vmatpush1.xpose.msra.mxu0 0.0
        %2018 = vmatprep.subr.mxu0 0.0
        %2019 = vmatpush1.xpose.msra.mxu0 0.0
        %2020 = vmatprep.subr.mxu0 0.0
        %2021 = vmatpush1.xpose.msra.mxu0 0.0
        %2022 = vmatprep.subr.mxu0 0.0
        %2023 = vmatpush1.xpose.msra.mxu0 0.0
        %2024 = vmatprep.subr.mxu0 0.0
        %2025 = vmatpush1.xpose.msra.mxu0 0.0
        %2026 = vmatprep.subr.mxu0 0.0
        %2027 = vmatpush1.xpose.msra.mxu0 0.0
        %2028 = vmatprep.subr.mxu0 0.0
        %2029 = vmatpush1.xpose.msra.mxu0 0.0
        %2030 = vmatprep.subr.mxu0 0.0
        %2031 = vmatpush1.xpose.msra.mxu0 0.0
        %2032 = vmatprep.subr.mxu0 0.0
        %2033 = vmatpush1.xpose.msra.mxu0 0.0
        %2034 = vmatprep.subr.mxu0 0.0
        %2035 = vmatpush1.xpose.msra.mxu0 0.0
        %2036 = vmatprep.subr.mxu0 0.0
        %2037 = vmatpush1.xpose.msra.mxu0 0.0
        %2038 = vmatprep.subr.mxu0 0.0
        %2039 = vmatpush1.xpose.msra.mxu0 0.0
        %2040 = vmatprep.subr.mxu0 0.0
        %2041 = vmatpush1.xpose.msra.mxu0 0.0
        %2042 = vmatprep.subr.mxu0 0.0
        %2043 = vmatpush1.xpose.msra.mxu0 0.0
        %2044 = vmatprep.subr.mxu0 0.0
        %2045 = vmatpush1.xpose.msra.mxu0 0.0
        %2046 = vmatprep.subr.mxu0 0.0
        %2047 = vmatpush1.xpose.msra.mxu0 0.0
        %2048 = vmatprep.subr.mxu0 0.0
        %2049 = vmatpush1.xpose.msra.mxu0 0.0
        %2050 = vmatprep.subr.mxu0 0.0
        %2051 = vmatpush1.xpose.msra.mxu0 0.0
        %2052 = vmatprep.subr.mxu0 0.0
        %2053 = vmatpush1.xpose.msra.mxu0 0.0
        %2054 = vmatprep.subr.mxu0 0.0
        %2055 = vmatpush1.xpose.msra.mxu0 0.0
        %2056 = vmatprep.subr.mxu0 0.0
        %2057 = vmatpush1.xpose.msra.mxu0 0.0
        %2058 = vmatprep.subr.mxu0 0.0
        %2059 = vmatpush1.xpose.msra.mxu0 0.0
        %2060 = vmatprep.subr.mxu0 0.0
        %2061 = vmatpush1.xpose.msra.mxu0 0.0
        %2062 = vmatprep.subr.mxu0 0.0
        %2063 = vmatpush1.xpose.msra.mxu0 0.0
        %2064 = vmatprep.subr.mxu0 0.0
        %2065 = vmatpush1.xpose.msra.mxu0 0.0
        %2066 = vmatprep.subr.mxu0 0.0
        %2067 = vmatpush1.xpose.msra.mxu0 0.0
        %2068 = vmatprep.subr.mxu0 0.0
        %2069 = vmatpush1.xpose.msra.mxu0 0.0
        %2070 = vmatprep.subr.mxu0 0.0
        %2071 = vmatpush1.xpose.msra.mxu0 0.0
        %2072 = vmatprep.subr.mxu0 0.0
        %2073 = vmatpush1.xpose.msra.mxu0 0.0
        %2074 = vmatprep.subr.mxu0 0.0
        %2075 = vmatpush1.xpose.msra.mxu0 0.0
        %2076 = vmatprep.mubr.f32.mxu0 0.0
        %2077 = vmatmul.mubr.f32.gmra.mrb[0].mxu0 %v2008
        %v2078 = vpop.f32.mrb[0].mxu0
        %v2079 = vadd.f32 %v438, %v2078
        %v2080 = vpop.f32.mrb[0].mxu0
        %2081 = vdwg.mxu0
        %v2082 = vsel %vm542, %v2079, -inf
        %2083 = vmax.xlane.f32.xlu0 %v2082
        %v2084 = vpop.xlane.xlu0 %2083
        %v2085 = vsub.f32 %v2079, %v2084
        %v2086 = vmul.f32 %v2085, 1.442695
        %v2087 = vpow.pop %v2086
        %v2088 = vsel %vm542, %v2087, 0.0
        %2089 = vadd.xlane.f32.xlu0 %v2088
        %v2090 = vpop.xlane.xlu0 %2089
        %v2091 = vrcp.pop %v2090
        %v2092 = vmul.f32 %v2087, %v2091
        %2093 = vrot.lane.b32.xlu0 %v1508, 72
        %v2094 = vpop.permute.xlu0 %2093
        %v2097 = vsel %vm542, %v2092, 0
        %2099 = vmatprep.subr.mxu0 0.0
        %2100 = vmatpush1.msra.mxu0 %v2094
        %2101 = vmatprep.subr.mxu0 0.0
        %2102 = vmatpush1.msra.mxu0 0.0
        %2103 = vmatprep.subr.mxu0 0.0
        %2104 = vmatpush1.msra.mxu0 0.0
        %2105 = vmatprep.subr.mxu0 0.0
        %2106 = vmatpush1.msra.mxu0 0.0
        %2107 = vmatprep.subr.mxu0 0.0
        %2108 = vmatpush1.msra.mxu0 0.0
        %2109 = vmatprep.subr.mxu0 0.0
        %2110 = vmatpush1.msra.mxu0 0.0
        %2111 = vmatprep.subr.mxu0 0.0
        %2112 = vmatpush1.msra.mxu0 0.0
        %2113 = vmatprep.subr.mxu0 0.0
        %2114 = vmatpush1.msra.mxu0 0.0
        %2115 = vmatprep.subr.mxu0 0.0
        %2116 = vmatpush1.msra.mxu0 0.0
        %2117 = vmatprep.subr.mxu0 0.0
        %2118 = vmatpush1.msra.mxu0 0.0
        %2119 = vmatprep.subr.mxu0 0.0
        %2120 = vmatpush1.msra.mxu0 0.0
        %2121 = vmatprep.subr.mxu0 0.0
        %2122 = vmatpush1.msra.mxu0 0.0
        %2123 = vmatprep.subr.mxu0 0.0
        %2124 = vmatpush1.msra.mxu0 0.0
        %2125 = vmatprep.subr.mxu0 0.0
        %2126 = vmatpush1.msra.mxu0 0.0
        %2127 = vmatprep.subr.mxu0 0.0
        %2128 = vmatpush1.msra.mxu0 0.0
        %2129 = vmatprep.subr.mxu0 0.0
        %2130 = vmatpush1.msra.mxu0 0.0
        %2131 = vmatprep.subr.mxu0 0.0
        %2132 = vmatpush1.msra.mxu0 0.0
        %2133 = vmatprep.subr.mxu0 0.0
        %2134 = vmatpush1.msra.mxu0 0.0
        %2135 = vmatprep.subr.mxu0 0.0
        %2136 = vmatpush1.msra.mxu0 0.0
        %2137 = vmatprep.subr.mxu0 0.0
        %2138 = vmatpush1.msra.mxu0 0.0
        %2139 = vmatprep.subr.mxu0 0.0
        %2140 = vmatpush1.msra.mxu0 0.0
        %2141 = vmatprep.subr.mxu0 0.0
        %2142 = vmatpush1.msra.mxu0 0.0
        %2143 = vmatprep.subr.mxu0 0.0
        %2144 = vmatpush1.msra.mxu0 0.0
        %2145 = vmatprep.subr.mxu0 0.0
        %2146 = vmatpush1.msra.mxu0 0.0
        %2147 = vmatprep.subr.mxu0 0.0
        %2148 = vmatpush1.msra.mxu0 0.0
        %2149 = vmatprep.subr.mxu0 0.0
        %2150 = vmatpush1.msra.mxu0 0.0
        %2151 = vmatprep.subr.mxu0 0.0
        %2152 = vmatpush1.msra.mxu0 0.0
        %2153 = vmatprep.subr.mxu0 0.0
        %2154 = vmatpush1.msra.mxu0 0.0
        %2155 = vmatprep.subr.mxu0 0.0
        %2156 = vmatpush1.msra.mxu0 0.0
        %2157 = vmatprep.subr.mxu0 0.0
        %2158 = vmatpush1.msra.mxu0 0.0
        %2159 = vmatprep.subr.mxu0 0.0
        %2160 = vmatpush1.msra.mxu0 0.0
        %2161 = vmatprep.subr.mxu0 0.0
        %2162 = vmatpush1.msra.mxu0 0.0
        %2163 = vmatprep.mubr.f32.mxu0 0.0
        %2164 = vmatmul.mubr.f32.gmra.mrb[0].mxu0 %v2097
        %v2165 = vpop.f32.mrb[0].mxu0
        %v2166 = vadd.f32 0.0, %v2165
        %v2167 = vpop.f32.mrb[0].mxu0
        %2168 = vdwg.mxu0
        %2170 = vrot.lane.b32.xlu0 %v1836, 8
        %v2171 = vpop.permute.xlu0 %2170
        %2174 = vrot.lane.b32.xlu0 %v2001, 16
        %v2175 = vpop.permute.xlu0 %2174
        %2178 = vrot.lane.b32.xlu0 %v2166, 24
        %v2179 = vpop.permute.xlu0 %2178
        %v2181 = vsel %vm542, %v1671, %v2171
        %v2182 = vsel %vm1213, %v2181, %v2175
        %v2183 = vsel %vm1215, %v2182, %v2179
        %v2184 = vld [vmem:[#allocation7 + $0x6] sm:$0x1]
        %v2185 = vlaneseq
        %v2186 = vshrl.u32 %v2185, 7
        %v2187 = vsub.s32 0, %v2186
        %v2188 = vrot.slane %v2184, %v2187
        %2189 = vrot.lane.b32.xlu0 %v440, 32
        %v2190 = vpop.permute.xlu0 %2189
        %2191 = vrot.lane.b32.xlu0 %v443, 32
        %v2192 = vpop.permute.xlu0 %2191
        %2193 = vrot.lane.b32.xlu0 %v446, 32
        %v2194 = vpop.permute.xlu0 %2193
        %2195 = vrot.lane.b32.xlu0 %v449, 32
        %v2196 = vpop.permute.xlu0 %2195
        %v2202 = vsel %vm464, %v2183, 0
        %2204 = vmatprep.subr.mxu0 0.0
        %2205 = vmatpush1.msra.mxu0 %v2190
        %2206 = vmatprep.subr.mxu0 0.0
        %2207 = vmatpush1.msra.mxu0 %v2192
        %2208 = vmatprep.subr.mxu0 0.0
        %2209 = vmatpush1.msra.mxu0 %v2194
        %2210 = vmatprep.subr.mxu0 0.0
        %2211 = vmatpush1.msra.mxu0 %v2196
        %2212 = vmatprep.subr.mxu0 0.0
        %2213 = vmatpush1.msra.mxu0 0.0
        %2214 = vmatprep.subr.mxu0 0.0
        %2215 = vmatpush1.msra.mxu0 0.0
        %2216 = vmatprep.subr.mxu0 0.0
        %2217 = vmatpush1.msra.mxu0 0.0
        %2218 = vmatprep.subr.mxu0 0.0
        %2219 = vmatpush1.msra.mxu0 0.0
        %2220 = vmatprep.subr.mxu0 0.0
        %2221 = vmatpush1.msra.mxu0 0.0
        %2222 = vmatprep.subr.mxu0 0.0
        %2223 = vmatpush1.msra.mxu0 0.0
        %2224 = vmatprep.subr.mxu0 0.0
        %2225 = vmatpush1.msra.mxu0 0.0
        %2226 = vmatprep.subr.mxu0 0.0
        %2227 = vmatpush1.msra.mxu0 0.0
        %2228 = vmatprep.subr.mxu0 0.0
        %2229 = vmatpush1.msra.mxu0 0.0
        %2230 = vmatprep.subr.mxu0 0.0
        %2231 = vmatpush1.msra.mxu0 0.0
        %2232 = vmatprep.subr.mxu0 0.0
        %2233 = vmatpush1.msra.mxu0 0.0
        %2234 = vmatprep.subr.mxu0 0.0
        %2235 = vmatpush1.msra.mxu0 0.0
        %2236 = vmatprep.subr.mxu0 0.0
        %2237 = vmatpush1.msra.mxu0 0.0
        %2238 = vmatprep.subr.mxu0 0.0
        %2239 = vmatpush1.msra.mxu0 0.0
        %2240 = vmatprep.subr.mxu0 0.0
        %2241 = vmatpush1.msra.mxu0 0.0
        %2242 = vmatprep.subr.mxu0 0.0
        %2243 = vmatpush1.msra.mxu0 0.0
        %2244 = vmatprep.subr.mxu0 0.0
        %2245 = vmatpush1.msra.mxu0 0.0
        %2246 = vmatprep.subr.mxu0 0.0
        %2247 = vmatpush1.msra.mxu0 0.0
        %2248 = vmatprep.subr.mxu0 0.0
        %2249 = vmatpush1.msra.mxu0 0.0
        %2250 = vmatprep.subr.mxu0 0.0
        %2251 = vmatpush1.msra.mxu0 0.0
        %2252 = vmatprep.subr.mxu0 0.0
        %2253 = vmatpush1.msra.mxu0 0.0
        %2254 = vmatprep.subr.mxu0 0.0
        %2255 = vmatpush1.msra.mxu0 0.0
        %2256 = vmatprep.subr.mxu0 0.0
        %2257 = vmatpush1.msra.mxu0 0.0
        %2258 = vmatprep.subr.mxu0 0.0
        %2259 = vmatpush1.msra.mxu0 0.0
        %2260 = vmatprep.subr.mxu0 0.0
        %2261 = vmatpush1.msra.mxu0 0.0
        %2262 = vmatprep.subr.mxu0 0.0
        %2263 = vmatpush1.msra.mxu0 0.0
        %2264 = vmatprep.subr.mxu0 0.0
        %2265 = vmatpush1.msra.mxu0 0.0
        %2266 = vmatprep.subr.mxu0 0.0
        %2267 = vmatpush1.msra.mxu0 0.0
        %2268 = vmatprep.mubr.f32.mxu0 0.0
        %2269 = vmatmul.mubr.f32.gmra.mrb[0].mxu0 %v2202
        %v2270 = vpop.f32.mrb[0].mxu0
        %v2271 = vadd.f32 %v2188, %v2270
        %v2272 = vpop.f32.mrb[0].mxu0
        %2273 = vdwg.mxu0
        %v2274 = vadd.f32 %v1337, %v2271
        %v2275 = vsel %vm464, %v2274, 0.0
        %2276 = vadd.xlane.f32.xlu0 %v2275
        %v2277 = vpop.xlane.xlu0 %2276
        %v2278 = vmul.f32 %v2277, %v1315
        %v2279 = vsub.f32 %v2274, %v2278
        %v2280 = vmul.f32 %v2279, %v2279
        %v2281 = vsel %vm464, %v2280, 0.0
        %2282 = vadd.xlane.f32.xlu0 %v2281
        %v2283 = vpop.xlane.xlu0 %2282
        %v2284 = vmul.f32 %v2283, %v1315
        %v2285 = vadd.f32 %v2284, 1e-05
        %v2286 = vrsqrt.pop %v2285
        %v2287 = vmul.f32 %v2279, %v2286
        %v2288 = vld [vmem:[#allocation7 + $0x7] sm:$0x1]
        %v2289 = vlaneseq
        %v2290 = vshrl.u32 %v2289, 7
        %v2291 = vsub.s32 0, %v2290
        %v2292 = vrot.slane %v2288, %v2291
        %v2293 = vmul.f32 %v2287, %v2292
        %v2294 = vld [vmem:[#allocation7 + $0x8] sm:$0x1]
        %v2295 = vlaneseq
        %v2296 = vshrl.u32 %v2295, 7
        %v2297 = vsub.s32 0, %v2296
        %v2298 = vrot.slane %v2294, %v2297
        %v2299 = vadd.f32 %v2293, %v2298
        %v2300 = vld [vmem:[#allocation7 + $0x9] sm:$0x1]
        %v2301 = vlaneseq
        %v2302 = vshrl.u32 %v2301, 7
        %v2303 = vsub.s32 0, %v2302
        %v2304 = vrot.slane %v2300, %v2303
        %v2306 = vsel %vm464, %v2299, 0
        %2308 = vmatprep.subr.mxu0 0.0
        %2309 = vmatpush1.msra.mxu0 %v441
        %2310 = vmatprep.subr.mxu0 0.0
        %2311 = vmatpush1.msra.mxu0 %v444
        %2312 = vmatprep.subr.mxu0 0.0
        %2313 = vmatpush1.msra.mxu0 %v447
        %2314 = vmatprep.subr.mxu0 0.0
        %2315 = vmatpush1.msra.mxu0 %v450
        %2316 = vmatprep.subr.mxu0 0.0
        %2317 = vmatpush1.msra.mxu0 0.0
        %2318 = vmatprep.subr.mxu0 0.0
        %2319 = vmatpush1.msra.mxu0 0.0
        %2320 = vmatprep.subr.mxu0 0.0
        %2321 = vmatpush1.msra.mxu0 0.0
        %2322 = vmatprep.subr.mxu0 0.0
        %2323 = vmatpush1.msra.mxu0 0.0
        %2324 = vmatprep.subr.mxu0 0.0
        %2325 = vmatpush1.msra.mxu0 0.0
        %2326 = vmatprep.subr.mxu0 0.0
        %2327 = vmatpush1.msra.mxu0 0.0
        %2328 = vmatprep.subr.mxu0 0.0
        %2329 = vmatpush1.msra.mxu0 0.0
        %2330 = vmatprep.subr.mxu0 0.0
        %2331 = vmatpush1.msra.mxu0 0.0
        %2332 = vmatprep.subr.mxu0 0.0
        %2333 = vmatpush1.msra.mxu0 0.0
        %2334 = vmatprep.subr.mxu0 0.0
        %2335 = vmatpush1.msra.mxu0 0.0
        %2336 = vmatprep.subr.mxu0 0.0
        %2337 = vmatpush1.msra.mxu0 0.0
        %2338 = vmatprep.subr.mxu0 0.0
        %2339 = vmatpush1.msra.mxu0 0.0
        %2340 = vmatprep.subr.mxu0 0.0
        %2341 = vmatpush1.msra.mxu0 0.0
        %2342 = vmatprep.subr.mxu0 0.0
        %2343 = vmatpush1.msra.mxu0 0.0
        %2344 = vmatprep.subr.mxu0 0.0
        %2345 = vmatpush1.msra.mxu0 0.0
        %2346 = vmatprep.subr.mxu0 0.0
        %2347 = vmatpush1.msra.mxu0 0.0
        %2348 = vmatprep.subr.mxu0 0.0
        %2349 = vmatpush1.msra.mxu0 0.0
        %2350 = vmatprep.subr.mxu0 0.0
        %2351 = vmatpush1.msra.mxu0 0.0
        %2352 = vmatprep.subr.mxu0 0.0
        %2353 = vmatpush1.msra.mxu0 0.0
        %2354 = vmatprep.subr.mxu0 0.0
        %2355 = vmatpush1.msra.mxu0 0.0
        %2356 = vmatprep.subr.mxu0 0.0
        %2357 = vmatpush1.msra.mxu0 0.0
        %2358 = vmatprep.subr.mxu0 0.0
        %2359 = vmatpush1.msra.mxu0 0.0
        %2360 = vmatprep.subr.mxu0 0.0
        %2361 = vmatpush1.msra.mxu0 0.0
        %2362 = vmatprep.subr.mxu0 0.0
        %2363 = vmatpush1.msra.mxu0 0.0
        %2364 = vmatprep.subr.mxu0 0.0
        %2365 = vmatpush1.msra.mxu0 0.0
        %2366 = vmatprep.subr.mxu0 0.0
        %2367 = vmatpush1.msra.mxu0 0.0
        %2368 = vmatprep.subr.mxu0 0.0
        %2369 = vmatpush1.msra.mxu0 0.0
        %2370 = vmatprep.subr.mxu0 0.0
        %2371 = vmatpush1.msra.mxu0 0.0
        %2372 = vmatprep.mubr.f32.mxu0 0.0
        %2373 = vmatmul.mubr.f32.gmra.mrb[0].mxu0 %v2306
        %v2374 = vpop.f32.mrb[0].mxu0
        %v2375 = vadd.f32 %v2304, %v2374
        %v2376 = vpop.f32.mrb[0].mxu0
        %2377 = vdwg.mxu0
        %v2378 = vmul.f32 %v2375, 0.5
        %v2379 = vmul.f32 %v2375, 0.044715
        %v2380 = vmul.f32 %v2379, %v2375
        %v2381 = vmul.f32 %v2380, %v2375
        %v2382 = vadd.f32 %v2375, %v2381
        %v2383 = vmul.f32 %v2382, 0.7978846
        %v2384 = vtanh.pop %v2383
        %v2385 = vadd.f32 %v2384, 1.0
        %v2386 = vmul.f32 %v2378, %v2385
        %v2387 = vld [vmem:[#allocation7 + $0xa] sm:$0x1]
        %v2388 = vlaneseq
        %v2389 = vshrl.u32 %v2388, 7
        %v2390 = vsub.s32 0, %v2389
        %v2391 = vrot.slane %v2387, %v2390
        %vm2392 = vcmask 523264
        %v2394 = vsel %vm2392, %v2386, 0
        %2396 = vmatprep.subr.mxu0 0.0
        %2397 = vmatpush1.msra.mxu0 %v451
        %2398 = vmatprep.subr.mxu0 0.0
        %2399 = vmatpush1.msra.mxu0 %v452
        %2400 = vmatprep.subr.mxu0 0.0
        %2401 = vmatpush1.msra.mxu0 %v453
        %2402 = vmatprep.subr.mxu0 0.0
        %2403 = vmatpush1.msra.mxu0 %v454
        %2404 = vmatprep.subr.mxu0 0.0
        %2405 = vmatpush1.msra.mxu0 %v455
        %2406 = vmatprep.subr.mxu0 0.0
        %2407 = vmatpush1.msra.mxu0 %v456
        %2408 = vmatprep.subr.mxu0 0.0
        %2409 = vmatpush1.msra.mxu0 %v457
        %2410 = vmatprep.subr.mxu0 0.0
        %2411 = vmatpush1.msra.mxu0 %v458
        %2412 = vmatprep.subr.mxu0 0.0
        %2413 = vmatpush1.msra.mxu0 0.0
        %2414 = vmatprep.subr.mxu0 0.0
        %2415 = vmatpush1.msra.mxu0 0.0
        %2416 = vmatprep.subr.mxu0 0.0
        %2417 = vmatpush1.msra.mxu0 0.0
        %2418 = vmatprep.subr.mxu0 0.0
        %2419 = vmatpush1.msra.mxu0 0.0
        %2420 = vmatprep.subr.mxu0 0.0
        %2421 = vmatpush1.msra.mxu0 0.0
        %2422 = vmatprep.subr.mxu0 0.0
        %2423 = vmatpush1.msra.mxu0 0.0
        %2424 = vmatprep.subr.mxu0 0.0
        %2425 = vmatpush1.msra.mxu0 0.0
        %2426 = vmatprep.subr.mxu0 0.0
        %2427 = vmatpush1.msra.mxu0 0.0
        %2428 = vmatprep.subr.mxu0 0.0
        %2429 = vmatpush1.msra.mxu0 0.0
        %2430 = vmatprep.subr.mxu0 0.0
        %2431 = vmatpush1.msra.mxu0 0.0
        %2432 = vmatprep.subr.mxu0 0.0
        %2433 = vmatpush1.msra.mxu0 0.0
        %2434 = vmatprep.subr.mxu0 0.0
        %2435 = vmatpush1.msra.mxu0 0.0
        %2436 = vmatprep.subr.mxu0 0.0
        %2437 = vmatpush1.msra.mxu0 0.0
        %2438 = vmatprep.subr.mxu0 0.0
        %2439 = vmatpush1.msra.mxu0 0.0
        %2440 = vmatprep.subr.mxu0 0.0
        %2441 = vmatpush1.msra.mxu0 0.0
        %2442 = vmatprep.subr.mxu0 0.0
        %2443 = vmatpush1.msra.mxu0 0.0
        %2444 = vmatprep.subr.mxu0 0.0
        %2445 = vmatpush1.msra.mxu0 0.0
        %2446 = vmatprep.subr.mxu0 0.0
        %2447 = vmatpush1.msra.mxu0 0.0
        %2448 = vmatprep.subr.mxu0 0.0
        %2449 = vmatpush1.msra.mxu0 0.0
        %2450 = vmatprep.subr.mxu0 0.0
        %2451 = vmatpush1.msra.mxu0 0.0
        %2452 = vmatprep.subr.mxu0 0.0
        %2453 = vmatpush1.msra.mxu0 0.0
        %2454 = vmatprep.subr.mxu0 0.0
        %2455 = vmatpush1.msra.mxu0 0.0
        %2456 = vmatprep.subr.mxu0 0.0
        %2457 = vmatpush1.msra.mxu0 0.0
        %2458 = vmatprep.subr.mxu0 0.0
        %2459 = vmatpush1.msra.mxu0 0.0
        %2460 = vmatprep.mubr.f32.mxu0 0.0
        %2461 = vmatmul.mubr.f32.gmra.mrb[0].mxu0 %v2394
        %v2462 = vpop.f32.mrb[0].mxu0
        %v2463 = vadd.f32 %v2391, %v2462
        %v2464 = vpop.f32.mrb[0].mxu0
        %2465 = vdwg.mxu0
        %v2466 = vadd.f32 %v2299, %v2463
        %v2467 = vsel %vm464, %v2466, 0.0
        %2468 = vadd.xlane.f32.xlu0 %v2467
        %v2469 = vpop.xlane.xlu0 %2468
        %v2470 = vmul.f32 %v2469, %v1315
        %v2471 = vsub.f32 %v2466, %v2470
        %v2472 = vmul.f32 %v2471, %v2471
        %v2473 = vsel %vm464, %v2472, 0.0
        %2474 = vadd.xlane.f32.xlu0 %v2473
        %v2475 = vpop.xlane.xlu0 %2474
        %v2476 = vmul.f32 %v2475, %v1315
        %v2477 = vadd.f32 %v2476, 1e-05
        %v2478 = vrsqrt.pop %v2477
        %v2479 = vmul.f32 %v2471, %v2478
        %v2480 = vld [vmem:[#allocation7 + $0xb] sm:$0x1]
        %v2481 = vlaneseq
        %v2482 = vshrl.u32 %v2481, 7
        %v2483 = vsub.s32 0, %v2482
        %v2484 = vrot.slane %v2480, %v2483
        %v2485 = vmul.f32 %v2479, %v2484
        %v2486 = vld [vmem:[#allocation7 + $0xc] sm:$0x1]
        %v2487 = vlaneseq
        %v2488 = vshrl.u32 %v2487, 7
        %v2489 = vsub.s32 0, %v2488
        %v2490 = vrot.slane %v2486, %v2489
        %v2491 = vadd.f32 %v2485, %v2490
        %v2492 = vsel %vm464, %v2491, %v535
        %v2493 = vsel %vm2392, %v2492, %v535
        %vm2494 = vcmask 785408
        %2495 = vst.msk [vmem:[%s430] sm:$0xff] %vm2494, %v2493
        %2496 = vst.msk [vmem:[%s434] sm:$0xff] %vm2392, %v1508
        %p2497 = scmp.lt.s32.totalorder %s27, 1
        %s2498 = scalar_select %p2497, %s27, 1
        %s2499 = smul.addr %s2498, 8
        %s2500 = scalar_lea.vmem %s7, %s2499
        %p2501 = scmp.lt.s32.totalorder %s27, 1
        %s2502 = scalar_select %p2501, %s27, 1
        %s2503 = smul.addr %s2502, 8
        %s2504 = scalar_lea.vmem %s8, %s2503
        // Predicated region
        $region65: #{mass_decoder_layer.1} parent=47 // pred_check
          %p2505 = pneg %p212
        $region66: #{mass_decoder_layer.1} parent=47 // pred_check_branch
          %2507 = sbr.rel (%p2505) target = $region68
        $region67: #{mass_decoder_layer.1} parent=47 // pred_region
          _
        $region68: #{mass_decoder_layer.1} parent=47 // pred_fallthru
          _
        // Predicated region
        $region69: #{mass_decoder_layer.1} parent=47 // pred_check
          %p2508 = pneg %p238
        $region70: #{mass_decoder_layer.1} parent=47 // pred_check_branch
          %2510 = sbr.rel (%p2508) target = $region72
        $region71: #{mass_decoder_layer.1} parent=47 // pred_region
          _
        $region72: #{mass_decoder_layer.1} parent=47 // pred_fallthru
          _
      $region48: #{mass_decoder_layer.1} parent=5 // pred_fallthru
        _
      %p2511 = scmp.le.s32.totalorder 2, %s22
      // Predicated region
      $region73: #{mass_decoder_layer.1} parent=5 // pred_check
        %p2512 = pneg %p2511
      $region74: #{mass_decoder_layer.1} parent=5 // pred_check_branch
        %2514 = sbr.rel (%p2512) target = $region76
      $region75: #{mass_decoder_layer.1} parent=5 // pred_region
        %s2515 = ssub.s32 %s22, 2
        // Predicated region
        $region77: #{mass_decoder_layer.1} parent=75 // pred_check
          %p2516 = pneg %p218
        $region78: #{mass_decoder_layer.1} parent=75 // pred_check_branch
          %2518 = sbr.rel (%p2516) target = $region80
        $region79: #{mass_decoder_layer.1} parent=75 // pred_region
          %p2519 = scmp.lt.s32.totalorder %s28, 1
          %s2520 = scalar_select %p2519, %s28, 1
          %s2521 = smul.addr %s2520, 8
          %s2522 = scalar_lea.vmem %s7, %s2521
        $region80: #{mass_decoder_layer.1} parent=75 // pred_fallthru
          _
        // Predicated region
        $region81: #{mass_decoder_layer.1} parent=75 // pred_check
          %p2523 = pneg %p244
        $region82: #{mass_decoder_layer.1} parent=75 // pred_check_branch
          %2525 = sbr.rel (%p2523) target = $region84
        $region83: #{mass_decoder_layer.1} parent=75 // pred_region
          %p2526 = scmp.lt.s32.totalorder %s28, 1
          %s2527 = scalar_select %p2526, %s28, 1
          %s2528 = smul.addr %s2527, 8
          %s2529 = scalar_lea.vmem %s8, %s2528
        $region84: #{mass_decoder_layer.1} parent=75 // pred_fallthru
          _
      $region76: #{mass_decoder_layer.1} parent=5 // pred_fallthru
        _
    $region6: #{mass_decoder_layer.1} parent=1 // loop_footer
      %s26 = sadd.s32 1, %s22
    $region7: #{mass_decoder_layer.1} parent=1 // loop_footer_branch
      %21 = sbr.rel target = $region3
    $region8: #{mass_decoder_layer.1} parent=1 // loop_exit
      _
    %2530 = vsyncpa [#allocation3], 1
    %s2531 = scalar_lea.sflag [#allocation3], 1
    %2532 = vsyncpa %s2531, 1
    %2533 = vsyncpa [#allocation5], 1
    %s2534 = scalar_lea.sflag [#allocation5], 1
    %2535 = vsyncpa %s2534, 1
    %2536 = vsyncpa [#allocation8], 1

</llo_original>
